<compile_context>
chip_gen: v7x
topology: tpu7x:2x2x1
jax: 0.10.0
libtpu: 0.0.40
codegen_flags: <defaults>
</compile_context>

<pallas_src>
import functools
import math

import jax
import jax.numpy as jnp
from jax import lax
from jax.experimental import pallas as pl
from jax.experimental.pallas import tpu as pltpu

# ----------------------------- model hyper-params ---------------------------
B = 2              # batch
C = 3              # image channels
H = W = 16         # image size
PATCH = 4          # patch size  -> 4x4 = 16 patches
NUM_PATCHES = (H // PATCH) * (W // PATCH)
DIM = 32           # hidden size (stands in for 768)
HEADS = 4
MLP = 4 * DIM
DEPTH = 2          # base runs DEPTH-1 blocks; last block is used by b1/b2
CAMERA_NUM = 4
SIE_COE = 3.0
SHIFT_NUM = 5
SHUFFLE_GROUPS = 2
DIVIDE_LENGTH = 4
LN_EPS = 1e-6

T_REAL = NUM_PATCHES + 1                       # 17 (cls + patches)
T_PAD = 24                                     # padded to a multiple of 8
T_LOCAL = NUM_PATCHES // DIVIDE_LENGTH + 1     # 5  (token + 4 patches)


# ------------------------------ Pallas kernel -------------------------------
def block_kernel(
    lens_ref,                       # scalar-prefetch (SMEM): valid length per branch
    x_ref,                          # (1, B, T, D)
    ln1w, ln1b, wqkv, bqkv, wo, bo,
    ln2w, ln2b, w1, b1r, w2, b2r,
    lnfw, lnfb,
    o_ref,
    *,
    num_heads,
    apply_final_ln,
):
    """One pre-LN ViT encoder block (+ optional final LN) on a [B, T, D] slab
    with key-padding masking (valid sequence length from SMEM)."""
    valid = lens_ref[pl.program_id(0)]
    x = x_ref[0].astype(jnp.float32)           # (Bn, T, D)
    Bn, T, D = x.shape
    hd = D // num_heads
    rows = Bn * T

    def layer_norm(v, w_, b_):
        mu = jnp.mean(v, axis=-1, keepdims=True)
        var = jnp.mean(jnp.square(v - mu), axis=-1, keepdims=True)
        return (v - mu) * lax.rsqrt(var + LN_EPS) * w_[...] + b_[...]

    # Key-padding additive bias shared by all heads / batch rows (hoisted out
    # of the per-head loop; select -> add inside the loop).
    key_idx = lax.broadcasted_iota(jnp.int32, (T, T), 1)
    mask_bias = jnp.where(key_idx < valid, 0.0, -1e30).astype(jnp.float32)

    # --------------------------- attention ---------------------------------
    h = layer_norm(x, ln1w, ln1b)
    qkv = (
        jnp.dot(h.reshape(rows, D).astype(jnp.bfloat16), wqkv[...],
                preferred_element_type=jnp.float32)
        + bqkv[...]
    ).reshape(Bn, T, 3 * D)
    scale = 1.0 / math.sqrt(hd)
    q = qkv[:, :, 0 * D:1 * D] * scale         # fold 1/sqrt(hd) into Q once
    k = qkv[:, :, 1 * D:2 * D]
    v = qkv[:, :, 2 * D:3 * D]

    wo_f = wo[...]                             # (D, D) bf16
    acc = jnp.zeros((rows, D), jnp.float32)    # accumulate per-head projections
    for hh in range(num_heads):
        s0 = hh * hd
        qh = q[:, :, s0:s0 + hd].astype(jnp.bfloat16)
        kh = k[:, :, s0:s0 + hd].astype(jnp.bfloat16)
        vh = v[:, :, s0:s0 + hd].astype(jnp.bfloat16)
        s = jnp.einsum('bqd,bkd->bqk', qh, kh,
                       preferred_element_type=jnp.float32) + mask_bias
        s = s - jnp.max(s, axis=-1, keepdims=True)
        p = jnp.exp(s)
        p = p * pl.reciprocal(jnp.sum(p, axis=-1, keepdims=True), approx=True)
        ctx = jnp.einsum('bqk,bkd->bqd', p.astype(jnp.bfloat16), vh,
                         preferred_element_type=jnp.float32)
        acc = acc + jnp.dot(ctx.reshape(rows, hd).astype(jnp.bfloat16),
                            wo_f[s0:s0 + hd, :],
                            preferred_element_type=jnp.float32)
    x = x + (acc + bo[...]).reshape(Bn, T, D)

    # ------------------------------ MLP -------------------------------------
    h2 = layer_norm(x, ln2w, ln2b)
    m = (jnp.dot(h2.reshape(rows, D).astype(jnp.bfloat16), w1[...],
                 preferred_element_type=jnp.float32) + b1r[...])
    # TODO(synk): PyTorch nn.GELU is the exact erf form; tanh approximation used here.
    m = jax.nn.gelu(m, approximate=True)
    m = (jnp.dot(m.astype(jnp.bfloat16), w2[...],
                 preferred_element_type=jnp.float32) + b2r[...])
    x = x + m.reshape(Bn, T, D)

    if apply_final_ln:
        x = layer_norm(x, lnfw, lnfb)

    o_ref[0] = x.astype(o_ref.dtype)


def pallas_block_stack(x, lens, bp, norm_params, *, num_heads, apply_final_ln):
    """Apply one transformer block (and optionally final LN) to a stack of
    branches x: [G, B, T, D] with per-branch valid lengths lens: [G]."""
    G, Bn, T, D = x.shape
    kern = functools.partial(
        block_kernel, num_heads=num_heads, apply_final_ln=apply_final_ln
    )
    params = [
        bp["ln1w"], bp["ln1b"], bp["wqkv"], bp["bqkv"], bp["wo"], bp["bo"],
        bp["ln2w"], bp["ln2b"], bp["w1"], bp["b1"], bp["w2"], bp["b2"],
        norm_params[0], norm_params[1],
    ]
    in_specs = [pl.BlockSpec((1, Bn, T, D), lambda g, lens_ref: (g, 0, 0, 0))]
    for p in params:
        in_specs.append(pl.BlockSpec(p.shape, lambda g, lens_ref: (0, 0)))
    return pl.pallas_call(
        kern,
        grid_spec=pltpu.PrefetchScalarGridSpec(
            num_scalar_prefetch=1,
            grid=(G,),
            in_specs=in_specs,
            out_specs=pl.BlockSpec((1, Bn, T, D),
                                   lambda g, lens_ref: (g, 0, 0, 0)),
        ),
        out_shape=jax.ShapeDtypeStruct((G, Bn, T, D), jnp.float32),
        compiler_params=pltpu.CompilerParams(
            dimension_semantics=("parallel",)
        ),
    )(lens, x, *params)


# ------------------------------- plain-JAX glue ------------------------------
def shuffle_unit(features, shift, group, begin=1):
    bsz = features.shape[0]
    dim = features.shape[-1]
    feature_random = jnp.concatenate(
        [features[:, begin - 1 + shift:], features[:, begin:begin - 1 + shift]],
        axis=1,
    )
    x = feature_random.reshape(bsz, group, -1, dim)
    x = jnp.transpose(x, (0, 2, 1, 3)).reshape(bsz, -1, dim)
    return x


def extract_patches(img):
    """NCHW -> [B, num_patches, C*ph*pw] with the same flattening order as a
    PyTorch Conv2d(kernel=stride=PATCH) patch embedding."""
    b, c, h, w = img.shape
    ph = pw = PATCH
    x = img.reshape(b, c, h // ph, ph, w // pw, pw)
    x = jnp.transpose(x, (0, 2, 4, 1, 3, 5))          # B, H', W', C, ph, pw
    return x.reshape(b, (h // ph) * (w // pw), c * ph * pw)


def pad_tokens(x, t_pad):
    b, t, d = x.shape
    return jnp.concatenate([x, jnp.zeros((b, t_pad - t, d), x.dtype)], axis=1)


def transreid_forward(img, camera_id, P):
    b = img.shape[0]

    # ----- backbone (self.base, local_feature=True) -----
    # patch embedding left to plain JAX: a 32x48x32 matmul is launch-dominated
    # as a standalone pallas_call.
    patches = extract_patches(img)                                   # [B,P,Cp]
    x = jnp.einsum('bpc,cd->bpd', patches, P["pe_w"]) + P["pe_b"]    # [B,P,D]
    cls = jnp.broadcast_to(P["cls"], (b, 1, DIM))
    x = jnp.concatenate([cls, x], axis=1)                            # [B,T,D]
    x = x + P["pos"] + SIE_COE * P["sie"][camera_id]                 # SIE embed

    # blocks[:-1]: whole padded batch in a single kernel body per block
    x = pad_tokens(x, T_PAD)[None]                                   # [1,B,Tp,D]
    lens_full = jnp.array([T_REAL], jnp.int32)
    for blk in P["blocks"][:-1]:
        x = pallas_block_stack(x, lens_full, blk, P["norm"],
                               num_heads=HEADS, apply_final_ln=False)
    features = x[0][:, :T_REAL]                                      # [B,17,D]

    last = P["blocks"][-1]

    # ----- b1 global branch + 4 JPM local branches, fused in ONE call -----
    token = features[:, 0:1]
    xp = shuffle_unit(features, SHIFT_NUM, SHUFFLE_GROUPS)           # rearrange
    patch_length = (features.shape[1] - 1) // DIVIDE_LENGTH

    branches = [pad_tokens(features, T_PAD)]                         # b1 branch
    for i in range(DIVIDE_LENGTH):
        lf = xp[:, i * patch_length:(i + 1) * patch_length]
        branches.append(pad_tokens(jnp.concatenate([token, lf], axis=1), T_PAD))
    stacked = jnp.stack(branches, axis=0)                            # [5,B,Tp,D]
    lens = jnp.array([T_REAL] + [T_LOCAL] * DIVIDE_LENGTH, jnp.int32)

    out = pallas_block_stack(stacked, lens, last, P["norm"],
                             num_heads=HEADS, apply_final_ln=True)

    global_feat = out[0, :, 0]
    local_feats = [out[i + 1, :, 0] / 4.0 for i in range(DIVIDE_LENGTH)]

    # eval, neck_feat == 'before'
    return jnp.concatenate([global_feat] + local_feats, axis=1)


# ------------------------------ parameter init -------------------------------
def init_params(key):
    keys = jax.random.split(key, 64)
    it = iter(keys)

    def n(shape, std=0.02, dtype=jnp.float32):
        return (std * jax.random.normal(next(it), shape)).astype(dtype)

    def block_params():
        return dict(
            ln1w=jnp.ones((1, DIM), jnp.float32),
            ln1b=jnp.zeros((1, DIM), jnp.float32),
            wqkv=n((DIM, 3 * DIM), dtype=jnp.bfloat16),   # bf16 MXU operands
            bqkv=jnp.zeros((1, 3 * DIM), jnp.float32),
            wo=n((DIM, DIM), dtype=jnp.bfloat16),
            bo=jnp.zeros((1, DIM), jnp.float32),
            ln2w=jnp.ones((1, DIM), jnp.float32),
            ln2b=jnp.zeros((1, DIM), jnp.float32),
            w1=n((DIM, MLP), dtype=jnp.bfloat16),
            b1=jnp.zeros((1, MLP), jnp.float32),
            w2=n((MLP, DIM), dtype=jnp.bfloat16),
            b2=jnp.zeros((1, DIM), jnp.float32),
        )

    return dict(
        pe_w=n((C * PATCH * PATCH, DIM)),
        pe_b=jnp.zeros((1, DIM), jnp.float32),
        cls=n((1, 1, DIM)),
        pos=n((1, NUM_PATCHES + 1, DIM)),
        sie=n((CAMERA_NUM, 1, DIM)),
        blocks=[block_params() for _ in range(DEPTH)],
        norm=(jnp.ones((1, DIM), jnp.float32), jnp.zeros((1, DIM), jnp.float32)),
    )


# ----------------------------------- main ------------------------------------
if __name__ == "__main__":
    key = jax.random.PRNGKey(0)
    pkey, ikey = jax.random.split(key)
    params = init_params(pkey)

    img = jax.random.normal(ikey, (B, C, H, W), jnp.float32)     # NCHW
    camera_id = jnp.array([0, 1], dtype=jnp.int32)

    fwd = jax.jit(transreid_forward)
    out = fwd(img, camera_id, params)
    out = jax.block_until_ready(out)

    assert out.shape == (B, 5 * DIM), out.shape
    assert jnp.all(jnp.isfinite(out))
    print("KERNEL_OK")
</pallas_src>

<mosaic_0001>
module attributes {stable_mosaic.version = 11 : i64} {
  func.func @block_kernel(%arg0: i32, %arg1: memref<1xi32, #tpu.memory_space<smem>>, %arg2: memref<1x2x24x32xf32, #tpu.memory_space<vmem>>, %arg3: memref<1x32xf32, #tpu.memory_space<vmem>>, %arg4: memref<1x32xf32, #tpu.memory_space<vmem>>, %arg5: memref<32x96xbf16, #tpu.memory_space<vmem>>, %arg6: memref<1x96xf32, #tpu.memory_space<vmem>>, %arg7: memref<32x32xbf16, #tpu.memory_space<vmem>>, %arg8: memref<1x32xf32, #tpu.memory_space<vmem>>, %arg9: memref<1x32xf32, #tpu.memory_space<vmem>>, %arg10: memref<1x32xf32, #tpu.memory_space<vmem>>, %arg11: memref<32x128xbf16, #tpu.memory_space<vmem>>, %arg12: memref<1x128xf32, #tpu.memory_space<vmem>>, %arg13: memref<128x32xbf16, #tpu.memory_space<vmem>>, %arg14: memref<1x32xf32, #tpu.memory_space<vmem>>, %arg15: memref<1x32xf32, #tpu.memory_space<vmem>>, %arg16: memref<1x32xf32, #tpu.memory_space<vmem>>, %arg17: memref<1x2x24x32xf32, #tpu.memory_space<vmem>>) attributes {dimension_semantics = [#tpu.dimension_semantics<parallel>], iteration_bounds = array<i64: 1>, scalar_prefetch = 1 : i64, scratch_operands = 0 : i64, tpu.core_type = #tpu.core_type<tc>, window_params = [{transform_indices = @transform_0, window_bounds = array<i64: 1, 2, 24, 32>}, {pipeline_mode = #tpu.pipeline_mode<synchronous>, transform_indices = @transform_1, window_bounds = array<i64: 1, 32>}, {pipeline_mode = #tpu.pipeline_mode<synchronous>, transform_indices = @transform_2, window_bounds = array<i64: 1, 32>}, {pipeline_mode = #tpu.pipeline_mode<synchronous>, transform_indices = @transform_3, window_bounds = array<i64: 32, 96>}, {pipeline_mode = #tpu.pipeline_mode<synchronous>, transform_indices = @transform_4, window_bounds = array<i64: 1, 96>}, {pipeline_mode = #tpu.pipeline_mode<synchronous>, transform_indices = @transform_5, window_bounds = array<i64: 32, 32>}, {pipeline_mode = #tpu.pipeline_mode<synchronous>, transform_indices = @transform_6, window_bounds = array<i64: 1, 32>}, {pipeline_mode = #tpu.pipeline_mode<synchronous>, transform_indices = @transform_7, window_bounds = array<i64: 1, 32>}, {pipeline_mode = #tpu.pipeline_mode<synchronous>, transform_indices = @transform_8, window_bounds = array<i64: 1, 32>}, {pipeline_mode = #tpu.pipeline_mode<synchronous>, transform_indices = @transform_9, window_bounds = array<i64: 32, 128>}, {pipeline_mode = #tpu.pipeline_mode<synchronous>, transform_indices = @transform_10, window_bounds = array<i64: 1, 128>}, {pipeline_mode = #tpu.pipeline_mode<synchronous>, transform_indices = @transform_11, window_bounds = array<i64: 128, 32>}, {pipeline_mode = #tpu.pipeline_mode<synchronous>, transform_indices = @transform_12, window_bounds = array<i64: 1, 32>}, {pipeline_mode = #tpu.pipeline_mode<synchronous>, transform_indices = @transform_13, window_bounds = array<i64: 1, 32>}, {pipeline_mode = #tpu.pipeline_mode<synchronous>, transform_indices = @transform_14, window_bounds = array<i64: 1, 32>}, {transform_indices = @transform_15, window_bounds = array<i64: 1, 2, 24, 32>}]} {
    %0 = arith.index_cast %arg0 : i32 to index
    %1 = memref.load %arg1[%0] : memref<1xi32, #tpu.memory_space<smem>>
    %c0 = arith.constant 0 : index
    %c0_0 = arith.constant 0 : index
    %c0_1 = arith.constant 0 : index
    %c0_2 = arith.constant 0 : index
    %2 = vector.load %arg2[%c0, %c0_0, %c0_1, %c0_2] : memref<1x2x24x32xf32, #tpu.memory_space<vmem>>, vector<1x2x24x32xf32>
    %3 = vector.shape_cast %2 : vector<1x2x24x32xf32> to vector<2x24x32xf32>
    %4 = tpu.iota {dimensions = array<i32: 1>} : vector<24x24xi32>
    %5 = vector.broadcast %1 : i32 to vector<24x24xi32>
    %6 = arith.cmpi slt, %4, %5 : vector<24x24xi32>
    %cst = arith.constant 0.000000e+00 : f32
    %cst_3 = arith.constant -1.000000e+30 : f32
    %7 = vector.broadcast %cst : f32 to vector<24x24xf32>
    %8 = vector.broadcast %cst_3 : f32 to vector<24x24xf32>
    %9 = arith.select %6, %7, %8 : vector<24x24xi1>, vector<24x24xf32>
    %cst_4 = arith.constant dense<0.000000e+00> : vector<2x24xf32>
    %10 = vector.multi_reduction <add>, %3, %cst_4 [2] : vector<2x24x32xf32> to vector<2x24xf32>
    %11 = vector.shape_cast %10 : vector<2x24xf32> to vector<2x24x1xf32>
    %cst_5 = arith.constant 3.200000e+01 : f32
    %12 = vector.broadcast %cst_5 : f32 to vector<2x24x1xf32>
    %13 = arith.divf %11, %12 : vector<2x24x1xf32>
    %14 = vector.broadcast %13 : vector<2x24x1xf32> to vector<2x24x32xf32>
    %15 = arith.subf %3, %14 : vector<2x24x32xf32>
    %16 = arith.mulf %15, %15 : vector<2x24x32xf32>
    %cst_6 = arith.constant dense<0.000000e+00> : vector<2x24xf32>
    %17 = vector.multi_reduction <add>, %16, %cst_6 [2] : vector<2x24x32xf32> to vector<2x24xf32>
    %18 = vector.shape_cast %17 : vector<2x24xf32> to vector<2x24x1xf32>
    %cst_7 = arith.constant 3.200000e+01 : f32
    %19 = vector.broadcast %cst_7 : f32 to vector<2x24x1xf32>
    %20 = arith.divf %18, %19 : vector<2x24x1xf32>
    %21 = vector.broadcast %13 : vector<2x24x1xf32> to vector<2x24x32xf32>
    %22 = arith.subf %3, %21 : vector<2x24x32xf32>
    %cst_8 = arith.constant 9.99999997E-7 : f32
    %23 = vector.broadcast %cst_8 : f32 to vector<2x24x1xf32>
    %24 = arith.addf %20, %23 : vector<2x24x1xf32>
    %25 = math.rsqrt %24 : vector<2x24x1xf32>
    %26 = vector.broadcast %25 : vector<2x24x1xf32> to vector<2x24x32xf32>
    %27 = arith.mulf %22, %26 : vector<2x24x32xf32>
    %c0_9 = arith.constant 0 : index
    %c0_10 = arith.constant 0 : index
    %28 = vector.load %arg3[%c0_9, %c0_10] : memref<1x32xf32, #tpu.memory_space<vmem>>, vector<1x32xf32>
    %29 = vector.shape_cast %28 : vector<1x32xf32> to vector<1x1x32xf32>
    %30 = vector.broadcast %29 : vector<1x1x32xf32> to vector<2x24x32xf32>
    %31 = arith.mulf %27, %30 : vector<2x24x32xf32>
    %c0_11 = arith.constant 0 : index
    %c0_12 = arith.constant 0 : index
    %32 = vector.load %arg4[%c0_11, %c0_12] : memref<1x32xf32, #tpu.memory_space<vmem>>, vector<1x32xf32>
    %33 = vector.shape_cast %32 : vector<1x32xf32> to vector<1x1x32xf32>
    %34 = vector.broadcast %33 : vector<1x1x32xf32> to vector<2x24x32xf32>
    %35 = arith.addf %31, %34 : vector<2x24x32xf32>
    %36 = vector.shape_cast %35 : vector<2x24x32xf32> to vector<48x32xf32>
    %37 = arith.truncf %36 : vector<48x32xf32> to vector<48x32xbf16>
    %c0_13 = arith.constant 0 : index
    %c0_14 = arith.constant 0 : index
    %38 = vector.load %arg5[%c0_13, %c0_14] : memref<32x96xbf16, #tpu.memory_space<vmem>>, vector<32x96xbf16>
    %cst_15 = arith.constant dense<0.000000e+00> : vector<48x96xf32>
    %39 = tpu.matmul %37, %38, %cst_15 {dimension_numbers = #tpu.dot_dimension_numbers<[1], [0], [0], [1], [0, 0, 1, 1], [], []>} : vector<48x32xbf16>, vector<32x96xbf16>, vector<48x96xf32> -> vector<48x96xf32>
    %c0_16 = arith.constant 0 : index
    %c0_17 = arith.constant 0 : index
    %40 = vector.load %arg6[%c0_16, %c0_17] : memref<1x96xf32, #tpu.memory_space<vmem>>, vector<1x96xf32>
    %41 = vector.broadcast %40 : vector<1x96xf32> to vector<48x96xf32>
    %42 = arith.addf %39, %41 : vector<48x96xf32>
    %43 = vector.shape_cast %42 : vector<48x96xf32> to vector<2x24x96xf32>
    %44 = vector.extract_strided_slice %43 {offsets = [0, 0, 0], sizes = [2, 24, 32], strides = [1, 1, 1]} : vector<2x24x96xf32> to vector<2x24x32xf32>
    %cst_18 = arith.constant 0.353553385 : f32
    %45 = vector.broadcast %cst_18 : f32 to vector<2x24x32xf32>
    %46 = arith.mulf %44, %45 : vector<2x24x32xf32>
    %47 = vector.extract_strided_slice %43 {offsets = [0, 0, 32], sizes = [2, 24, 32], strides = [1, 1, 1]} : vector<2x24x96xf32> to vector<2x24x32xf32>
    %48 = vector.extract_strided_slice %43 {offsets = [0, 0, 64], sizes = [2, 24, 32], strides = [1, 1, 1]} : vector<2x24x96xf32> to vector<2x24x32xf32>
    %c0_19 = arith.constant 0 : index
    %c0_20 = arith.constant 0 : index
    %49 = vector.load %arg7[%c0_19, %c0_20] : memref<32x32xbf16, #tpu.memory_space<vmem>>, vector<32x32xbf16>
    %cst_21 = arith.constant 0.000000e+00 : f32
    %50 = vector.broadcast %cst_21 : f32 to vector<48x32xf32>
    %51 = vector.extract_strided_slice %46 {offsets = [0, 0, 0], sizes = [2, 24, 8], strides = [1, 1, 1]} : vector<2x24x32xf32> to vector<2x24x8xf32>
    %52 = arith.truncf %51 : vector<2x24x8xf32> to vector<2x24x8xbf16>
    %53 = vector.extract_strided_slice %47 {offsets = [0, 0, 0], sizes = [2, 24, 8], strides = [1, 1, 1]} : vector<2x24x32xf32> to vector<2x24x8xf32>
    %54 = arith.truncf %53 : vector<2x24x8xf32> to vector<2x24x8xbf16>
    %55 = vector.extract_strided_slice %48 {offsets = [0, 0, 0], sizes = [2, 24, 8], strides = [1, 1, 1]} : vector<2x24x32xf32> to vector<2x24x8xf32>
    %56 = arith.truncf %55 : vector<2x24x8xf32> to vector<2x24x8xbf16>
    "tpu.trace_start"() <{level = 10 : i32, message = "bqd,bkd->bqk"}> : () -> ()
    %cst_22 = arith.constant dense<0.000000e+00> : vector<2x24x24xf32>
    %57 = tpu.matmul %52, %54, %cst_22 {dimension_numbers = #tpu.dot_dimension_numbers<[2], [2], [1], [1], [0, 0, 0, 1, 1, 1], [0], [0]>} : vector<2x24x8xbf16>, vector<2x24x8xbf16>, vector<2x24x24xf32> -> vector<2x24x24xf32>
    "tpu.trace_stop"() : () -> ()
    %58 = vector.shape_cast %9 : vector<24x24xf32> to vector<1x24x24xf32>
    %59 = vector.broadcast %58 : vector<1x24x24xf32> to vector<2x24x24xf32>
    %60 = arith.addf %57, %59 : vector<2x24x24xf32>
    %cst_23 = arith.constant dense<0xFF800000> : vector<2x24xf32>
    %61 = vector.multi_reduction <maximumf>, %60, %cst_23 [2] : vector<2x24x24xf32> to vector<2x24xf32>
    %62 = vector.shape_cast %61 : vector<2x24xf32> to vector<2x24x1xf32>
    %63 = vector.broadcast %62 : vector<2x24x1xf32> to vector<2x24x24xf32>
    %64 = arith.subf %60, %63 : vector<2x24x24xf32>
    %65 = math.exp %64 : vector<2x24x24xf32>
    %cst_24 = arith.constant dense<0.000000e+00> : vector<2x24xf32>
    %66 = vector.multi_reduction <add>, %65, %cst_24 [2] : vector<2x24x24xf32> to vector<2x24xf32>
    %67 = vector.shape_cast %66 : vector<2x24xf32> to vector<2x24x1xf32>
    %68 = tpu.reciprocal %67 {approx = true} : vector<2x24x1xf32> -> vector<2x24x1xf32>
    %69 = vector.broadcast %68 : vector<2x24x1xf32> to vector<2x24x24xf32>
    %70 = arith.mulf %65, %69 : vector<2x24x24xf32>
    %71 = arith.truncf %70 : vector<2x24x24xf32> to vector<2x24x24xbf16>
    "tpu.trace_start"() <{level = 10 : i32, message = "bqk,bkd->bqd"}> : () -> ()
    %cst_25 = arith.constant dense<0.000000e+00> : vector<2x24x8xf32>
    %72 = tpu.matmul %71, %56, %cst_25 {dimension_numbers = #tpu.dot_dimension_numbers<[2], [1], [1], [2], [0, 0, 0, 1, 1, 2], [0], [0]>} : vector<2x24x24xbf16>, vector<2x24x8xbf16>, vector<2x24x8xf32> -> vector<2x24x8xf32>
    "tpu.trace_stop"() : () -> ()
    %73 = vector.shape_cast %72 : vector<2x24x8xf32> to vector<48x8xf32>
    %74 = arith.truncf %73 : vector<48x8xf32> to vector<48x8xbf16>
    %75 = vector.extract_strided_slice %49 {offsets = [0, 0], sizes = [8, 32], strides = [1, 1]} : vector<32x32xbf16> to vector<8x32xbf16>
    %cst_26 = arith.constant dense<0.000000e+00> : vector<48x32xf32>
    %76 = tpu.matmul %74, %75, %cst_26 {dimension_numbers = #tpu.dot_dimension_numbers<[1], [0], [0], [1], [0, 0, 1, 1], [], []>} : vector<48x8xbf16>, vector<8x32xbf16>, vector<48x32xf32> -> vector<48x32xf32>
    %77 = arith.addf %50, %76 : vector<48x32xf32>
    %78 = vector.extract_strided_slice %46 {offsets = [0, 0, 8], sizes = [2, 24, 8], strides = [1, 1, 1]} : vector<2x24x32xf32> to vector<2x24x8xf32>
    %79 = arith.truncf %78 : vector<2x24x8xf32> to vector<2x24x8xbf16>
    %80 = vector.extract_strided_slice %47 {offsets = [0, 0, 8], sizes = [2, 24, 8], strides = [1, 1, 1]} : vector<2x24x32xf32> to vector<2x24x8xf32>
    %81 = arith.truncf %80 : vector<2x24x8xf32> to vector<2x24x8xbf16>
    %82 = vector.extract_strided_slice %48 {offsets = [0, 0, 8], sizes = [2, 24, 8], strides = [1, 1, 1]} : vector<2x24x32xf32> to vector<2x24x8xf32>
    %83 = arith.truncf %82 : vector<2x24x8xf32> to vector<2x24x8xbf16>
    "tpu.trace_start"() <{level = 10 : i32, message = "bqd,bkd->bqk"}> : () -> ()
    %cst_27 = arith.constant dense<0.000000e+00> : vector<2x24x24xf32>
    %84 = tpu.matmul %79, %81, %cst_27 {dimension_numbers = #tpu.dot_dimension_numbers<[2], [2], [1], [1], [0, 0, 0, 1, 1, 1], [0], [0]>} : vector<2x24x8xbf16>, vector<2x24x8xbf16>, vector<2x24x24xf32> -> vector<2x24x24xf32>
    "tpu.trace_stop"() : () -> ()
    %85 = vector.shape_cast %9 : vector<24x24xf32> to vector<1x24x24xf32>
    %86 = vector.broadcast %85 : vector<1x24x24xf32> to vector<2x24x24xf32>
    %87 = arith.addf %84, %86 : vector<2x24x24xf32>
    %cst_28 = arith.constant dense<0xFF800000> : vector<2x24xf32>
    %88 = vector.multi_reduction <maximumf>, %87, %cst_28 [2] : vector<2x24x24xf32> to vector<2x24xf32>
    %89 = vector.shape_cast %88 : vector<2x24xf32> to vector<2x24x1xf32>
    %90 = vector.broadcast %89 : vector<2x24x1xf32> to vector<2x24x24xf32>
    %91 = arith.subf %87, %90 : vector<2x24x24xf32>
    %92 = math.exp %91 : vector<2x24x24xf32>
    %cst_29 = arith.constant dense<0.000000e+00> : vector<2x24xf32>
    %93 = vector.multi_reduction <add>, %92, %cst_29 [2] : vector<2x24x24xf32> to vector<2x24xf32>
    %94 = vector.shape_cast %93 : vector<2x24xf32> to vector<2x24x1xf32>
    %95 = tpu.reciprocal %94 {approx = true} : vector<2x24x1xf32> -> vector<2x24x1xf32>
    %96 = vector.broadcast %95 : vector<2x24x1xf32> to vector<2x24x24xf32>
    %97 = arith.mulf %92, %96 : vector<2x24x24xf32>
    %98 = arith.truncf %97 : vector<2x24x24xf32> to vector<2x24x24xbf16>
    "tpu.trace_start"() <{level = 10 : i32, message = "bqk,bkd->bqd"}> : () -> ()
    %cst_30 = arith.constant dense<0.000000e+00> : vector<2x24x8xf32>
    %99 = tpu.matmul %98, %83, %cst_30 {dimension_numbers = #tpu.dot_dimension_numbers<[2], [1], [1], [2], [0, 0, 0, 1, 1, 2], [0], [0]>} : vector<2x24x24xbf16>, vector<2x24x8xbf16>, vector<2x24x8xf32> -> vector<2x24x8xf32>
    "tpu.trace_stop"() : () -> ()
    %100 = vector.shape_cast %99 : vector<2x24x8xf32> to vector<48x8xf32>
    %101 = arith.truncf %100 : vector<48x8xf32> to vector<48x8xbf16>
    %102 = vector.extract_strided_slice %49 {offsets = [8, 0], sizes = [8, 32], strides = [1, 1]} : vector<32x32xbf16> to vector<8x32xbf16>
    %cst_31 = arith.constant dense<0.000000e+00> : vector<48x32xf32>
    %103 = tpu.matmul %101, %102, %cst_31 {dimension_numbers = #tpu.dot_dimension_numbers<[1], [0], [0], [1], [0, 0, 1, 1], [], []>} : vector<48x8xbf16>, vector<8x32xbf16>, vector<48x32xf32> -> vector<48x32xf32>
    %104 = arith.addf %77, %103 : vector<48x32xf32>
    %105 = vector.extract_strided_slice %46 {offsets = [0, 0, 16], sizes = [2, 24, 8], strides = [1, 1, 1]} : vector<2x24x32xf32> to vector<2x24x8xf32>
    %106 = arith.truncf %105 : vector<2x24x8xf32> to vector<2x24x8xbf16>
    %107 = vector.extract_strided_slice %47 {offsets = [0, 0, 16], sizes = [2, 24, 8], strides = [1, 1, 1]} : vector<2x24x32xf32> to vector<2x24x8xf32>
    %108 = arith.truncf %107 : vector<2x24x8xf32> to vector<2x24x8xbf16>
    %109 = vector.extract_strided_slice %48 {offsets = [0, 0, 16], sizes = [2, 24, 8], strides = [1, 1, 1]} : vector<2x24x32xf32> to vector<2x24x8xf32>
    %110 = arith.truncf %109 : vector<2x24x8xf32> to vector<2x24x8xbf16>
    "tpu.trace_start"() <{level = 10 : i32, message = "bqd,bkd->bqk"}> : () -> ()
    %cst_32 = arith.constant dense<0.000000e+00> : vector<2x24x24xf32>
    %111 = tpu.matmul %106, %108, %cst_32 {dimension_numbers = #tpu.dot_dimension_numbers<[2], [2], [1], [1], [0, 0, 0, 1, 1, 1], [0], [0]>} : vector<2x24x8xbf16>, vector<2x24x8xbf16>, vector<2x24x24xf32> -> vector<2x24x24xf32>
    "tpu.trace_stop"() : () -> ()
    %112 = vector.shape_cast %9 : vector<24x24xf32> to vector<1x24x24xf32>
    %113 = vector.broadcast %112 : vector<1x24x24xf32> to vector<2x24x24xf32>
    %114 = arith.addf %111, %113 : vector<2x24x24xf32>
    %cst_33 = arith.constant dense<0xFF800000> : vector<2x24xf32>
    %115 = vector.multi_reduction <maximumf>, %114, %cst_33 [2] : vector<2x24x24xf32> to vector<2x24xf32>
    %116 = vector.shape_cast %115 : vector<2x24xf32> to vector<2x24x1xf32>
    %117 = vector.broadcast %116 : vector<2x24x1xf32> to vector<2x24x24xf32>
    %118 = arith.subf %114, %117 : vector<2x24x24xf32>
    %119 = math.exp %118 : vector<2x24x24xf32>
    %cst_34 = arith.constant dense<0.000000e+00> : vector<2x24xf32>
    %120 = vector.multi_reduction <add>, %119, %cst_34 [2] : vector<2x24x24xf32> to vector<2x24xf32>
    %121 = vector.shape_cast %120 : vector<2x24xf32> to vector<2x24x1xf32>
    %122 = tpu.reciprocal %121 {approx = true} : vector<2x24x1xf32> -> vector<2x24x1xf32>
    %123 = vector.broadcast %122 : vector<2x24x1xf32> to vector<2x24x24xf32>
    %124 = arith.mulf %119, %123 : vector<2x24x24xf32>
    %125 = arith.truncf %124 : vector<2x24x24xf32> to vector<2x24x24xbf16>
    "tpu.trace_start"() <{level = 10 : i32, message = "bqk,bkd->bqd"}> : () -> ()
    %cst_35 = arith.constant dense<0.000000e+00> : vector<2x24x8xf32>
    %126 = tpu.matmul %125, %110, %cst_35 {dimension_numbers = #tpu.dot_dimension_numbers<[2], [1], [1], [2], [0, 0, 0, 1, 1, 2], [0], [0]>} : vector<2x24x24xbf16>, vector<2x24x8xbf16>, vector<2x24x8xf32> -> vector<2x24x8xf32>
    "tpu.trace_stop"() : () -> ()
    %127 = vector.shape_cast %126 : vector<2x24x8xf32> to vector<48x8xf32>
    %128 = arith.truncf %127 : vector<48x8xf32> to vector<48x8xbf16>
    %129 = vector.extract_strided_slice %49 {offsets = [16, 0], sizes = [8, 32], strides = [1, 1]} : vector<32x32xbf16> to vector<8x32xbf16>
    %cst_36 = arith.constant dense<0.000000e+00> : vector<48x32xf32>
    %130 = tpu.matmul %128, %129, %cst_36 {dimension_numbers = #tpu.dot_dimension_numbers<[1], [0], [0], [1], [0, 0, 1, 1], [], []>} : vector<48x8xbf16>, vector<8x32xbf16>, vector<48x32xf32> -> vector<48x32xf32>
    %131 = arith.addf %104, %130 : vector<48x32xf32>
    %132 = vector.extract_strided_slice %46 {offsets = [0, 0, 24], sizes = [2, 24, 8], strides = [1, 1, 1]} : vector<2x24x32xf32> to vector<2x24x8xf32>
    %133 = arith.truncf %132 : vector<2x24x8xf32> to vector<2x24x8xbf16>
    %134 = vector.extract_strided_slice %47 {offsets = [0, 0, 24], sizes = [2, 24, 8], strides = [1, 1, 1]} : vector<2x24x32xf32> to vector<2x24x8xf32>
    %135 = arith.truncf %134 : vector<2x24x8xf32> to vector<2x24x8xbf16>
    %136 = vector.extract_strided_slice %48 {offsets = [0, 0, 24], sizes = [2, 24, 8], strides = [1, 1, 1]} : vector<2x24x32xf32> to vector<2x24x8xf32>
    %137 = arith.truncf %136 : vector<2x24x8xf32> to vector<2x24x8xbf16>
    "tpu.trace_start"() <{level = 10 : i32, message = "bqd,bkd->bqk"}> : () -> ()
    %cst_37 = arith.constant dense<0.000000e+00> : vector<2x24x24xf32>
    %138 = tpu.matmul %133, %135, %cst_37 {dimension_numbers = #tpu.dot_dimension_numbers<[2], [2], [1], [1], [0, 0, 0, 1, 1, 1], [0], [0]>} : vector<2x24x8xbf16>, vector<2x24x8xbf16>, vector<2x24x24xf32> -> vector<2x24x24xf32>
    "tpu.trace_stop"() : () -> ()
    %139 = vector.shape_cast %9 : vector<24x24xf32> to vector<1x24x24xf32>
    %140 = vector.broadcast %139 : vector<1x24x24xf32> to vector<2x24x24xf32>
    %141 = arith.addf %138, %140 : vector<2x24x24xf32>
    %cst_38 = arith.constant dense<0xFF800000> : vector<2x24xf32>
    %142 = vector.multi_reduction <maximumf>, %141, %cst_38 [2] : vector<2x24x24xf32> to vector<2x24xf32>
    %143 = vector.shape_cast %142 : vector<2x24xf32> to vector<2x24x1xf32>
    %144 = vector.broadcast %143 : vector<2x24x1xf32> to vector<2x24x24xf32>
    %145 = arith.subf %141, %144 : vector<2x24x24xf32>
    %146 = math.exp %145 : vector<2x24x24xf32>
    %cst_39 = arith.constant dense<0.000000e+00> : vector<2x24xf32>
    %147 = vector.multi_reduction <add>, %146, %cst_39 [2] : vector<2x24x24xf32> to vector<2x24xf32>
    %148 = vector.shape_cast %147 : vector<2x24xf32> to vector<2x24x1xf32>
    %149 = tpu.reciprocal %148 {approx = true} : vector<2x24x1xf32> -> vector<2x24x1xf32>
    %150 = vector.broadcast %149 : vector<2x24x1xf32> to vector<2x24x24xf32>
    %151 = arith.mulf %146, %150 : vector<2x24x24xf32>
    %152 = arith.truncf %151 : vector<2x24x24xf32> to vector<2x24x24xbf16>
    "tpu.trace_start"() <{level = 10 : i32, message = "bqk,bkd->bqd"}> : () -> ()
    %cst_40 = arith.constant dense<0.000000e+00> : vector<2x24x8xf32>
    %153 = tpu.matmul %152, %137, %cst_40 {dimension_numbers = #tpu.dot_dimension_numbers<[2], [1], [1], [2], [0, 0, 0, 1, 1, 2], [0], [0]>} : vector<2x24x24xbf16>, vector<2x24x8xbf16>, vector<2x24x8xf32> -> vector<2x24x8xf32>
    "tpu.trace_stop"() : () -> ()
    %154 = vector.shape_cast %153 : vector<2x24x8xf32> to vector<48x8xf32>
    %155 = arith.truncf %154 : vector<48x8xf32> to vector<48x8xbf16>
    %156 = vector.extract_strided_slice %49 {offsets = [24, 0], sizes = [8, 32], strides = [1, 1]} : vector<32x32xbf16> to vector<8x32xbf16>
    %cst_41 = arith.constant dense<0.000000e+00> : vector<48x32xf32>
    %157 = tpu.matmul %155, %156, %cst_41 {dimension_numbers = #tpu.dot_dimension_numbers<[1], [0], [0], [1], [0, 0, 1, 1], [], []>} : vector<48x8xbf16>, vector<8x32xbf16>, vector<48x32xf32> -> vector<48x32xf32>
    %158 = arith.addf %131, %157 : vector<48x32xf32>
    %c0_42 = arith.constant 0 : index
    %c0_43 = arith.constant 0 : index
    %159 = vector.load %arg8[%c0_42, %c0_43] : memref<1x32xf32, #tpu.memory_space<vmem>>, vector<1x32xf32>
    %160 = vector.broadcast %159 : vector<1x32xf32> to vector<48x32xf32>
    %161 = arith.addf %158, %160 : vector<48x32xf32>
    %162 = vector.shape_cast %161 : vector<48x32xf32> to vector<2x24x32xf32>
    %163 = arith.addf %3, %162 : vector<2x24x32xf32>
    %cst_44 = arith.constant dense<0.000000e+00> : vector<2x24xf32>
    %164 = vector.multi_reduction <add>, %163, %cst_44 [2] : vector<2x24x32xf32> to vector<2x24xf32>
    %165 = vector.shape_cast %164 : vector<2x24xf32> to vector<2x24x1xf32>
    %cst_45 = arith.constant 3.200000e+01 : f32
    %166 = vector.broadcast %cst_45 : f32 to vector<2x24x1xf32>
    %167 = arith.divf %165, %166 : vector<2x24x1xf32>
    %168 = vector.broadcast %167 : vector<2x24x1xf32> to vector<2x24x32xf32>
    %169 = arith.subf %163, %168 : vector<2x24x32xf32>
    %170 = arith.mulf %169, %169 : vector<2x24x32xf32>
    %cst_46 = arith.constant dense<0.000000e+00> : vector<2x24xf32>
    %171 = vector.multi_reduction <add>, %170, %cst_46 [2] : vector<2x24x32xf32> to vector<2x24xf32>
    %172 = vector.shape_cast %171 : vector<2x24xf32> to vector<2x24x1xf32>
    %cst_47 = arith.constant 3.200000e+01 : f32
    %173 = vector.broadcast %cst_47 : f32 to vector<2x24x1xf32>
    %174 = arith.divf %172, %173 : vector<2x24x1xf32>
    %175 = vector.broadcast %167 : vector<2x24x1xf32> to vector<2x24x32xf32>
    %176 = arith.subf %163, %175 : vector<2x24x32xf32>
    %cst_48 = arith.constant 9.99999997E-7 : f32
    %177 = vector.broadcast %cst_48 : f32 to vector<2x24x1xf32>
    %178 = arith.addf %174, %177 : vector<2x24x1xf32>
    %179 = math.rsqrt %178 : vector<2x24x1xf32>
    %180 = vector.broadcast %179 : vector<2x24x1xf32> to vector<2x24x32xf32>
    %181 = arith.mulf %176, %180 : vector<2x24x32xf32>
    %c0_49 = arith.constant 0 : index
    %c0_50 = arith.constant 0 : index
    %182 = vector.load %arg9[%c0_49, %c0_50] : memref<1x32xf32, #tpu.memory_space<vmem>>, vector<1x32xf32>
    %183 = vector.shape_cast %182 : vector<1x32xf32> to vector<1x1x32xf32>
    %184 = vector.broadcast %183 : vector<1x1x32xf32> to vector<2x24x32xf32>
    %185 = arith.mulf %181, %184 : vector<2x24x32xf32>
    %c0_51 = arith.constant 0 : index
    %c0_52 = arith.constant 0 : index
    %186 = vector.load %arg10[%c0_51, %c0_52] : memref<1x32xf32, #tpu.memory_space<vmem>>, vector<1x32xf32>
    %187 = vector.shape_cast %186 : vector<1x32xf32> to vector<1x1x32xf32>
    %188 = vector.broadcast %187 : vector<1x1x32xf32> to vector<2x24x32xf32>
    %189 = arith.addf %185, %188 : vector<2x24x32xf32>
    %190 = vector.shape_cast %189 : vector<2x24x32xf32> to vector<48x32xf32>
    %191 = arith.truncf %190 : vector<48x32xf32> to vector<48x32xbf16>
    %c0_53 = arith.constant 0 : index
    %c0_54 = arith.constant 0 : index
    %192 = vector.load %arg11[%c0_53, %c0_54] : memref<32x128xbf16, #tpu.memory_space<vmem>>, vector<32x128xbf16>
    %cst_55 = arith.constant dense<0.000000e+00> : vector<48x128xf32>
    %193 = tpu.matmul %191, %192, %cst_55 {dimension_numbers = #tpu.dot_dimension_numbers<[1], [0], [0], [1], [0, 0, 1, 1], [], []>} : vector<48x32xbf16>, vector<32x128xbf16>, vector<48x128xf32> -> vector<48x128xf32>
    %c0_56 = arith.constant 0 : index
    %c0_57 = arith.constant 0 : index
    %194 = vector.load %arg12[%c0_56, %c0_57] : memref<1x128xf32, #tpu.memory_space<vmem>>, vector<1x128xf32>
    %195 = vector.broadcast %194 : vector<1x128xf32> to vector<48x128xf32>
    %196 = arith.addf %193, %195 : vector<48x128xf32>
    %197 = arith.mulf %196, %196 : vector<48x128xf32>
    %198 = arith.mulf %196, %197 : vector<48x128xf32>
    %cst_58 = arith.constant 4.471500e-02 : f32
    %199 = vector.broadcast %cst_58 : f32 to vector<48x128xf32>
    %200 = arith.mulf %199, %198 : vector<48x128xf32>
    %201 = arith.addf %196, %200 : vector<48x128xf32>
    %cst_59 = arith.constant 0.797884583 : f32
    %202 = vector.broadcast %cst_59 : f32 to vector<48x128xf32>
    %203 = arith.mulf %202, %201 : vector<48x128xf32>
    %204 = math.tanh %203 : vector<48x128xf32>
    %cst_60 = arith.constant 1.000000e+00 : f32
    %205 = vector.broadcast %cst_60 : f32 to vector<48x128xf32>
    %206 = arith.addf %205, %204 : vector<48x128xf32>
    %cst_61 = arith.constant 5.000000e-01 : f32
    %207 = vector.broadcast %cst_61 : f32 to vector<48x128xf32>
    %208 = arith.mulf %207, %206 : vector<48x128xf32>
    %209 = arith.mulf %196, %208 : vector<48x128xf32>
    %210 = arith.truncf %209 : vector<48x128xf32> to vector<48x128xbf16>
    %c0_62 = arith.constant 0 : index
    %c0_63 = arith.constant 0 : index
    %211 = vector.load %arg13[%c0_62, %c0_63] : memref<128x32xbf16, #tpu.memory_space<vmem>>, vector<128x32xbf16>
    %cst_64 = arith.constant dense<0.000000e+00> : vector<48x32xf32>
    %212 = tpu.matmul %210, %211, %cst_64 {dimension_numbers = #tpu.dot_dimension_numbers<[1], [0], [0], [1], [0, 0, 1, 1], [], []>} : vector<48x128xbf16>, vector<128x32xbf16>, vector<48x32xf32> -> vector<48x32xf32>
    %c0_65 = arith.constant 0 : index
    %c0_66 = arith.constant 0 : index
    %213 = vector.load %arg14[%c0_65, %c0_66] : memref<1x32xf32, #tpu.memory_space<vmem>>, vector<1x32xf32>
    %214 = vector.broadcast %213 : vector<1x32xf32> to vector<48x32xf32>
    %215 = arith.addf %212, %214 : vector<48x32xf32>
    %216 = vector.shape_cast %215 : vector<48x32xf32> to vector<2x24x32xf32>
    %217 = arith.addf %163, %216 : vector<2x24x32xf32>
    %c0_67 = arith.constant 0 : index
    %c0_68 = arith.constant 0 : index
    %c0_69 = arith.constant 0 : index
    %c0_70 = arith.constant 0 : index
    %218 = vector.load %arg17[%c0_67, %c0_68, %c0_69, %c0_70] : memref<1x2x24x32xf32, #tpu.memory_space<vmem>>, vector<1x2x24x32xf32>
    %219 = vector.shape_cast %218 : vector<1x2x24x32xf32> to vector<2x24x32xf32>
    %220 = vector.shape_cast %217 : vector<2x24x32xf32> to vector<1x2x24x32xf32>
    tpu.vector_store %arg17[%c0_67, %c0_68, %c0_69, %c0_70], %220 {strides = array<i32>} : memref<1x2x24x32xf32, #tpu.memory_space<vmem>>, vector<1x2x24x32xf32>,
    return
  }
  func.func @transform_0(%arg0: i32, %arg1: memref<1xi32, #tpu.memory_space<smem>>) -> (i32, i32, i32, i32) {
    %c0_i32 = arith.constant 0 : i32
    %c0_i32_0 = arith.constant 0 : i32
    %c0_i32_1 = arith.constant 0 : i32
    %c0_i32_2 = arith.constant 0 : i32
    return %arg0, %c0_i32, %c0_i32_0, %c0_i32_1 : i32, i32, i32, i32
  }
  func.func @transform_1(%arg0: i32, %arg1: memref<1xi32, #tpu.memory_space<smem>>) -> (i32, i32) {
    %c0_i32 = arith.constant 0 : i32
    %c0_i32_0 = arith.constant 0 : i32
    %c0_i32_1 = arith.constant 0 : i32
    return %c0_i32, %c0_i32_0 : i32, i32
  }
  func.func @transform_2(%arg0: i32, %arg1: memref<1xi32, #tpu.memory_space<smem>>) -> (i32, i32) {
    %c0_i32 = arith.constant 0 : i32
    %c0_i32_0 = arith.constant 0 : i32
    %c0_i32_1 = arith.constant 0 : i32
    return %c0_i32, %c0_i32_0 : i32, i32
  }
  func.func @transform_3(%arg0: i32, %arg1: memref<1xi32, #tpu.memory_space<smem>>) -> (i32, i32) {
    %c0_i32 = arith.constant 0 : i32
    %c0_i32_0 = arith.constant 0 : i32
    %c0_i32_1 = arith.constant 0 : i32
    return %c0_i32, %c0_i32_0 : i32, i32
  }
  func.func @transform_4(%arg0: i32, %arg1: memref<1xi32, #tpu.memory_space<smem>>) -> (i32, i32) {
    %c0_i32 = arith.constant 0 : i32
    %c0_i32_0 = arith.constant 0 : i32
    %c0_i32_1 = arith.constant 0 : i32
    return %c0_i32, %c0_i32_0 : i32, i32
  }
  func.func @transform_5(%arg0: i32, %arg1: memref<1xi32, #tpu.memory_space<smem>>) -> (i32, i32) {
    %c0_i32 = arith.constant 0 : i32
    %c0_i32_0 = arith.constant 0 : i32
    %c0_i32_1 = arith.constant 0 : i32
    return %c0_i32, %c0_i32_0 : i32, i32
  }
  func.func @transform_6(%arg0: i32, %arg1: memref<1xi32, #tpu.memory_space<smem>>) -> (i32, i32) {
    %c0_i32 = arith.constant 0 : i32
    %c0_i32_0 = arith.constant 0 : i32
    %c0_i32_1 = arith.constant 0 : i32
    return %c0_i32, %c0_i32_0 : i32, i32
  }
  func.func @transform_7(%arg0: i32, %arg1: memref<1xi32, #tpu.memory_space<smem>>) -> (i32, i32) {
    %c0_i32 = arith.constant 0 : i32
    %c0_i32_0 = arith.constant 0 : i32
    %c0_i32_1 = arith.constant 0 : i32
    return %c0_i32, %c0_i32_0 : i32, i32
  }
  func.func @transform_8(%arg0: i32, %arg1: memref<1xi32, #tpu.memory_space<smem>>) -> (i32, i32) {
    %c0_i32 = arith.constant 0 : i32
    %c0_i32_0 = arith.constant 0 : i32
    %c0_i32_1 = arith.constant 0 : i32
    return %c0_i32, %c0_i32_0 : i32, i32
  }
  func.func @transform_9(%arg0: i32, %arg1: memref<1xi32, #tpu.memory_space<smem>>) -> (i32, i32) {
    %c0_i32 = arith.constant 0 : i32
    %c0_i32_0 = arith.constant 0 : i32
    %c0_i32_1 = arith.constant 0 : i32
    return %c0_i32, %c0_i32_0 : i32, i32
  }
  func.func @transform_10(%arg0: i32, %arg1: memref<1xi32, #tpu.memory_space<smem>>) -> (i32, i32) {
    %c0_i32 = arith.constant 0 : i32
    %c0_i32_0 = arith.constant 0 : i32
    %c0_i32_1 = arith.constant 0 : i32
    return %c0_i32, %c0_i32_0 : i32, i32
  }
  func.func @transform_11(%arg0: i32, %arg1: memref<1xi32, #tpu.memory_space<smem>>) -> (i32, i32) {
    %c0_i32 = arith.constant 0 : i32
    %c0_i32_0 = arith.constant 0 : i32
    %c0_i32_1 = arith.constant 0 : i32
    return %c0_i32, %c0_i32_0 : i32, i32
  }
  func.func @transform_12(%arg0: i32, %arg1: memref<1xi32, #tpu.memory_space<smem>>) -> (i32, i32) {
    %c0_i32 = arith.constant 0 : i32
    %c0_i32_0 = arith.constant 0 : i32
    %c0_i32_1 = arith.constant 0 : i32
    return %c0_i32, %c0_i32_0 : i32, i32
  }
  func.func @transform_13(%arg0: i32, %arg1: memref<1xi32, #tpu.memory_space<smem>>) -> (i32, i32) {
    %c0_i32 = arith.constant 0 : i32
    %c0_i32_0 = arith.constant 0 : i32
    %c0_i32_1 = arith.constant 0 : i32
    return %c0_i32, %c0_i32_0 : i32, i32
  }
  func.func @transform_14(%arg0: i32, %arg1: memref<1xi32, #tpu.memory_space<smem>>) -> (i32, i32) {
    %c0_i32 = arith.constant 0 : i32
    %c0_i32_0 = arith.constant 0 : i32
    %c0_i32_1 = arith.constant 0 : i32
    return %c0_i32, %c0_i32_0 : i32, i32
  }
  func.func @transform_15(%arg0: i32, %arg1: memref<1xi32, #tpu.memory_space<smem>>) -> (i32, i32, i32, i32) {
    %c0_i32 = arith.constant 0 : i32
    %c0_i32_0 = arith.constant 0 : i32
    %c0_i32_1 = arith.constant 0 : i32
    %c0_i32_2 = arith.constant 0 : i32
    return %arg0, %c0_i32, %c0_i32_0, %c0_i32_1 : i32, i32, i32, i32
  }
}

module attributes {stable_mosaic.version = 11 : i64} {
  func.func @block_kernel(%arg0: i32, %arg1: memref<5xi32, #tpu.memory_space<smem>>, %arg2: memref<1x2x24x32xf32, #tpu.memory_space<vmem>>, %arg3: memref<1x32xf32, #tpu.memory_space<vmem>>, %arg4: memref<1x32xf32, #tpu.memory_space<vmem>>, %arg5: memref<32x96xbf16, #tpu.memory_space<vmem>>, %arg6: memref<1x96xf32, #tpu.memory_space<vmem>>, %arg7: memref<32x32xbf16, #tpu.memory_space<vmem>>, %arg8: memref<1x32xf32, #tpu.memory_space<vmem>>, %arg9: memref<1x32xf32, #tpu.memory_space<vmem>>, %arg10: memref<1x32xf32, #tpu.memory_space<vmem>>, %arg11: memref<32x128xbf16, #tpu.memory_space<vmem>>, %arg12: memref<1x128xf32, #tpu.memory_space<vmem>>, %arg13: memref<128x32xbf16, #tpu.memory_space<vmem>>, %arg14: memref<1x32xf32, #tpu.memory_space<vmem>>, %arg15: memref<1x32xf32, #tpu.memory_space<vmem>>, %arg16: memref<1x32xf32, #tpu.memory_space<vmem>>, %arg17: memref<1x2x24x32xf32, #tpu.memory_space<vmem>>) attributes {dimension_semantics = [#tpu.dimension_semantics<parallel>], iteration_bounds = array<i64: 5>, scalar_prefetch = 1 : i64, scratch_operands = 0 : i64, tpu.core_type = #tpu.core_type<tc>, window_params = [{transform_indices = @transform_0, window_bounds = array<i64: 1, 2, 24, 32>}, {pipeline_mode = #tpu.pipeline_mode<synchronous>, transform_indices = @transform_1, window_bounds = array<i64: 1, 32>}, {pipeline_mode = #tpu.pipeline_mode<synchronous>, transform_indices = @transform_2, window_bounds = array<i64: 1, 32>}, {pipeline_mode = #tpu.pipeline_mode<synchronous>, transform_indices = @transform_3, window_bounds = array<i64: 32, 96>}, {pipeline_mode = #tpu.pipeline_mode<synchronous>, transform_indices = @transform_4, window_bounds = array<i64: 1, 96>}, {pipeline_mode = #tpu.pipeline_mode<synchronous>, transform_indices = @transform_5, window_bounds = array<i64: 32, 32>}, {pipeline_mode = #tpu.pipeline_mode<synchronous>, transform_indices = @transform_6, window_bounds = array<i64: 1, 32>}, {pipeline_mode = #tpu.pipeline_mode<synchronous>, transform_indices = @transform_7, window_bounds = array<i64: 1, 32>}, {pipeline_mode = #tpu.pipeline_mode<synchronous>, transform_indices = @transform_8, window_bounds = array<i64: 1, 32>}, {pipeline_mode = #tpu.pipeline_mode<synchronous>, transform_indices = @transform_9, window_bounds = array<i64: 32, 128>}, {pipeline_mode = #tpu.pipeline_mode<synchronous>, transform_indices = @transform_10, window_bounds = array<i64: 1, 128>}, {pipeline_mode = #tpu.pipeline_mode<synchronous>, transform_indices = @transform_11, window_bounds = array<i64: 128, 32>}, {pipeline_mode = #tpu.pipeline_mode<synchronous>, transform_indices = @transform_12, window_bounds = array<i64: 1, 32>}, {pipeline_mode = #tpu.pipeline_mode<synchronous>, transform_indices = @transform_13, window_bounds = array<i64: 1, 32>}, {pipeline_mode = #tpu.pipeline_mode<synchronous>, transform_indices = @transform_14, window_bounds = array<i64: 1, 32>}, {transform_indices = @transform_15, window_bounds = array<i64: 1, 2, 24, 32>}]} {
    %0 = arith.index_cast %arg0 : i32 to index
    %1 = memref.load %arg1[%0] : memref<5xi32, #tpu.memory_space<smem>>
    %c0 = arith.constant 0 : index
    %c0_0 = arith.constant 0 : index
    %c0_1 = arith.constant 0 : index
    %c0_2 = arith.constant 0 : index
    %2 = vector.load %arg2[%c0, %c0_0, %c0_1, %c0_2] : memref<1x2x24x32xf32, #tpu.memory_space<vmem>>, vector<1x2x24x32xf32>
    %3 = vector.shape_cast %2 : vector<1x2x24x32xf32> to vector<2x24x32xf32>
    %4 = tpu.iota {dimensions = array<i32: 1>} : vector<24x24xi32>
    %5 = vector.broadcast %1 : i32 to vector<24x24xi32>
    %6 = arith.cmpi slt, %4, %5 : vector<24x24xi32>
    %cst = arith.constant 0.000000e+00 : f32
    %cst_3 = arith.constant -1.000000e+30 : f32
    %7 = vector.broadcast %cst : f32 to vector<24x24xf32>
    %8 = vector.broadcast %cst_3 : f32 to vector<24x24xf32>
    %9 = arith.select %6, %7, %8 : vector<24x24xi1>, vector<24x24xf32>
    %cst_4 = arith.constant dense<0.000000e+00> : vector<2x24xf32>
    %10 = vector.multi_reduction <add>, %3, %cst_4 [2] : vector<2x24x32xf32> to vector<2x24xf32>
    %11 = vector.shape_cast %10 : vector<2x24xf32> to vector<2x24x1xf32>
    %cst_5 = arith.constant 3.200000e+01 : f32
    %12 = vector.broadcast %cst_5 : f32 to vector<2x24x1xf32>
    %13 = arith.divf %11, %12 : vector<2x24x1xf32>
    %14 = vector.broadcast %13 : vector<2x24x1xf32> to vector<2x24x32xf32>
    %15 = arith.subf %3, %14 : vector<2x24x32xf32>
    %16 = arith.mulf %15, %15 : vector<2x24x32xf32>
    %cst_6 = arith.constant dense<0.000000e+00> : vector<2x24xf32>
    %17 = vector.multi_reduction <add>, %16, %cst_6 [2] : vector<2x24x32xf32> to vector<2x24xf32>
    %18 = vector.shape_cast %17 : vector<2x24xf32> to vector<2x24x1xf32>
    %cst_7 = arith.constant 3.200000e+01 : f32
    %19 = vector.broadcast %cst_7 : f32 to vector<2x24x1xf32>
    %20 = arith.divf %18, %19 : vector<2x24x1xf32>
    %21 = vector.broadcast %13 : vector<2x24x1xf32> to vector<2x24x32xf32>
    %22 = arith.subf %3, %21 : vector<2x24x32xf32>
    %cst_8 = arith.constant 9.99999997E-7 : f32
    %23 = vector.broadcast %cst_8 : f32 to vector<2x24x1xf32>
    %24 = arith.addf %20, %23 : vector<2x24x1xf32>
    %25 = math.rsqrt %24 : vector<2x24x1xf32>
    %26 = vector.broadcast %25 : vector<2x24x1xf32> to vector<2x24x32xf32>
    %27 = arith.mulf %22, %26 : vector<2x24x32xf32>
    %c0_9 = arith.constant 0 : index
    %c0_10 = arith.constant 0 : index
    %28 = vector.load %arg3[%c0_9, %c0_10] : memref<1x32xf32, #tpu.memory_space<vmem>>, vector<1x32xf32>
    %29 = vector.shape_cast %28 : vector<1x32xf32> to vector<1x1x32xf32>
    %30 = vector.broadcast %29 : vector<1x1x32xf32> to vector<2x24x32xf32>
    %31 = arith.mulf %27, %30 : vector<2x24x32xf32>
    %c0_11 = arith.constant 0 : index
    %c0_12 = arith.constant 0 : index
    %32 = vector.load %arg4[%c0_11, %c0_12] : memref<1x32xf32, #tpu.memory_space<vmem>>, vector<1x32xf32>
    %33 = vector.shape_cast %32 : vector<1x32xf32> to vector<1x1x32xf32>
    %34 = vector.broadcast %33 : vector<1x1x32xf32> to vector<2x24x32xf32>
    %35 = arith.addf %31, %34 : vector<2x24x32xf32>
    %36 = vector.shape_cast %35 : vector<2x24x32xf32> to vector<48x32xf32>
    %37 = arith.truncf %36 : vector<48x32xf32> to vector<48x32xbf16>
    %c0_13 = arith.constant 0 : index
    %c0_14 = arith.constant 0 : index
    %38 = vector.load %arg5[%c0_13, %c0_14] : memref<32x96xbf16, #tpu.memory_space<vmem>>, vector<32x96xbf16>
    %cst_15 = arith.constant dense<0.000000e+00> : vector<48x96xf32>
    %39 = tpu.matmul %37, %38, %cst_15 {dimension_numbers = #tpu.dot_dimension_numbers<[1], [0], [0], [1], [0, 0, 1, 1], [], []>} : vector<48x32xbf16>, vector<32x96xbf16>, vector<48x96xf32> -> vector<48x96xf32>
    %c0_16 = arith.constant 0 : index
    %c0_17 = arith.constant 0 : index
    %40 = vector.load %arg6[%c0_16, %c0_17] : memref<1x96xf32, #tpu.memory_space<vmem>>, vector<1x96xf32>
    %41 = vector.broadcast %40 : vector<1x96xf32> to vector<48x96xf32>
    %42 = arith.addf %39, %41 : vector<48x96xf32>
    %43 = vector.shape_cast %42 : vector<48x96xf32> to vector<2x24x96xf32>
    %44 = vector.extract_strided_slice %43 {offsets = [0, 0, 0], sizes = [2, 24, 32], strides = [1, 1, 1]} : vector<2x24x96xf32> to vector<2x24x32xf32>
    %cst_18 = arith.constant 0.353553385 : f32
    %45 = vector.broadcast %cst_18 : f32 to vector<2x24x32xf32>
    %46 = arith.mulf %44, %45 : vector<2x24x32xf32>
    %47 = vector.extract_strided_slice %43 {offsets = [0, 0, 32], sizes = [2, 24, 32], strides = [1, 1, 1]} : vector<2x24x96xf32> to vector<2x24x32xf32>
    %48 = vector.extract_strided_slice %43 {offsets = [0, 0, 64], sizes = [2, 24, 32], strides = [1, 1, 1]} : vector<2x24x96xf32> to vector<2x24x32xf32>
    %c0_19 = arith.constant 0 : index
    %c0_20 = arith.constant 0 : index
    %49 = vector.load %arg7[%c0_19, %c0_20] : memref<32x32xbf16, #tpu.memory_space<vmem>>, vector<32x32xbf16>
    %cst_21 = arith.constant 0.000000e+00 : f32
    %50 = vector.broadcast %cst_21 : f32 to vector<48x32xf32>
    %51 = vector.extract_strided_slice %46 {offsets = [0, 0, 0], sizes = [2, 24, 8], strides = [1, 1, 1]} : vector<2x24x32xf32> to vector<2x24x8xf32>
    %52 = arith.truncf %51 : vector<2x24x8xf32> to vector<2x24x8xbf16>
    %53 = vector.extract_strided_slice %47 {offsets = [0, 0, 0], sizes = [2, 24, 8], strides = [1, 1, 1]} : vector<2x24x32xf32> to vector<2x24x8xf32>
    %54 = arith.truncf %53 : vector<2x24x8xf32> to vector<2x24x8xbf16>
    %55 = vector.extract_strided_slice %48 {offsets = [0, 0, 0], sizes = [2, 24, 8], strides = [1, 1, 1]} : vector<2x24x32xf32> to vector<2x24x8xf32>
    %56 = arith.truncf %55 : vector<2x24x8xf32> to vector<2x24x8xbf16>
    "tpu.trace_start"() <{level = 10 : i32, message = "bqd,bkd->bqk"}> : () -> ()
    %cst_22 = arith.constant dense<0.000000e+00> : vector<2x24x24xf32>
    %57 = tpu.matmul %52, %54, %cst_22 {dimension_numbers = #tpu.dot_dimension_numbers<[2], [2], [1], [1], [0, 0, 0, 1, 1, 1], [0], [0]>} : vector<2x24x8xbf16>, vector<2x24x8xbf16>, vector<2x24x24xf32> -> vector<2x24x24xf32>
    "tpu.trace_stop"() : () -> ()
    %58 = vector.shape_cast %9 : vector<24x24xf32> to vector<1x24x24xf32>
    %59 = vector.broadcast %58 : vector<1x24x24xf32> to vector<2x24x24xf32>
    %60 = arith.addf %57, %59 : vector<2x24x24xf32>
    %cst_23 = arith.constant dense<0xFF800000> : vector<2x24xf32>
    %61 = vector.multi_reduction <maximumf>, %60, %cst_23 [2] : vector<2x24x24xf32> to vector<2x24xf32>
    %62 = vector.shape_cast %61 : vector<2x24xf32> to vector<2x24x1xf32>
    %63 = vector.broadcast %62 : vector<2x24x1xf32> to vector<2x24x24xf32>
    %64 = arith.subf %60, %63 : vector<2x24x24xf32>
    %65 = math.exp %64 : vector<2x24x24xf32>
    %cst_24 = arith.constant dense<0.000000e+00> : vector<2x24xf32>
    %66 = vector.multi_reduction <add>, %65, %cst_24 [2] : vector<2x24x24xf32> to vector<2x24xf32>
    %67 = vector.shape_cast %66 : vector<2x24xf32> to vector<2x24x1xf32>
    %68 = tpu.reciprocal %67 {approx = true} : vector<2x24x1xf32> -> vector<2x24x1xf32>
    %69 = vector.broadcast %68 : vector<2x24x1xf32> to vector<2x24x24xf32>
    %70 = arith.mulf %65, %69 : vector<2x24x24xf32>
    %71 = arith.truncf %70 : vector<2x24x24xf32> to vector<2x24x24xbf16>
    "tpu.trace_start"() <{level = 10 : i32, message = "bqk,bkd->bqd"}> : () -> ()
    %cst_25 = arith.constant dense<0.000000e+00> : vector<2x24x8xf32>
    %72 = tpu.matmul %71, %56, %cst_25 {dimension_numbers = #tpu.dot_dimension_numbers<[2], [1], [1], [2], [0, 0, 0, 1, 1, 2], [0], [0]>} : vector<2x24x24xbf16>, vector<2x24x8xbf16>, vector<2x24x8xf32> -> vector<2x24x8xf32>
    "tpu.trace_stop"() : () -> ()
    %73 = vector.shape_cast %72 : vector<2x24x8xf32> to vector<48x8xf32>
    %74 = arith.truncf %73 : vector<48x8xf32> to vector<48x8xbf16>
    %75 = vector.extract_strided_slice %49 {offsets = [0, 0], sizes = [8, 32], strides = [1, 1]} : vector<32x32xbf16> to vector<8x32xbf16>
    %cst_26 = arith.constant dense<0.000000e+00> : vector<48x32xf32>
    %76 = tpu.matmul %74, %75, %cst_26 {dimension_numbers = #tpu.dot_dimension_numbers<[1], [0], [0], [1], [0, 0, 1, 1], [], []>} : vector<48x8xbf16>, vector<8x32xbf16>, vector<48x32xf32> -> vector<48x32xf32>
    %77 = arith.addf %50, %76 : vector<48x32xf32>
    %78 = vector.extract_strided_slice %46 {offsets = [0, 0, 8], sizes = [2, 24, 8], strides = [1, 1, 1]} : vector<2x24x32xf32> to vector<2x24x8xf32>
    %79 = arith.truncf %78 : vector<2x24x8xf32> to vector<2x24x8xbf16>
    %80 = vector.extract_strided_slice %47 {offsets = [0, 0, 8], sizes = [2, 24, 8], strides = [1, 1, 1]} : vector<2x24x32xf32> to vector<2x24x8xf32>
    %81 = arith.truncf %80 : vector<2x24x8xf32> to vector<2x24x8xbf16>
    %82 = vector.extract_strided_slice %48 {offsets = [0, 0, 8], sizes = [2, 24, 8], strides = [1, 1, 1]} : vector<2x24x32xf32> to vector<2x24x8xf32>
    %83 = arith.truncf %82 : vector<2x24x8xf32> to vector<2x24x8xbf16>
    "tpu.trace_start"() <{level = 10 : i32, message = "bqd,bkd->bqk"}> : () -> ()
    %cst_27 = arith.constant dense<0.000000e+00> : vector<2x24x24xf32>
    %84 = tpu.matmul %79, %81, %cst_27 {dimension_numbers = #tpu.dot_dimension_numbers<[2], [2], [1], [1], [0, 0, 0, 1, 1, 1], [0], [0]>} : vector<2x24x8xbf16>, vector<2x24x8xbf16>, vector<2x24x24xf32> -> vector<2x24x24xf32>
    "tpu.trace_stop"() : () -> ()
    %85 = vector.shape_cast %9 : vector<24x24xf32> to vector<1x24x24xf32>
    %86 = vector.broadcast %85 : vector<1x24x24xf32> to vector<2x24x24xf32>
    %87 = arith.addf %84, %86 : vector<2x24x24xf32>
    %cst_28 = arith.constant dense<0xFF800000> : vector<2x24xf32>
    %88 = vector.multi_reduction <maximumf>, %87, %cst_28 [2] : vector<2x24x24xf32> to vector<2x24xf32>
    %89 = vector.shape_cast %88 : vector<2x24xf32> to vector<2x24x1xf32>
    %90 = vector.broadcast %89 : vector<2x24x1xf32> to vector<2x24x24xf32>
    %91 = arith.subf %87, %90 : vector<2x24x24xf32>
    %92 = math.exp %91 : vector<2x24x24xf32>
    %cst_29 = arith.constant dense<0.000000e+00> : vector<2x24xf32>
    %93 = vector.multi_reduction <add>, %92, %cst_29 [2] : vector<2x24x24xf32> to vector<2x24xf32>
    %94 = vector.shape_cast %93 : vector<2x24xf32> to vector<2x24x1xf32>
    %95 = tpu.reciprocal %94 {approx = true} : vector<2x24x1xf32> -> vector<2x24x1xf32>
    %96 = vector.broadcast %95 : vector<2x24x1xf32> to vector<2x24x24xf32>
    %97 = arith.mulf %92, %96 : vector<2x24x24xf32>
    %98 = arith.truncf %97 : vector<2x24x24xf32> to vector<2x24x24xbf16>
    "tpu.trace_start"() <{level = 10 : i32, message = "bqk,bkd->bqd"}> : () -> ()
    %cst_30 = arith.constant dense<0.000000e+00> : vector<2x24x8xf32>
    %99 = tpu.matmul %98, %83, %cst_30 {dimension_numbers = #tpu.dot_dimension_numbers<[2], [1], [1], [2], [0, 0, 0, 1, 1, 2], [0], [0]>} : vector<2x24x24xbf16>, vector<2x24x8xbf16>, vector<2x24x8xf32> -> vector<2x24x8xf32>
    "tpu.trace_stop"() : () -> ()
    %100 = vector.shape_cast %99 : vector<2x24x8xf32> to vector<48x8xf32>
    %101 = arith.truncf %100 : vector<48x8xf32> to vector<48x8xbf16>
    %102 = vector.extract_strided_slice %49 {offsets = [8, 0], sizes = [8, 32], strides = [1, 1]} : vector<32x32xbf16> to vector<8x32xbf16>
    %cst_31 = arith.constant dense<0.000000e+00> : vector<48x32xf32>
    %103 = tpu.matmul %101, %102, %cst_31 {dimension_numbers = #tpu.dot_dimension_numbers<[1], [0], [0], [1], [0, 0, 1, 1], [], []>} : vector<48x8xbf16>, vector<8x32xbf16>, vector<48x32xf32> -> vector<48x32xf32>
    %104 = arith.addf %77, %103 : vector<48x32xf32>
    %105 = vector.extract_strided_slice %46 {offsets = [0, 0, 16], sizes = [2, 24, 8], strides = [1, 1, 1]} : vector<2x24x32xf32> to vector<2x24x8xf32>
    %106 = arith.truncf %105 : vector<2x24x8xf32> to vector<2x24x8xbf16>
    %107 = vector.extract_strided_slice %47 {offsets = [0, 0, 16], sizes = [2, 24, 8], strides = [1, 1, 1]} : vector<2x24x32xf32> to vector<2x24x8xf32>
    %108 = arith.truncf %107 : vector<2x24x8xf32> to vector<2x24x8xbf16>
    %109 = vector.extract_strided_slice %48 {offsets = [0, 0, 16], sizes = [2, 24, 8], strides = [1, 1, 1]} : vector<2x24x32xf32> to vector<2x24x8xf32>
    %110 = arith.truncf %109 : vector<2x24x8xf32> to vector<2x24x8xbf16>
    "tpu.trace_start"() <{level = 10 : i32, message = "bqd,bkd->bqk"}> : () -> ()
    %cst_32 = arith.constant dense<0.000000e+00> : vector<2x24x24xf32>
    %111 = tpu.matmul %106, %108, %cst_32 {dimension_numbers = #tpu.dot_dimension_numbers<[2], [2], [1], [1], [0, 0, 0, 1, 1, 1], [0], [0]>} : vector<2x24x8xbf16>, vector<2x24x8xbf16>, vector<2x24x24xf32> -> vector<2x24x24xf32>
    "tpu.trace_stop"() : () -> ()
    %112 = vector.shape_cast %9 : vector<24x24xf32> to vector<1x24x24xf32>
    %113 = vector.broadcast %112 : vector<1x24x24xf32> to vector<2x24x24xf32>
    %114 = arith.addf %111, %113 : vector<2x24x24xf32>
    %cst_33 = arith.constant dense<0xFF800000> : vector<2x24xf32>
    %115 = vector.multi_reduction <maximumf>, %114, %cst_33 [2] : vector<2x24x24xf32> to vector<2x24xf32>
    %116 = vector.shape_cast %115 : vector<2x24xf32> to vector<2x24x1xf32>
    %117 = vector.broadcast %116 : vector<2x24x1xf32> to vector<2x24x24xf32>
    %118 = arith.subf %114, %117 : vector<2x24x24xf32>
    %119 = math.exp %118 : vector<2x24x24xf32>
    %cst_34 = arith.constant dense<0.000000e+00> : vector<2x24xf32>
    %120 = vector.multi_reduction <add>, %119, %cst_34 [2] : vector<2x24x24xf32> to vector<2x24xf32>
    %121 = vector.shape_cast %120 : vector<2x24xf32> to vector<2x24x1xf32>
    %122 = tpu.reciprocal %121 {approx = true} : vector<2x24x1xf32> -> vector<2x24x1xf32>
    %123 = vector.broadcast %122 : vector<2x24x1xf32> to vector<2x24x24xf32>
    %124 = arith.mulf %119, %123 : vector<2x24x24xf32>
    %125 = arith.truncf %124 : vector<2x24x24xf32> to vector<2x24x24xbf16>
    "tpu.trace_start"() <{level = 10 : i32, message = "bqk,bkd->bqd"}> : () -> ()
    %cst_35 = arith.constant dense<0.000000e+00> : vector<2x24x8xf32>
    %126 = tpu.matmul %125, %110, %cst_35 {dimension_numbers = #tpu.dot_dimension_numbers<[2], [1], [1], [2], [0, 0, 0, 1, 1, 2], [0], [0]>} : vector<2x24x24xbf16>, vector<2x24x8xbf16>, vector<2x24x8xf32> -> vector<2x24x8xf32>
    "tpu.trace_stop"() : () -> ()
    %127 = vector.shape_cast %126 : vector<2x24x8xf32> to vector<48x8xf32>
    %128 = arith.truncf %127 : vector<48x8xf32> to vector<48x8xbf16>
    %129 = vector.extract_strided_slice %49 {offsets = [16, 0], sizes = [8, 32], strides = [1, 1]} : vector<32x32xbf16> to vector<8x32xbf16>
    %cst_36 = arith.constant dense<0.000000e+00> : vector<48x32xf32>
    %130 = tpu.matmul %128, %129, %cst_36 {dimension_numbers = #tpu.dot_dimension_numbers<[1], [0], [0], [1], [0, 0, 1, 1], [], []>} : vector<48x8xbf16>, vector<8x32xbf16>, vector<48x32xf32> -> vector<48x32xf32>
    %131 = arith.addf %104, %130 : vector<48x32xf32>
    %132 = vector.extract_strided_slice %46 {offsets = [0, 0, 24], sizes = [2, 24, 8], strides = [1, 1, 1]} : vector<2x24x32xf32> to vector<2x24x8xf32>
    %133 = arith.truncf %132 : vector<2x24x8xf32> to vector<2x24x8xbf16>
    %134 = vector.extract_strided_slice %47 {offsets = [0, 0, 24], sizes = [2, 24, 8], strides = [1, 1, 1]} : vector<2x24x32xf32> to vector<2x24x8xf32>
    %135 = arith.truncf %134 : vector<2x24x8xf32> to vector<2x24x8xbf16>
    %136 = vector.extract_strided_slice %48 {offsets = [0, 0, 24], sizes = [2, 24, 8], strides = [1, 1, 1]} : vector<2x24x32xf32> to vector<2x24x8xf32>
    %137 = arith.truncf %136 : vector<2x24x8xf32> to vector<2x24x8xbf16>
    "tpu.trace_start"() <{level = 10 : i32, message = "bqd,bkd->bqk"}> : () -> ()
    %cst_37 = arith.constant dense<0.000000e+00> : vector<2x24x24xf32>
    %138 = tpu.matmul %133, %135, %cst_37 {dimension_numbers = #tpu.dot_dimension_numbers<[2], [2], [1], [1], [0, 0, 0, 1, 1, 1], [0], [0]>} : vector<2x24x8xbf16>, vector<2x24x8xbf16>, vector<2x24x24xf32> -> vector<2x24x24xf32>
    "tpu.trace_stop"() : () -> ()
    %139 = vector.shape_cast %9 : vector<24x24xf32> to vector<1x24x24xf32>
    %140 = vector.broadcast %139 : vector<1x24x24xf32> to vector<2x24x24xf32>
    %141 = arith.addf %138, %140 : vector<2x24x24xf32>
    %cst_38 = arith.constant dense<0xFF800000> : vector<2x24xf32>
    %142 = vector.multi_reduction <maximumf>, %141, %cst_38 [2] : vector<2x24x24xf32> to vector<2x24xf32>
    %143 = vector.shape_cast %142 : vector<2x24xf32> to vector<2x24x1xf32>
    %144 = vector.broadcast %143 : vector<2x24x1xf32> to vector<2x24x24xf32>
    %145 = arith.subf %141, %144 : vector<2x24x24xf32>
    %146 = math.exp %145 : vector<2x24x24xf32>
    %cst_39 = arith.constant dense<0.000000e+00> : vector<2x24xf32>
    %147 = vector.multi_reduction <add>, %146, %cst_39 [2] : vector<2x24x24xf32> to vector<2x24xf32>
    %148 = vector.shape_cast %147 : vector<2x24xf32> to vector<2x24x1xf32>
    %149 = tpu.reciprocal %148 {approx = true} : vector<2x24x1xf32> -> vector<2x24x1xf32>
    %150 = vector.broadcast %149 : vector<2x24x1xf32> to vector<2x24x24xf32>
    %151 = arith.mulf %146, %150 : vector<2x24x24xf32>
    %152 = arith.truncf %151 : vector<2x24x24xf32> to vector<2x24x24xbf16>
    "tpu.trace_start"() <{level = 10 : i32, message = "bqk,bkd->bqd"}> : () -> ()
    %cst_40 = arith.constant dense<0.000000e+00> : vector<2x24x8xf32>
    %153 = tpu.matmul %152, %137, %cst_40 {dimension_numbers = #tpu.dot_dimension_numbers<[2], [1], [1], [2], [0, 0, 0, 1, 1, 2], [0], [0]>} : vector<2x24x24xbf16>, vector<2x24x8xbf16>, vector<2x24x8xf32> -> vector<2x24x8xf32>
    "tpu.trace_stop"() : () -> ()
    %154 = vector.shape_cast %153 : vector<2x24x8xf32> to vector<48x8xf32>
    %155 = arith.truncf %154 : vector<48x8xf32> to vector<48x8xbf16>
    %156 = vector.extract_strided_slice %49 {offsets = [24, 0], sizes = [8, 32], strides = [1, 1]} : vector<32x32xbf16> to vector<8x32xbf16>
    %cst_41 = arith.constant dense<0.000000e+00> : vector<48x32xf32>
    %157 = tpu.matmul %155, %156, %cst_41 {dimension_numbers = #tpu.dot_dimension_numbers<[1], [0], [0], [1], [0, 0, 1, 1], [], []>} : vector<48x8xbf16>, vector<8x32xbf16>, vector<48x32xf32> -> vector<48x32xf32>
    %158 = arith.addf %131, %157 : vector<48x32xf32>
    %c0_42 = arith.constant 0 : index
    %c0_43 = arith.constant 0 : index
    %159 = vector.load %arg8[%c0_42, %c0_43] : memref<1x32xf32, #tpu.memory_space<vmem>>, vector<1x32xf32>
    %160 = vector.broadcast %159 : vector<1x32xf32> to vector<48x32xf32>
    %161 = arith.addf %158, %160 : vector<48x32xf32>
    %162 = vector.shape_cast %161 : vector<48x32xf32> to vector<2x24x32xf32>
    %163 = arith.addf %3, %162 : vector<2x24x32xf32>
    %cst_44 = arith.constant dense<0.000000e+00> : vector<2x24xf32>
    %164 = vector.multi_reduction <add>, %163, %cst_44 [2] : vector<2x24x32xf32> to vector<2x24xf32>
    %165 = vector.shape_cast %164 : vector<2x24xf32> to vector<2x24x1xf32>
    %cst_45 = arith.constant 3.200000e+01 : f32
    %166 = vector.broadcast %cst_45 : f32 to vector<2x24x1xf32>
    %167 = arith.divf %165, %166 : vector<2x24x1xf32>
    %168 = vector.broadcast %167 : vector<2x24x1xf32> to vector<2x24x32xf32>
    %169 = arith.subf %163, %168 : vector<2x24x32xf32>
    %170 = arith.mulf %169, %169 : vector<2x24x32xf32>
    %cst_46 = arith.constant dense<0.000000e+00> : vector<2x24xf32>
    %171 = vector.multi_reduction <add>, %170, %cst_46 [2] : vector<2x24x32xf32> to vector<2x24xf32>
    %172 = vector.shape_cast %171 : vector<2x24xf32> to vector<2x24x1xf32>
    %cst_47 = arith.constant 3.200000e+01 : f32
    %173 = vector.broadcast %cst_47 : f32 to vector<2x24x1xf32>
    %174 = arith.divf %172, %173 : vector<2x24x1xf32>
    %175 = vector.broadcast %167 : vector<2x24x1xf32> to vector<2x24x32xf32>
    %176 = arith.subf %163, %175 : vector<2x24x32xf32>
    %cst_48 = arith.constant 9.99999997E-7 : f32
    %177 = vector.broadcast %cst_48 : f32 to vector<2x24x1xf32>
    %178 = arith.addf %174, %177 : vector<2x24x1xf32>
    %179 = math.rsqrt %178 : vector<2x24x1xf32>
    %180 = vector.broadcast %179 : vector<2x24x1xf32> to vector<2x24x32xf32>
    %181 = arith.mulf %176, %180 : vector<2x24x32xf32>
    %c0_49 = arith.constant 0 : index
    %c0_50 = arith.constant 0 : index
    %182 = vector.load %arg9[%c0_49, %c0_50] : memref<1x32xf32, #tpu.memory_space<vmem>>, vector<1x32xf32>
    %183 = vector.shape_cast %182 : vector<1x32xf32> to vector<1x1x32xf32>
    %184 = vector.broadcast %183 : vector<1x1x32xf32> to vector<2x24x32xf32>
    %185 = arith.mulf %181, %184 : vector<2x24x32xf32>
    %c0_51 = arith.constant 0 : index
    %c0_52 = arith.constant 0 : index
    %186 = vector.load %arg10[%c0_51, %c0_52] : memref<1x32xf32, #tpu.memory_space<vmem>>, vector<1x32xf32>
    %187 = vector.shape_cast %186 : vector<1x32xf32> to vector<1x1x32xf32>
    %188 = vector.broadcast %187 : vector<1x1x32xf32> to vector<2x24x32xf32>
    %189 = arith.addf %185, %188 : vector<2x24x32xf32>
    %190 = vector.shape_cast %189 : vector<2x24x32xf32> to vector<48x32xf32>
    %191 = arith.truncf %190 : vector<48x32xf32> to vector<48x32xbf16>
    %c0_53 = arith.constant 0 : index
    %c0_54 = arith.constant 0 : index
    %192 = vector.load %arg11[%c0_53, %c0_54] : memref<32x128xbf16, #tpu.memory_space<vmem>>, vector<32x128xbf16>
    %cst_55 = arith.constant dense<0.000000e+00> : vector<48x128xf32>
    %193 = tpu.matmul %191, %192, %cst_55 {dimension_numbers = #tpu.dot_dimension_numbers<[1], [0], [0], [1], [0, 0, 1, 1], [], []>} : vector<48x32xbf16>, vector<32x128xbf16>, vector<48x128xf32> -> vector<48x128xf32>
    %c0_56 = arith.constant 0 : index
    %c0_57 = arith.constant 0 : index
    %194 = vector.load %arg12[%c0_56, %c0_57] : memref<1x128xf32, #tpu.memory_space<vmem>>, vector<1x128xf32>
    %195 = vector.broadcast %194 : vector<1x128xf32> to vector<48x128xf32>
    %196 = arith.addf %193, %195 : vector<48x128xf32>
    %197 = arith.mulf %196, %196 : vector<48x128xf32>
    %198 = arith.mulf %196, %197 : vector<48x128xf32>
    %cst_58 = arith.constant 4.471500e-02 : f32
    %199 = vector.broadcast %cst_58 : f32 to vector<48x128xf32>
    %200 = arith.mulf %199, %198 : vector<48x128xf32>
    %201 = arith.addf %196, %200 : vector<48x128xf32>
    %cst_59 = arith.constant 0.797884583 : f32
    %202 = vector.broadcast %cst_59 : f32 to vector<48x128xf32>
    %203 = arith.mulf %202, %201 : vector<48x128xf32>
    %204 = math.tanh %203 : vector<48x128xf32>
    %cst_60 = arith.constant 1.000000e+00 : f32
    %205 = vector.broadcast %cst_60 : f32 to vector<48x128xf32>
    %206 = arith.addf %205, %204 : vector<48x128xf32>
    %cst_61 = arith.constant 5.000000e-01 : f32
    %207 = vector.broadcast %cst_61 : f32 to vector<48x128xf32>
    %208 = arith.mulf %207, %206 : vector<48x128xf32>
    %209 = arith.mulf %196, %208 : vector<48x128xf32>
    %210 = arith.truncf %209 : vector<48x128xf32> to vector<48x128xbf16>
    %c0_62 = arith.constant 0 : index
    %c0_63 = arith.constant 0 : index
    %211 = vector.load %arg13[%c0_62, %c0_63] : memref<128x32xbf16, #tpu.memory_space<vmem>>, vector<128x32xbf16>
    %cst_64 = arith.constant dense<0.000000e+00> : vector<48x32xf32>
    %212 = tpu.matmul %210, %211, %cst_64 {dimension_numbers = #tpu.dot_dimension_numbers<[1], [0], [0], [1], [0, 0, 1, 1], [], []>} : vector<48x128xbf16>, vector<128x32xbf16>, vector<48x32xf32> -> vector<48x32xf32>
    %c0_65 = arith.constant 0 : index
    %c0_66 = arith.constant 0 : index
    %213 = vector.load %arg14[%c0_65, %c0_66] : memref<1x32xf32, #tpu.memory_space<vmem>>, vector<1x32xf32>
    %214 = vector.broadcast %213 : vector<1x32xf32> to vector<48x32xf32>
    %215 = arith.addf %212, %214 : vector<48x32xf32>
    %216 = vector.shape_cast %215 : vector<48x32xf32> to vector<2x24x32xf32>
    %217 = arith.addf %163, %216 : vector<2x24x32xf32>
    %cst_67 = arith.constant dense<0.000000e+00> : vector<2x24xf32>
    %218 = vector.multi_reduction <add>, %217, %cst_67 [2] : vector<2x24x32xf32> to vector<2x24xf32>
    %219 = vector.shape_cast %218 : vector<2x24xf32> to vector<2x24x1xf32>
    %cst_68 = arith.constant 3.200000e+01 : f32
    %220 = vector.broadcast %cst_68 : f32 to vector<2x24x1xf32>
    %221 = arith.divf %219, %220 : vector<2x24x1xf32>
    %222 = vector.broadcast %221 : vector<2x24x1xf32> to vector<2x24x32xf32>
    %223 = arith.subf %217, %222 : vector<2x24x32xf32>
    %224 = arith.mulf %223, %223 : vector<2x24x32xf32>
    %cst_69 = arith.constant dense<0.000000e+00> : vector<2x24xf32>
    %225 = vector.multi_reduction <add>, %224, %cst_69 [2] : vector<2x24x32xf32> to vector<2x24xf32>
    %226 = vector.shape_cast %225 : vector<2x24xf32> to vector<2x24x1xf32>
    %cst_70 = arith.constant 3.200000e+01 : f32
    %227 = vector.broadcast %cst_70 : f32 to vector<2x24x1xf32>
    %228 = arith.divf %226, %227 : vector<2x24x1xf32>
    %229 = vector.broadcast %221 : vector<2x24x1xf32> to vector<2x24x32xf32>
    %230 = arith.subf %217, %229 : vector<2x24x32xf32>
    %cst_71 = arith.constant 9.99999997E-7 : f32
    %231 = vector.broadcast %cst_71 : f32 to vector<2x24x1xf32>
    %232 = arith.addf %228, %231 : vector<2x24x1xf32>
    %233 = math.rsqrt %232 : vector<2x24x1xf32>
    %234 = vector.broadcast %233 : vector<2x24x1xf32> to vector<2x24x32xf32>
    %235 = arith.mulf %230, %234 : vector<2x24x32xf32>
    %c0_72 = arith.constant 0 : index
    %c0_73 = arith.constant 0 : index
    %236 = vector.load %arg15[%c0_72, %c0_73] : memref<1x32xf32, #tpu.memory_space<vmem>>, vector<1x32xf32>
    %237 = vector.shape_cast %236 : vector<1x32xf32> to vector<1x1x32xf32>
    %238 = vector.broadcast %237 : vector<1x1x32xf32> to vector<2x24x32xf32>
    %239 = arith.mulf %235, %238 : vector<2x24x32xf32>
    %c0_74 = arith.constant 0 : index
    %c0_75 = arith.constant 0 : index
    %240 = vector.load %arg16[%c0_74, %c0_75] : memref<1x32xf32, #tpu.memory_space<vmem>>, vector<1x32xf32>
    %241 = vector.shape_cast %240 : vector<1x32xf32> to vector<1x1x32xf32>
    %242 = vector.broadcast %241 : vector<1x1x32xf32> to vector<2x24x32xf32>
    %243 = arith.addf %239, %242 : vector<2x24x32xf32>
    %c0_76 = arith.constant 0 : index
    %c0_77 = arith.constant 0 : index
    %c0_78 = arith.constant 0 : index
    %c0_79 = arith.constant 0 : index
    %244 = vector.load %arg17[%c0_76, %c0_77, %c0_78, %c0_79] : memref<1x2x24x32xf32, #tpu.memory_space<vmem>>, vector<1x2x24x32xf32>
    %245 = vector.shape_cast %244 : vector<1x2x24x32xf32> to vector<2x24x32xf32>
    %246 = vector.shape_cast %243 : vector<2x24x32xf32> to vector<1x2x24x32xf32>
    tpu.vector_store %arg17[%c0_76, %c0_77, %c0_78, %c0_79], %246 {strides = array<i32>} : memref<1x2x24x32xf32, #tpu.memory_space<vmem>>, vector<1x2x24x32xf32>,
    return
  }
  func.func @transform_0(%arg0: i32, %arg1: memref<5xi32, #tpu.memory_space<smem>>) -> (i32, i32, i32, i32) {
    %c0_i32 = arith.constant 0 : i32
    %c0_i32_0 = arith.constant 0 : i32
    %c0_i32_1 = arith.constant 0 : i32
    %c0_i32_2 = arith.constant 0 : i32
    return %arg0, %c0_i32, %c0_i32_0, %c0_i32_1 : i32, i32, i32, i32
  }
  func.func @transform_1(%arg0: i32, %arg1: memref<5xi32, #tpu.memory_space<smem>>) -> (i32, i32) {
    %c0_i32 = arith.constant 0 : i32
    %c0_i32_0 = arith.constant 0 : i32
    %c0_i32_1 = arith.constant 0 : i32
    return %c0_i32, %c0_i32_0 : i32, i32
  }
  func.func @transform_2(%arg0: i32, %arg1: memref<5xi32, #tpu.memory_space<smem>>) -> (i32, i32) {
    %c0_i32 = arith.constant 0 : i32
    %c0_i32_0 = arith.constant 0 : i32
    %c0_i32_1 = arith.constant 0 : i32
    return %c0_i32, %c0_i32_0 : i32, i32
  }
  func.func @transform_3(%arg0: i32, %arg1: memref<5xi32, #tpu.memory_space<smem>>) -> (i32, i32) {
    %c0_i32 = arith.constant 0 : i32
    %c0_i32_0 = arith.constant 0 : i32
    %c0_i32_1 = arith.constant 0 : i32
    return %c0_i32, %c0_i32_0 : i32, i32
  }
  func.func @transform_4(%arg0: i32, %arg1: memref<5xi32, #tpu.memory_space<smem>>) -> (i32, i32) {
    %c0_i32 = arith.constant 0 : i32
    %c0_i32_0 = arith.constant 0 : i32
    %c0_i32_1 = arith.constant 0 : i32
    return %c0_i32, %c0_i32_0 : i32, i32
  }
  func.func @transform_5(%arg0: i32, %arg1: memref<5xi32, #tpu.memory_space<smem>>) -> (i32, i32) {
    %c0_i32 = arith.constant 0 : i32
    %c0_i32_0 = arith.constant 0 : i32
    %c0_i32_1 = arith.constant 0 : i32
    return %c0_i32, %c0_i32_0 : i32, i32
  }
  func.func @transform_6(%arg0: i32, %arg1: memref<5xi32, #tpu.memory_space<smem>>) -> (i32, i32) {
    %c0_i32 = arith.constant 0 : i32
    %c0_i32_0 = arith.constant 0 : i32
    %c0_i32_1 = arith.constant 0 : i32
    return %c0_i32, %c0_i32_0 : i32, i32
  }
  func.func @transform_7(%arg0: i32, %arg1: memref<5xi32, #tpu.memory_space<smem>>) -> (i32, i32) {
    %c0_i32 = arith.constant 0 : i32
    %c0_i32_0 = arith.constant 0 : i32
    %c0_i32_1 = arith.constant 0 : i32
    return %c0_i32, %c0_i32_0 : i32, i32
  }
  func.func @transform_8(%arg0: i32, %arg1: memref<5xi32, #tpu.memory_space<smem>>) -> (i32, i32) {
    %c0_i32 = arith.constant 0 : i32
    %c0_i32_0 = arith.constant 0 : i32
    %c0_i32_1 = arith.constant 0 : i32
    return %c0_i32, %c0_i32_0 : i32, i32
  }
  func.func @transform_9(%arg0: i32, %arg1: memref<5xi32, #tpu.memory_space<smem>>) -> (i32, i32) {
    %c0_i32 = arith.constant 0 : i32
    %c0_i32_0 = arith.constant 0 : i32
    %c0_i32_1 = arith.constant 0 : i32
    return %c0_i32, %c0_i32_0 : i32, i32
  }
  func.func @transform_10(%arg0: i32, %arg1: memref<5xi32, #tpu.memory_space<smem>>) -> (i32, i32) {
    %c0_i32 = arith.constant 0 : i32
    %c0_i32_0 = arith.constant 0 : i32
    %c0_i32_1 = arith.constant 0 : i32
    return %c0_i32, %c0_i32_0 : i32, i32
  }
  func.func @transform_11(%arg0: i32, %arg1: memref<5xi32, #tpu.memory_space<smem>>) -> (i32, i32) {
    %c0_i32 = arith.constant 0 : i32
    %c0_i32_0 = arith.constant 0 : i32
    %c0_i32_1 = arith.constant 0 : i32
    return %c0_i32, %c0_i32_0 : i32, i32
  }
  func.func @transform_12(%arg0: i32, %arg1: memref<5xi32, #tpu.memory_space<smem>>) -> (i32, i32) {
    %c0_i32 = arith.constant 0 : i32
    %c0_i32_0 = arith.constant 0 : i32
    %c0_i32_1 = arith.constant 0 : i32
    return %c0_i32, %c0_i32_0 : i32, i32
  }
  func.func @transform_13(%arg0: i32, %arg1: memref<5xi32, #tpu.memory_space<smem>>) -> (i32, i32) {
    %c0_i32 = arith.constant 0 : i32
    %c0_i32_0 = arith.constant 0 : i32
    %c0_i32_1 = arith.constant 0 : i32
    return %c0_i32, %c0_i32_0 : i32, i32
  }
  func.func @transform_14(%arg0: i32, %arg1: memref<5xi32, #tpu.memory_space<smem>>) -> (i32, i32) {
    %c0_i32 = arith.constant 0 : i32
    %c0_i32_0 = arith.constant 0 : i32
    %c0_i32_1 = arith.constant 0 : i32
    return %c0_i32, %c0_i32_0 : i32, i32
  }
  func.func @transform_15(%arg0: i32, %arg1: memref<5xi32, #tpu.memory_space<smem>>) -> (i32, i32, i32, i32) {
    %c0_i32 = arith.constant 0 : i32
    %c0_i32_0 = arith.constant 0 : i32
    %c0_i32_1 = arith.constant 0 : i32
    %c0_i32_2 = arith.constant 0 : i32
    return %arg0, %c0_i32, %c0_i32_0, %c0_i32_1 : i32, i32, i32, i32
  }
}

</mosaic_0001>

<llo_original>
// kernel: transreid_forward.2
$region0: #{transreid_forward.2}
  #allocation0 [shape = 'u32[]', space=smem, size = 0x4, offset = 0x4, fixed_abs, tag = 'smem constant byte address 0x4 - core index']
  #allocation1 [shape = 'u32[144,128]{1,0:T(1,128)}', space=vmem, size = 0x12000, scoped, tag = 'internal scratch']
  #allocation2 [shape = 's32[1]{0}', space=sflag, size = 0x4, scoped, tag = 'scoped memory for transreid_forward.2']
  #allocation3 [shape = 's32[1]{0:T(128)S(6)}', space=smem, size = 0x200, scoped, tag = 'prefetched SMEM operand 0']
  %s0 = inlined_call_operand.<no memory space> [shape: s32[1], index: 0, kind: input, shape index: {}]
  %s1 = inlined_call_operand.vmem [shape: f32[1,2,24,32], index: 1, kind: input, shape index: {}]
  %s2 = inlined_call_operand.vmem [shape: f32[1,32], index: 2, kind: input, shape index: {}]
  %s3 = inlined_call_operand.vmem [shape: f32[1,32], index: 3, kind: input, shape index: {}]
  %s4 = inlined_call_operand.vmem [shape: bf16[32,96], index: 4, kind: input, shape index: {}]
  %s5 = inlined_call_operand.vmem [shape: f32[1,96], index: 5, kind: input, shape index: {}]
  %s6 = inlined_call_operand.vmem [shape: bf16[32,32], index: 6, kind: input, shape index: {}]
  %s7 = inlined_call_operand.vmem [shape: f32[1,32], index: 7, kind: input, shape index: {}]
  %s8 = inlined_call_operand.vmem [shape: f32[1,32], index: 8, kind: input, shape index: {}]
  %s9 = inlined_call_operand.vmem [shape: f32[1,32], index: 9, kind: input, shape index: {}]
  %s10 = inlined_call_operand.vmem [shape: bf16[32,128], index: 10, kind: input, shape index: {}]
  %s11 = inlined_call_operand.vmem [shape: f32[1,128], index: 11, kind: input, shape index: {}]
  %s12 = inlined_call_operand.vmem [shape: bf16[128,32], index: 12, kind: input, shape index: {}]
  %s13 = inlined_call_operand.vmem [shape: f32[1,32], index: 13, kind: input, shape index: {}]
  %s14 = inlined_call_operand.vmem [shape: f32[1,32], index: 14, kind: input, shape index: {}]
  %s15 = inlined_call_operand.vmem [shape: f32[1,32], index: 15, kind: input, shape index: {}]
  %s16 = inlined_call_operand.vmem [shape: f32[1,2,24,32], index: 16, kind: output, shape index: {}]
  %s17 = sld [smem:[#allocation0]]
  $region70: #{transreid_forward.2} parent=0
    _
  %s19 = ssub.s32 1, %s17
  %s20 = scalar_select 0, %s19, %s17
  %21 = sst [smem:[#allocation3]] %s0
  // Predicated region
  $region2: #{transreid_forward.2} parent=0 // pred_check
    _
  $region3: #{transreid_forward.2} parent=0 // pred_check_branch
    %23 = sbr.rel (0) target = $region5
  $region4: #{transreid_forward.2} parent=0 // pred_region
    _
  $region5: #{transreid_forward.2} parent=0 // pred_fallthru
    _
  // Predicated region
  $region6: #{transreid_forward.2} parent=0 // pred_check
    _
  $region7: #{transreid_forward.2} parent=0 // pred_check_branch
    %25 = sbr.rel (0) target = $region9
  $region8: #{transreid_forward.2} parent=0 // pred_region
    _
  $region9: #{transreid_forward.2} parent=0 // pred_fallthru
    _
  // Predicated region
  $region10: #{transreid_forward.2} parent=0 // pred_check
    _
  $region11: #{transreid_forward.2} parent=0 // pred_check_branch
    %27 = sbr.rel (0) target = $region13
  $region12: #{transreid_forward.2} parent=0 // pred_region
    _
  $region13: #{transreid_forward.2} parent=0 // pred_fallthru
    _
  // Predicated region
  $region14: #{transreid_forward.2} parent=0 // pred_check
    _
  $region15: #{transreid_forward.2} parent=0 // pred_check_branch
    %29 = sbr.rel (0) target = $region17
  $region16: #{transreid_forward.2} parent=0 // pred_region
    _
  $region17: #{transreid_forward.2} parent=0 // pred_fallthru
    _
  // Predicated region
  $region18: #{transreid_forward.2} parent=0 // pred_check
    _
  $region19: #{transreid_forward.2} parent=0 // pred_check_branch
    %31 = sbr.rel (0) target = $region21
  $region20: #{transreid_forward.2} parent=0 // pred_region
    _
  $region21: #{transreid_forward.2} parent=0 // pred_fallthru
    _
  // Predicated region
  $region22: #{transreid_forward.2} parent=0 // pred_check
    _
  $region23: #{transreid_forward.2} parent=0 // pred_check_branch
    %33 = sbr.rel (0) target = $region25
  $region24: #{transreid_forward.2} parent=0 // pred_region
    _
  $region25: #{transreid_forward.2} parent=0 // pred_fallthru
    _
  // Predicated region
  $region26: #{transreid_forward.2} parent=0 // pred_check
    _
  $region27: #{transreid_forward.2} parent=0 // pred_check_branch
    %35 = sbr.rel (0) target = $region29
  $region28: #{transreid_forward.2} parent=0 // pred_region
    _
  $region29: #{transreid_forward.2} parent=0 // pred_fallthru
    _
  // Predicated region
  $region30: #{transreid_forward.2} parent=0 // pred_check
    _
  $region31: #{transreid_forward.2} parent=0 // pred_check_branch
    %37 = sbr.rel (0) target = $region33
  $region32: #{transreid_forward.2} parent=0 // pred_region
    _
  $region33: #{transreid_forward.2} parent=0 // pred_fallthru
    _
  // Predicated region
  $region34: #{transreid_forward.2} parent=0 // pred_check
    _
  $region35: #{transreid_forward.2} parent=0 // pred_check_branch
    %39 = sbr.rel (0) target = $region37
  $region36: #{transreid_forward.2} parent=0 // pred_region
    _
  $region37: #{transreid_forward.2} parent=0 // pred_fallthru
    _
  // Predicated region
  $region38: #{transreid_forward.2} parent=0 // pred_check
    _
  $region39: #{transreid_forward.2} parent=0 // pred_check_branch
    %41 = sbr.rel (0) target = $region41
  $region40: #{transreid_forward.2} parent=0 // pred_region
    _
  $region41: #{transreid_forward.2} parent=0 // pred_fallthru
    _
  // Predicated region
  $region42: #{transreid_forward.2} parent=0 // pred_check
    _
  $region43: #{transreid_forward.2} parent=0 // pred_check_branch
    %43 = sbr.rel (0) target = $region45
  $region44: #{transreid_forward.2} parent=0 // pred_region
    _
  $region45: #{transreid_forward.2} parent=0 // pred_fallthru
    _
  // Predicated region
  $region46: #{transreid_forward.2} parent=0 // pred_check
    _
  $region47: #{transreid_forward.2} parent=0 // pred_check_branch
    %45 = sbr.rel (0) target = $region49
  $region48: #{transreid_forward.2} parent=0 // pred_region
    _
  $region49: #{transreid_forward.2} parent=0 // pred_fallthru
    _
  // Predicated region
  $region50: #{transreid_forward.2} parent=0 // pred_check
    _
  $region51: #{transreid_forward.2} parent=0 // pred_check_branch
    %47 = sbr.rel (0) target = $region53
  $region52: #{transreid_forward.2} parent=0 // pred_region
    _
  $region53: #{transreid_forward.2} parent=0 // pred_fallthru
    _
  // Predicated region
  $region54: #{transreid_forward.2} parent=0 // pred_check
    _
  $region55: #{transreid_forward.2} parent=0 // pred_check_branch
    %49 = sbr.rel (0) target = $region57
  $region56: #{transreid_forward.2} parent=0 // pred_region
    _
  $region57: #{transreid_forward.2} parent=0 // pred_fallthru
    _
  // Predicated region
  $region58: #{transreid_forward.2} parent=0 // pred_check
    _
  $region59: #{transreid_forward.2} parent=0 // pred_check_branch
    %51 = sbr.rel (0) target = $region61
  $region60: #{transreid_forward.2} parent=0 // pred_region
    _
  $region61: #{transreid_forward.2} parent=0 // pred_fallthru
    _
  %s53 = sld [smem:[#allocation3]]
  %v54 = vld [vmem:[%s1] sm:$0xff]
  %v55 = vld [vmem:[%s1 + $0x8] sm:$0xff]
  %v56 = vld [vmem:[%s1 + $0x10] sm:$0xff]
  %v57 = vld [vmem:[%s1 + $0x18] sm:$0xff]
  %v58 = vld [vmem:[%s1 + $0x20] sm:$0xff]
  %v59 = vld [vmem:[%s1 + $0x28] sm:$0xff]
  %v60 = vlaneseq
  %v61 = vand.u32 %v60, 127
  %v62 = vstv %s53
  %vm63 = vcmp.lt.s32.totalorder %v61, %v62
  %v64 = vsel %vm63, 0.0, -1e+30
  %vm65 = vcmask 261120
  %v66 = vsel %vm65, %v54, 0.0
  %67 = vadd.xlane.f32.xlu0 %v66
  %v68 = vpop.xlane.xlu0 %67
  %v69 = vsel %vm65, %v55, 0.0
  %70 = vadd.xlane.f32.xlu0 %v69
  %v71 = vpop.xlane.xlu0 %70
  %v72 = vsel %vm65, %v56, 0.0
  %73 = vadd.xlane.f32.xlu0 %v72
  %v74 = vpop.xlane.xlu0 %73
  %v75 = vsel %vm65, %v57, 0.0
  %76 = vadd.xlane.f32.xlu0 %v75
  %v77 = vpop.xlane.xlu0 %76
  %v78 = vsel %vm65, %v58, 0.0
  %79 = vadd.xlane.f32.xlu0 %v78
  %v80 = vpop.xlane.xlu0 %79
  %v81 = vsel %vm65, %v59, 0.0
  %82 = vadd.xlane.f32.xlu0 %v81
  %v83 = vpop.xlane.xlu0 %82
  %v84 = vrcp.pop 32.0
  %v85 = vmul.f32 %v68, %v84
  %v86 = vmul.f32 %v71, %v84
  %v87 = vmul.f32 %v74, %v84
  %v88 = vmul.f32 %v77, %v84
  %v89 = vmul.f32 %v80, %v84
  %v90 = vmul.f32 %v83, %v84
  %v91 = vsub.f32 %v54, %v85
  %v92 = vsub.f32 %v55, %v86
  %v93 = vsub.f32 %v56, %v87
  %v94 = vsub.f32 %v57, %v88
  %v95 = vsub.f32 %v58, %v89
  %v96 = vsub.f32 %v59, %v90
  %v97 = vmul.f32 %v91, %v91
  %v98 = vmul.f32 %v92, %v92
  %v99 = vmul.f32 %v93, %v93
  %v100 = vmul.f32 %v94, %v94
  %v101 = vmul.f32 %v95, %v95
  %v102 = vmul.f32 %v96, %v96
  %v103 = vsel %vm65, %v97, 0.0
  %104 = vadd.xlane.f32.xlu0 %v103
  %v105 = vpop.xlane.xlu0 %104
  %v106 = vsel %vm65, %v98, 0.0
  %107 = vadd.xlane.f32.xlu0 %v106
  %v108 = vpop.xlane.xlu0 %107
  %v109 = vsel %vm65, %v99, 0.0
  %110 = vadd.xlane.f32.xlu0 %v109
  %v111 = vpop.xlane.xlu0 %110
  %v112 = vsel %vm65, %v100, 0.0
  %113 = vadd.xlane.f32.xlu0 %v112
  %v114 = vpop.xlane.xlu0 %113
  %v115 = vsel %vm65, %v101, 0.0
  %116 = vadd.xlane.f32.xlu0 %v115
  %v117 = vpop.xlane.xlu0 %116
  %v118 = vsel %vm65, %v102, 0.0
  %119 = vadd.xlane.f32.xlu0 %v118
  %v120 = vpop.xlane.xlu0 %119
  %v121 = vmul.f32 %v105, %v84
  %v122 = vmul.f32 %v108, %v84
  %v123 = vmul.f32 %v111, %v84
  %v124 = vmul.f32 %v114, %v84
  %v125 = vmul.f32 %v117, %v84
  %v126 = vmul.f32 %v120, %v84
  %v127 = vadd.f32 %v121, 1e-06
  %v128 = vadd.f32 %v122, 1e-06
  %v129 = vadd.f32 %v123, 1e-06
  %v130 = vadd.f32 %v124, 1e-06
  %v131 = vadd.f32 %v125, 1e-06
  %v132 = vadd.f32 %v126, 1e-06
  %v133 = vrsqrt.pop %v127
  %v134 = vrsqrt.pop %v128
  %v135 = vrsqrt.pop %v129
  %v136 = vrsqrt.pop %v130
  %v137 = vrsqrt.pop %v131
  %v138 = vrsqrt.pop %v132
  %v139 = vmul.f32 %v91, %v133
  %v140 = vmul.f32 %v92, %v134
  %v141 = vmul.f32 %v93, %v135
  %v142 = vmul.f32 %v94, %v136
  %v143 = vmul.f32 %v95, %v137
  %v144 = vmul.f32 %v96, %v138
  %v145 = vld [vmem:[%s2] sm:$0x1]
  %v147 = vlaneseq
  %v148 = vshrl.u32 %v147, 7
  %v149 = vsub.s32 0, %v148
  %v150 = vrot.slane %v145, %v149
  %v152 = vmul.f32 %v139, %v150
  %v153 = vmul.f32 %v140, %v150
  %v154 = vmul.f32 %v141, %v150
  %v155 = vmul.f32 %v142, %v150
  %v156 = vmul.f32 %v143, %v150
  %v157 = vmul.f32 %v144, %v150
  %v158 = vld [vmem:[%s3] sm:$0x1]
  %v160 = vlaneseq
  %v161 = vshrl.u32 %v160, 7
  %v162 = vsub.s32 0, %v161
  %v163 = vrot.slane %v158, %v162
  %v165 = vadd.f32 %v152, %v163
  %v166 = vadd.f32 %v153, %v163
  %v167 = vadd.f32 %v154, %v163
  %v168 = vadd.f32 %v155, %v163
  %v169 = vadd.f32 %v156, %v163
  %v170 = vadd.f32 %v157, %v163
  %v171 = vpack.c.bf16 %v166, %v165
  %v172 = vpack.c.bf16 %v168, %v167
  %v173 = vpack.c.bf16 %v170, %v169
  %v174 = vld [vmem:[%s4] sm:$0xf]
  %v175 = vld [vmem:[%s4 + $0x4] sm:$0xf]
  %v176 = vld [vmem:[%s4 + $0x8] sm:$0xf]
  %v177 = vld [vmem:[%s4 + $0xc] sm:$0xf]
  %v178 = vld [vmem:[%s5] sm:$0x1]
  %v180 = vlaneseq
  %v181 = vshrl.u32 %v180, 7
  %v182 = vsub.s32 0, %v181
  %v183 = vrot.slane %v178, %v182
  %v189 = vunpack.c.l.b16 %v174
  %v190 = vunpack.c.l.b16 %v175
  %v191 = vunpack.c.l.b16 %v176
  %v192 = vunpack.c.l.b16 %v177
  %v193 = vpack.c.b16 %v190, %v189
  %v194 = vpack.c.b16 %v192, %v191
  %v198 = vsel %vm65, %v171, 0
  %v201 = vsel %vm65, %v172, 0
  %v204 = vsel %vm65, %v173, 0
  %206 = vmatprep.subr.bf16.mxu0 0
  %207 = vmatpush1.bf16.msra.mxu0 %v193
  %208 = vmatprep.subr.bf16.mxu0 0
  %209 = vmatpush1.bf16.msra.mxu0 %v194
  %210 = vmatprep.subr.bf16.mxu0 0
  %211 = vmatpush1.bf16.msra.mxu0 0
  %212 = vmatprep.subr.bf16.mxu0 0
  %213 = vmatpush1.bf16.msra.mxu0 0
  %214 = vmatprep.subr.bf16.mxu0 0
  %215 = vmatpush1.bf16.msra.mxu0 0
  %216 = vmatprep.subr.bf16.mxu0 0
  %217 = vmatpush1.bf16.msra.mxu0 0
  %218 = vmatprep.subr.bf16.mxu0 0
  %219 = vmatpush1.bf16.msra.mxu0 0
  %220 = vmatprep.subr.bf16.mxu0 0
  %221 = vmatpush1.bf16.msra.mxu0 0
  %222 = vmatprep.subr.bf16.mxu0 0
  %223 = vmatpush1.bf16.msra.mxu0 0
  %224 = vmatprep.subr.bf16.mxu0 0
  %225 = vmatpush1.bf16.msra.mxu0 0
  %226 = vmatprep.subr.bf16.mxu0 0
  %227 = vmatpush1.bf16.msra.mxu0 0
  %228 = vmatprep.subr.bf16.mxu0 0
  %229 = vmatpush1.bf16.msra.mxu0 0
  %230 = vmatprep.subr.bf16.mxu0 0
  %231 = vmatpush1.bf16.msra.mxu0 0
  %232 = vmatprep.subr.bf16.mxu0 0
  %233 = vmatpush1.bf16.msra.mxu0 0
  %234 = vmatprep.subr.bf16.mxu0 0
  %235 = vmatpush1.bf16.msra.mxu0 0
  %236 = vmatprep.subr.bf16.mxu0 0
  %237 = vmatpush1.bf16.msra.mxu0 0
  %238 = vmatprep.mubr.bf16.mxu0 0
  %239 = vmatmul.mubr.bf16.gmra.mrb[0].mxu0 %v198
  %v240 = vpop.f32.mrb[0].mxu0
  %v241 = vadd.f32 %v183, %v240
  %v242 = vpop.f32.mrb[0].mxu0
  %v243 = vpop.f32.mrb[0].mxu0
  %v244 = vadd.f32 %v183, %v243
  %v245 = vpop.f32.mrb[0].mxu0
  %246 = vmatprep.mubr.bf16.mxu0 0
  %247 = vmatmul.mubr.bf16.gmra.mrb[0].mxu0 %v201
  %v248 = vpop.f32.mrb[0].mxu0
  %v249 = vadd.f32 %v183, %v248
  %v250 = vpop.f32.mrb[0].mxu0
  %v251 = vpop.f32.mrb[0].mxu0
  %v252 = vadd.f32 %v183, %v251
  %v253 = vpop.f32.mrb[0].mxu0
  %254 = vmatprep.mubr.bf16.mxu0 0
  %255 = vmatmul.mubr.bf16.gmra.mrb[0].mxu0 %v204
  %v256 = vpop.f32.mrb[0].mxu0
  %v257 = vadd.f32 %v183, %v256
  %v258 = vpop.f32.mrb[0].mxu0
  %v259 = vpop.f32.mrb[0].mxu0
  %v260 = vadd.f32 %v183, %v259
  %v261 = vpop.f32.mrb[0].mxu0
  %262 = vdwg.mxu0
  %v263 = vmul.f32 %v241, 0.35355338
  %v264 = vmul.f32 %v244, 0.35355338
  %v265 = vmul.f32 %v249, 0.35355338
  %v266 = vmul.f32 %v252, 0.35355338
  %v267 = vmul.f32 %v257, 0.35355338
  %v268 = vmul.f32 %v260, 0.35355338
  %v269 = vld [vmem:[%s6] sm:$0xf]
  %v270 = vld [vmem:[%s6 + $0x4] sm:$0xf]
  %v271 = vld [vmem:[%s6 + $0x8] sm:$0xf]
  %v272 = vld [vmem:[%s6 + $0xc] sm:$0xf]
  %v273 = vpack.c.bf16 %v264, %v263
  %v274 = vpack.c.bf16 %v265, %v265
  %v275 = vpack.c.bf16 %v267, %v266
  %v276 = vpack.c.bf16 %v268, %v268
  %v277 = vpack.c.bf16 %v244, %v241
  %v278 = vpack.c.bf16 %v249, %v249
  %v279 = vpack.c.bf16 %v257, %v252
  %v280 = vpack.c.bf16 %v260, %v260
  %283 = vrot.lane.b32.xlu0 %v277, 96
  %v284 = vpop.permute.xlu0 %283
  %285 = vrot.lane.b32.xlu0 %v278, 96
  %v286 = vpop.permute.xlu0 %285
  %vm287 = vcmask 64512
  %v289 = vsel %vm287, %v273, 0
  %v292 = vsel %vm287, %v274, 0
  %v295 = vsel %vm287, %v284, 0
  %v298 = vsel %vm287, %v286, 0
  %300 = vmatprep.subr.bf16.mxu0 0
  %301 = vmatpush1.bf16.xpose.msra.mxu0 %v295
  %302 = vmatprep.subr.bf16.mxu0 0
  %303 = vmatpush1.bf16.xpose.msra.mxu0 %v298
  %304 = vmatprep.subr.bf16.mxu0 0
  %305 = vmatpush1.bf16.xpose.msra.mxu0 0
  %306 = vmatprep.subr.bf16.mxu0 0
  %307 = vmatpush1.bf16.xpose.msra.mxu0 0
  %308 = vmatprep.subr.bf16.mxu0 0
  %309 = vmatpush1.bf16.xpose.msra.mxu0 0
  %310 = vmatprep.subr.bf16.mxu0 0
  %311 = vmatpush1.bf16.xpose.msra.mxu0 0
  %312 = vmatprep.subr.bf16.mxu0 0
  %313 = vmatpush1.bf16.xpose.msra.mxu0 0
  %314 = vmatprep.subr.bf16.mxu0 0
  %315 = vmatpush1.bf16.xpose.msra.mxu0 0
  %316 = vmatprep.subr.bf16.mxu0 0
  %317 = vmatpush1.bf16.xpose.msra.mxu0 0
  %318 = vmatprep.subr.bf16.mxu0 0
  %319 = vmatpush1.bf16.xpose.msra.mxu0 0
  %320 = vmatprep.subr.bf16.mxu0 0
  %321 = vmatpush1.bf16.xpose.msra.mxu0 0
  %322 = vmatprep.subr.bf16.mxu0 0
  %323 = vmatpush1.bf16.xpose.msra.mxu0 0
  %324 = vmatprep.subr.bf16.mxu0 0
  %325 = vmatpush1.bf16.xpose.msra.mxu0 0
  %326 = vmatprep.subr.bf16.mxu0 0
  %327 = vmatpush1.bf16.xpose.msra.mxu0 0
  %328 = vmatprep.subr.bf16.mxu0 0
  %329 = vmatpush1.bf16.xpose.msra.mxu0 0
  %330 = vmatprep.subr.bf16.mxu0 0
  %331 = vmatpush1.bf16.xpose.msra.mxu0 0
  %332 = vmatprep.mubr.bf16.mxu0 0
  %333 = vmatmul.mubr.bf16.gmra.mrb[0].mxu0 %v289
  %v334 = vpop.f32.mrb[0].mxu0
  %v335 = vadd.f32 %v64, %v334
  %v336 = vpop.f32.mrb[0].mxu0
  %v337 = vpop.f32.mrb[0].mxu0
  %v338 = vadd.f32 %v64, %v337
  %v339 = vpop.f32.mrb[0].mxu0
  %340 = vmatprep.mubr.bf16.mxu0 0
  %341 = vmatmul.mubr.bf16.gmra.mrb[0].mxu0 %v292
  %v342 = vpop.f32.mrb[0].mxu0
  %v343 = vadd.f32 %v64, %v342
  %v344 = vpop.f32.mrb[0].mxu0
  %v345 = vpop.f32.mrb[0].mxu0
  %v346 = vpop.f32.mrb[0].mxu0
  %347 = vdwg.mxu0
  %350 = vrot.lane.b32.xlu0 %v279, 96
  %v351 = vpop.permute.xlu0 %350
  %352 = vrot.lane.b32.xlu0 %v280, 96
  %v353 = vpop.permute.xlu0 %352
  %v355 = vsel %vm287, %v275, 0
  %v358 = vsel %vm287, %v276, 0
  %v361 = vsel %vm287, %v351, 0
  %v364 = vsel %vm287, %v353, 0
  %366 = vmatprep.subr.bf16.mxu0 0
  %367 = vmatpush1.bf16.xpose.msra.mxu0 %v361
  %368 = vmatprep.subr.bf16.mxu0 0
  %369 = vmatpush1.bf16.xpose.msra.mxu0 %v364
  %370 = vmatprep.subr.bf16.mxu0 0
  %371 = vmatpush1.bf16.xpose.msra.mxu0 0
  %372 = vmatprep.subr.bf16.mxu0 0
  %373 = vmatpush1.bf16.xpose.msra.mxu0 0
  %374 = vmatprep.subr.bf16.mxu0 0
  %375 = vmatpush1.bf16.xpose.msra.mxu0 0
  %376 = vmatprep.subr.bf16.mxu0 0
  %377 = vmatpush1.bf16.xpose.msra.mxu0 0
  %378 = vmatprep.subr.bf16.mxu0 0
  %379 = vmatpush1.bf16.xpose.msra.mxu0 0
  %380 = vmatprep.subr.bf16.mxu0 0
  %381 = vmatpush1.bf16.xpose.msra.mxu0 0
  %382 = vmatprep.subr.bf16.mxu0 0
  %383 = vmatpush1.bf16.xpose.msra.mxu0 0
  %384 = vmatprep.subr.bf16.mxu0 0
  %385 = vmatpush1.bf16.xpose.msra.mxu0 0
  %386 = vmatprep.subr.bf16.mxu0 0
  %387 = vmatpush1.bf16.xpose.msra.mxu0 0
  %388 = vmatprep.subr.bf16.mxu0 0
  %389 = vmatpush1.bf16.xpose.msra.mxu0 0
  %390 = vmatprep.subr.bf16.mxu0 0
  %391 = vmatpush1.bf16.xpose.msra.mxu0 0
  %392 = vmatprep.subr.bf16.mxu0 0
  %393 = vmatpush1.bf16.xpose.msra.mxu0 0
  %394 = vmatprep.subr.bf16.mxu0 0
  %395 = vmatpush1.bf16.xpose.msra.mxu0 0
  %396 = vmatprep.subr.bf16.mxu0 0
  %397 = vmatpush1.bf16.xpose.msra.mxu0 0
  %398 = vmatprep.mubr.bf16.mxu0 0
  %399 = vmatmul.mubr.bf16.gmra.mrb[0].mxu0 %v355
  %v400 = vpop.f32.mrb[0].mxu0
  %v401 = vadd.f32 %v64, %v400
  %v402 = vpop.f32.mrb[0].mxu0
  %v403 = vpop.f32.mrb[0].mxu0
  %v404 = vadd.f32 %v64, %v403
  %v405 = vpop.f32.mrb[0].mxu0
  %406 = vmatprep.mubr.bf16.mxu0 0
  %407 = vmatmul.mubr.bf16.gmra.mrb[0].mxu0 %v358
  %v408 = vpop.f32.mrb[0].mxu0
  %v409 = vadd.f32 %v64, %v408
  %v410 = vpop.f32.mrb[0].mxu0
  %v411 = vpop.f32.mrb[0].mxu0
  %v412 = vpop.f32.mrb[0].mxu0
  %413 = vdwg.mxu0
  %vm414 = vcmask 195584
  %v415 = vsel %vm414, %v335, -inf
  %416 = vmax.xlane.f32.xlu0 %v415
  %v417 = vpop.xlane.xlu0 %416
  %v418 = vsel %vm414, %v338, -inf
  %419 = vmax.xlane.f32.xlu0 %v418
  %v420 = vpop.xlane.xlu0 %419
  %v421 = vsel %vm414, %v343, -inf
  %422 = vmax.xlane.f32.xlu0 %v421
  %v423 = vpop.xlane.xlu0 %422
  %v424 = vsel %vm414, %v401, -inf
  %425 = vmax.xlane.f32.xlu0 %v424
  %v426 = vpop.xlane.xlu0 %425
  %v427 = vsel %vm414, %v404, -inf
  %428 = vmax.xlane.f32.xlu0 %v427
  %v429 = vpop.xlane.xlu0 %428
  %v430 = vsel %vm414, %v409, -inf
  %431 = vmax.xlane.f32.xlu0 %v430
  %v432 = vpop.xlane.xlu0 %431
  %v433 = vsub.f32 %v335, %v417
  %v434 = vsub.f32 %v338, %v420
  %v435 = vsub.f32 %v343, %v423
  %v436 = vsub.f32 %v401, %v426
  %v437 = vsub.f32 %v404, %v429
  %v438 = vsub.f32 %v409, %v432
  %v439 = vmul.f32 %v433, 1.442695
  %v440 = vpow.pop %v439
  %v441 = vmul.f32 %v434, 1.442695
  %v442 = vpow.pop %v441
  %v443 = vmul.f32 %v435, 1.442695
  %v444 = vpow.pop %v443
  %v445 = vmul.f32 %v436, 1.442695
  %v446 = vpow.pop %v445
  %v447 = vmul.f32 %v437, 1.442695
  %v448 = vpow.pop %v447
  %v449 = vmul.f32 %v438, 1.442695
  %v450 = vpow.pop %v449
  %v451 = vsel %vm414, %v440, 0.0
  %452 = vadd.xlane.f32.xlu0 %v451
  %v453 = vpop.xlane.xlu0 %452
  %v454 = vsel %vm414, %v442, 0.0
  %455 = vadd.xlane.f32.xlu0 %v454
  %v456 = vpop.xlane.xlu0 %455
  %v457 = vsel %vm414, %v444, 0.0
  %458 = vadd.xlane.f32.xlu0 %v457
  %v459 = vpop.xlane.xlu0 %458
  %v460 = vsel %vm414, %v446, 0.0
  %461 = vadd.xlane.f32.xlu0 %v460
  %v462 = vpop.xlane.xlu0 %461
  %v463 = vsel %vm414, %v448, 0.0
  %464 = vadd.xlane.f32.xlu0 %v463
  %v465 = vpop.xlane.xlu0 %464
  %v466 = vsel %vm414, %v450, 0.0
  %467 = vadd.xlane.f32.xlu0 %v466
  %v468 = vpop.xlane.xlu0 %467
  %v469 = vrcp.pop %v453
  %v470 = vrcp.pop %v456
  %v471 = vrcp.pop %v459
  %v472 = vrcp.pop %v462
  %v473 = vrcp.pop %v465
  %v474 = vrcp.pop %v468
  %v475 = vmul.f32 %v440, %v469
  %v476 = vmul.f32 %v442, %v470
  %v477 = vmul.f32 %v444, %v471
  %v478 = vmul.f32 %v446, %v472
  %v479 = vmul.f32 %v448, %v473
  %v480 = vmul.f32 %v450, %v474
  %v481 = vpack.c.bf16 %v476, %v475
  %v482 = vpack.c.bf16 %v477, %v477
  %v483 = vpack.c.bf16 %v479, %v478
  %v484 = vpack.c.bf16 %v480, %v480
  %485 = vrot.lane.b32.xlu0 %v277, 64
  %v486 = vpop.permute.xlu0 %485
  %487 = vrot.lane.b32.xlu0 %v278, 64
  %v488 = vpop.permute.xlu0 %487
  %v491 = vsel %vm414, %v481, 0
  %v494 = vsel %vm414, %v482, 0
  %vm496 = vcmask 1043456
  %v498 = vsel %vm496, %v488, 0
  %500 = vmatprep.subr.bf16.mxu0 0
  %501 = vmatpush1.bf16.msra.mxu0 %v486
  %502 = vmatprep.subr.bf16.mxu0 0
  %503 = vmatpush1.bf16.msra.mxu0 %v498
  %504 = vmatprep.subr.bf16.mxu0 0
  %505 = vmatpush1.bf16.msra.mxu0 0
  %506 = vmatprep.subr.bf16.mxu0 0
  %507 = vmatpush1.bf16.msra.mxu0 0
  %508 = vmatprep.subr.bf16.mxu0 0
  %509 = vmatpush1.bf16.msra.mxu0 0
  %510 = vmatprep.subr.bf16.mxu0 0
  %511 = vmatpush1.bf16.msra.mxu0 0
  %512 = vmatprep.subr.bf16.mxu0 0
  %513 = vmatpush1.bf16.msra.mxu0 0
  %514 = vmatprep.subr.bf16.mxu0 0
  %515 = vmatpush1.bf16.msra.mxu0 0
  %516 = vmatprep.subr.bf16.mxu0 0
  %517 = vmatpush1.bf16.msra.mxu0 0
  %518 = vmatprep.subr.bf16.mxu0 0
  %519 = vmatpush1.bf16.msra.mxu0 0
  %520 = vmatprep.subr.bf16.mxu0 0
  %521 = vmatpush1.bf16.msra.mxu0 0
  %522 = vmatprep.subr.bf16.mxu0 0
  %523 = vmatpush1.bf16.msra.mxu0 0
  %524 = vmatprep.subr.bf16.mxu0 0
  %525 = vmatpush1.bf16.msra.mxu0 0
  %526 = vmatprep.subr.bf16.mxu0 0
  %527 = vmatpush1.bf16.msra.mxu0 0
  %528 = vmatprep.subr.bf16.mxu0 0
  %529 = vmatpush1.bf16.msra.mxu0 0
  %530 = vmatprep.subr.bf16.mxu0 0
  %531 = vmatpush1.bf16.msra.mxu0 0
  %532 = vmatprep.mubr.bf16.mxu0 0
  %533 = vmatmul.mubr.bf16.gmra.mrb[0].mxu0 %v491
  %v534 = vpop.f32.mrb[0].mxu0
  %v535 = vadd.f32 0.0, %v534
  %v536 = vpop.f32.mrb[0].mxu0
  %v537 = vpop.f32.mrb[0].mxu0
  %v538 = vadd.f32 0.0, %v537
  %v539 = vpop.f32.mrb[0].mxu0
  %540 = vmatprep.mubr.bf16.mxu0 0
  %541 = vmatmul.mubr.bf16.gmra.mrb[0].mxu0 %v494
  %v542 = vpop.f32.mrb[0].mxu0
  %v543 = vadd.f32 0.0, %v542
  %v544 = vpop.f32.mrb[0].mxu0
  %v545 = vpop.f32.mrb[0].mxu0
  %v546 = vpop.f32.mrb[0].mxu0
  %547 = vdwg.mxu0
  %548 = vrot.lane.b32.xlu0 %v279, 64
  %v549 = vpop.permute.xlu0 %548
  %550 = vrot.lane.b32.xlu0 %v280, 64
  %v551 = vpop.permute.xlu0 %550
  %v554 = vsel %vm414, %v483, 0
  %v557 = vsel %vm414, %v484, 0
  %v560 = vsel %vm496, %v551, 0
  %562 = vmatprep.subr.bf16.mxu0 0
  %563 = vmatpush1.bf16.msra.mxu0 %v549
  %564 = vmatprep.subr.bf16.mxu0 0
  %565 = vmatpush1.bf16.msra.mxu0 %v560
  %566 = vmatprep.subr.bf16.mxu0 0
  %567 = vmatpush1.bf16.msra.mxu0 0
  %568 = vmatprep.subr.bf16.mxu0 0
  %569 = vmatpush1.bf16.msra.mxu0 0
  %570 = vmatprep.subr.bf16.mxu0 0
  %571 = vmatpush1.bf16.msra.mxu0 0
  %572 = vmatprep.subr.bf16.mxu0 0
  %573 = vmatpush1.bf16.msra.mxu0 0
  %574 = vmatprep.subr.bf16.mxu0 0
  %575 = vmatpush1.bf16.msra.mxu0 0
  %576 = vmatprep.subr.bf16.mxu0 0
  %577 = vmatpush1.bf16.msra.mxu0 0
  %578 = vmatprep.subr.bf16.mxu0 0
  %579 = vmatpush1.bf16.msra.mxu0 0
  %580 = vmatprep.subr.bf16.mxu0 0
  %581 = vmatpush1.bf16.msra.mxu0 0
  %582 = vmatprep.subr.bf16.mxu0 0
  %583 = vmatpush1.bf16.msra.mxu0 0
  %584 = vmatprep.subr.bf16.mxu0 0
  %585 = vmatpush1.bf16.msra.mxu0 0
  %586 = vmatprep.subr.bf16.mxu0 0
  %587 = vmatpush1.bf16.msra.mxu0 0
  %588 = vmatprep.subr.bf16.mxu0 0
  %589 = vmatpush1.bf16.msra.mxu0 0
  %590 = vmatprep.subr.bf16.mxu0 0
  %591 = vmatpush1.bf16.msra.mxu0 0
  %592 = vmatprep.subr.bf16.mxu0 0
  %593 = vmatpush1.bf16.msra.mxu0 0
  %594 = vmatprep.mubr.bf16.mxu0 0
  %595 = vmatmul.mubr.bf16.gmra.mrb[0].mxu0 %v554
  %v596 = vpop.f32.mrb[0].mxu0
  %v597 = vadd.f32 0.0, %v596
  %v598 = vpop.f32.mrb[0].mxu0
  %v599 = vpop.f32.mrb[0].mxu0
  %v600 = vadd.f32 0.0, %v599
  %v601 = vpop.f32.mrb[0].mxu0
  %602 = vmatprep.mubr.bf16.mxu0 0
  %603 = vmatmul.mubr.bf16.gmra.mrb[0].mxu0 %v557
  %v604 = vpop.f32.mrb[0].mxu0
  %v605 = vadd.f32 0.0, %v604
  %v606 = vpop.f32.mrb[0].mxu0
  %v607 = vpop.f32.mrb[0].mxu0
  %v608 = vpop.f32.mrb[0].mxu0
  %609 = vdwg.mxu0
  %v610 = vpack.c.bf16 %v538, %v535
  %v611 = vpack.c.bf16 %v597, %v543
  %v612 = vpack.c.bf16 %v605, %v600
  %615 = vrot.lane.b32.xlu0 %v273, 120
  %v616 = vpop.permute.xlu0 %615
  %617 = vrot.lane.b32.xlu0 %v274, 120
  %v618 = vpop.permute.xlu0 %617
  %619 = vrot.lane.b32.xlu0 %v277, 88
  %v620 = vpop.permute.xlu0 %619
  %621 = vrot.lane.b32.xlu0 %v278, 88
  %v622 = vpop.permute.xlu0 %621
  %v624 = vsel %vm287, %v616, 0
  %v627 = vsel %vm287, %v618, 0
  %v630 = vsel %vm287, %v620, 0
  %v633 = vsel %vm287, %v622, 0
  %635 = vmatprep.subr.bf16.mxu0 0
  %636 = vmatpush1.bf16.xpose.msra.mxu0 %v630
  %637 = vmatprep.subr.bf16.mxu0 0
  %638 = vmatpush1.bf16.xpose.msra.mxu0 %v633
  %639 = vmatprep.subr.bf16.mxu0 0
  %640 = vmatpush1.bf16.xpose.msra.mxu0 0
  %641 = vmatprep.subr.bf16.mxu0 0
  %642 = vmatpush1.bf16.xpose.msra.mxu0 0
  %643 = vmatprep.subr.bf16.mxu0 0
  %644 = vmatpush1.bf16.xpose.msra.mxu0 0
  %645 = vmatprep.subr.bf16.mxu0 0
  %646 = vmatpush1.bf16.xpose.msra.mxu0 0
  %647 = vmatprep.subr.bf16.mxu0 0
  %648 = vmatpush1.bf16.xpose.msra.mxu0 0
  %649 = vmatprep.subr.bf16.mxu0 0
  %650 = vmatpush1.bf16.xpose.msra.mxu0 0
  %651 = vmatprep.subr.bf16.mxu0 0
  %652 = vmatpush1.bf16.xpose.msra.mxu0 0
  %653 = vmatprep.subr.bf16.mxu0 0
  %654 = vmatpush1.bf16.xpose.msra.mxu0 0
  %655 = vmatprep.subr.bf16.mxu0 0
  %656 = vmatpush1.bf16.xpose.msra.mxu0 0
  %657 = vmatprep.subr.bf16.mxu0 0
  %658 = vmatpush1.bf16.xpose.msra.mxu0 0
  %659 = vmatprep.subr.bf16.mxu0 0
  %660 = vmatpush1.bf16.xpose.msra.mxu0 0
  %661 = vmatprep.subr.bf16.mxu0 0
  %662 = vmatpush1.bf16.xpose.msra.mxu0 0
  %663 = vmatprep.subr.bf16.mxu0 0
  %664 = vmatpush1.bf16.xpose.msra.mxu0 0
  %665 = vmatprep.subr.bf16.mxu0 0
  %666 = vmatpush1.bf16.xpose.msra.mxu0 0
  %667 = vmatprep.mubr.bf16.mxu0 0
  %668 = vmatmul.mubr.bf16.gmra.mrb[0].mxu0 %v624
  %v669 = vpop.f32.mrb[0].mxu0
  %v670 = vadd.f32 %v64, %v669
  %v671 = vpop.f32.mrb[0].mxu0
  %v672 = vpop.f32.mrb[0].mxu0
  %v673 = vadd.f32 %v64, %v672
  %v674 = vpop.f32.mrb[0].mxu0
  %675 = vmatprep.mubr.bf16.mxu0 0
  %676 = vmatmul.mubr.bf16.gmra.mrb[0].mxu0 %v627
  %v677 = vpop.f32.mrb[0].mxu0
  %v678 = vadd.f32 %v64, %v677
  %v679 = vpop.f32.mrb[0].mxu0
  %v680 = vpop.f32.mrb[0].mxu0
  %v681 = vpop.f32.mrb[0].mxu0
  %682 = vdwg.mxu0
  %685 = vrot.lane.b32.xlu0 %v275, 120
  %v686 = vpop.permute.xlu0 %685
  %687 = vrot.lane.b32.xlu0 %v276, 120
  %v688 = vpop.permute.xlu0 %687
  %689 = vrot.lane.b32.xlu0 %v279, 88
  %v690 = vpop.permute.xlu0 %689
  %691 = vrot.lane.b32.xlu0 %v280, 88
  %v692 = vpop.permute.xlu0 %691
  %v694 = vsel %vm287, %v686, 0
  %v697 = vsel %vm287, %v688, 0
  %v700 = vsel %vm287, %v690, 0
  %v703 = vsel %vm287, %v692, 0
  %705 = vmatprep.subr.bf16.mxu0 0
  %706 = vmatpush1.bf16.xpose.msra.mxu0 %v700
  %707 = vmatprep.subr.bf16.mxu0 0
  %708 = vmatpush1.bf16.xpose.msra.mxu0 %v703
  %709 = vmatprep.subr.bf16.mxu0 0
  %710 = vmatpush1.bf16.xpose.msra.mxu0 0
  %711 = vmatprep.subr.bf16.mxu0 0
  %712 = vmatpush1.bf16.xpose.msra.mxu0 0
  %713 = vmatprep.subr.bf16.mxu0 0
  %714 = vmatpush1.bf16.xpose.msra.mxu0 0
  %715 = vmatprep.subr.bf16.mxu0 0
  %716 = vmatpush1.bf16.xpose.msra.mxu0 0
  %717 = vmatprep.subr.bf16.mxu0 0
  %718 = vmatpush1.bf16.xpose.msra.mxu0 0
  %719 = vmatprep.subr.bf16.mxu0 0
  %720 = vmatpush1.bf16.xpose.msra.mxu0 0
  %721 = vmatprep.subr.bf16.mxu0 0
  %722 = vmatpush1.bf16.xpose.msra.mxu0 0
  %723 = vmatprep.subr.bf16.mxu0 0
  %724 = vmatpush1.bf16.xpose.msra.mxu0 0
  %725 = vmatprep.subr.bf16.mxu0 0
  %726 = vmatpush1.bf16.xpose.msra.mxu0 0
  %727 = vmatprep.subr.bf16.mxu0 0
  %728 = vmatpush1.bf16.xpose.msra.mxu0 0
  %729 = vmatprep.subr.bf16.mxu0 0
  %730 = vmatpush1.bf16.xpose.msra.mxu0 0
  %731 = vmatprep.subr.bf16.mxu0 0
  %732 = vmatpush1.bf16.xpose.msra.mxu0 0
  %733 = vmatprep.subr.bf16.mxu0 0
  %734 = vmatpush1.bf16.xpose.msra.mxu0 0
  %735 = vmatprep.subr.bf16.mxu0 0
  %736 = vmatpush1.bf16.xpose.msra.mxu0 0
  %737 = vmatprep.mubr.bf16.mxu0 0
  %738 = vmatmul.mubr.bf16.gmra.mrb[0].mxu0 %v694
  %v739 = vpop.f32.mrb[0].mxu0
  %v740 = vadd.f32 %v64, %v739
  %v741 = vpop.f32.mrb[0].mxu0
  %v742 = vpop.f32.mrb[0].mxu0
  %v743 = vadd.f32 %v64, %v742
  %v744 = vpop.f32.mrb[0].mxu0
  %745 = vmatprep.mubr.bf16.mxu0 0
  %746 = vmatmul.mubr.bf16.gmra.mrb[0].mxu0 %v697
  %v747 = vpop.f32.mrb[0].mxu0
  %v748 = vadd.f32 %v64, %v747
  %v749 = vpop.f32.mrb[0].mxu0
  %v750 = vpop.f32.mrb[0].mxu0
  %v751 = vpop.f32.mrb[0].mxu0
  %752 = vdwg.mxu0
  %v753 = vsel %vm414, %v670, -inf
  %754 = vmax.xlane.f32.xlu0 %v753
  %v755 = vpop.xlane.xlu0 %754
  %v756 = vsel %vm414, %v673, -inf
  %757 = vmax.xlane.f32.xlu0 %v756
  %v758 = vpop.xlane.xlu0 %757
  %v759 = vsel %vm414, %v678, -inf
  %760 = vmax.xlane.f32.xlu0 %v759
  %v761 = vpop.xlane.xlu0 %760
  %v762 = vsel %vm414, %v740, -inf
  %763 = vmax.xlane.f32.xlu0 %v762
  %v764 = vpop.xlane.xlu0 %763
  %v765 = vsel %vm414, %v743, -inf
  %766 = vmax.xlane.f32.xlu0 %v765
  %v767 = vpop.xlane.xlu0 %766
  %v768 = vsel %vm414, %v748, -inf
  %769 = vmax.xlane.f32.xlu0 %v768
  %v770 = vpop.xlane.xlu0 %769
  %v771 = vsub.f32 %v670, %v755
  %v772 = vsub.f32 %v673, %v758
  %v773 = vsub.f32 %v678, %v761
  %v774 = vsub.f32 %v740, %v764
  %v775 = vsub.f32 %v743, %v767
  %v776 = vsub.f32 %v748, %v770
  %v777 = vmul.f32 %v771, 1.442695
  %v778 = vpow.pop %v777
  %v779 = vmul.f32 %v772, 1.442695
  %v780 = vpow.pop %v779
  %v781 = vmul.f32 %v773, 1.442695
  %v782 = vpow.pop %v781
  %v783 = vmul.f32 %v774, 1.442695
  %v784 = vpow.pop %v783
  %v785 = vmul.f32 %v775, 1.442695
  %v786 = vpow.pop %v785
  %v787 = vmul.f32 %v776, 1.442695
  %v788 = vpow.pop %v787
  %v789 = vsel %vm414, %v778, 0.0
  %790 = vadd.xlane.f32.xlu0 %v789
  %v791 = vpop.xlane.xlu0 %790
  %v792 = vsel %vm414, %v780, 0.0
  %793 = vadd.xlane.f32.xlu0 %v792
  %v794 = vpop.xlane.xlu0 %793
  %v795 = vsel %vm414, %v782, 0.0
  %796 = vadd.xlane.f32.xlu0 %v795
  %v797 = vpop.xlane.xlu0 %796
  %v798 = vsel %vm414, %v784, 0.0
  %799 = vadd.xlane.f32.xlu0 %v798
  %v800 = vpop.xlane.xlu0 %799
  %v801 = vsel %vm414, %v786, 0.0
  %802 = vadd.xlane.f32.xlu0 %v801
  %v803 = vpop.xlane.xlu0 %802
  %v804 = vsel %vm414, %v788, 0.0
  %805 = vadd.xlane.f32.xlu0 %v804
  %v806 = vpop.xlane.xlu0 %805
  %v807 = vrcp.pop %v791
  %v808 = vrcp.pop %v794
  %v809 = vrcp.pop %v797
  %v810 = vrcp.pop %v800
  %v811 = vrcp.pop %v803
  %v812 = vrcp.pop %v806
  %v813 = vmul.f32 %v778, %v807
  %v814 = vmul.f32 %v780, %v808
  %v815 = vmul.f32 %v782, %v809
  %v816 = vmul.f32 %v784, %v810
  %v817 = vmul.f32 %v786, %v811
  %v818 = vmul.f32 %v788, %v812
  %v819 = vpack.c.bf16 %v814, %v813
  %v820 = vpack.c.bf16 %v815, %v815
  %v821 = vpack.c.bf16 %v817, %v816
  %v822 = vpack.c.bf16 %v818, %v818
  %823 = vrot.lane.b32.xlu0 %v277, 56
  %v824 = vpop.permute.xlu0 %823
  %825 = vrot.lane.b32.xlu0 %v278, 56
  %v826 = vpop.permute.xlu0 %825
  %v829 = vsel %vm414, %v819, 0
  %v832 = vsel %vm414, %v820, 0
  %v835 = vsel %vm496, %v826, 0
  %837 = vmatprep.subr.bf16.mxu0 0
  %838 = vmatpush1.bf16.msra.mxu0 %v824
  %839 = vmatprep.subr.bf16.mxu0 0
  %840 = vmatpush1.bf16.msra.mxu0 %v835
  %841 = vmatprep.subr.bf16.mxu0 0
  %842 = vmatpush1.bf16.msra.mxu0 0
  %843 = vmatprep.subr.bf16.mxu0 0
  %844 = vmatpush1.bf16.msra.mxu0 0
  %845 = vmatprep.subr.bf16.mxu0 0
  %846 = vmatpush1.bf16.msra.mxu0 0
  %847 = vmatprep.subr.bf16.mxu0 0
  %848 = vmatpush1.bf16.msra.mxu0 0
  %849 = vmatprep.subr.bf16.mxu0 0
  %850 = vmatpush1.bf16.msra.mxu0 0
  %851 = vmatprep.subr.bf16.mxu0 0
  %852 = vmatpush1.bf16.msra.mxu0 0
  %853 = vmatprep.subr.bf16.mxu0 0
  %854 = vmatpush1.bf16.msra.mxu0 0
  %855 = vmatprep.subr.bf16.mxu0 0
  %856 = vmatpush1.bf16.msra.mxu0 0
  %857 = vmatprep.subr.bf16.mxu0 0
  %858 = vmatpush1.bf16.msra.mxu0 0
  %859 = vmatprep.subr.bf16.mxu0 0
  %860 = vmatpush1.bf16.msra.mxu0 0
  %861 = vmatprep.subr.bf16.mxu0 0
  %862 = vmatpush1.bf16.msra.mxu0 0
  %863 = vmatprep.subr.bf16.mxu0 0
  %864 = vmatpush1.bf16.msra.mxu0 0
  %865 = vmatprep.subr.bf16.mxu0 0
  %866 = vmatpush1.bf16.msra.mxu0 0
  %867 = vmatprep.subr.bf16.mxu0 0
  %868 = vmatpush1.bf16.msra.mxu0 0
  %869 = vmatprep.mubr.bf16.mxu0 0
  %870 = vmatmul.mubr.bf16.gmra.mrb[0].mxu0 %v829
  %v871 = vpop.f32.mrb[0].mxu0
  %v872 = vadd.f32 0.0, %v871
  %v873 = vpop.f32.mrb[0].mxu0
  %v874 = vpop.f32.mrb[0].mxu0
  %v875 = vadd.f32 0.0, %v874
  %v876 = vpop.f32.mrb[0].mxu0
  %877 = vmatprep.mubr.bf16.mxu0 0
  %878 = vmatmul.mubr.bf16.gmra.mrb[0].mxu0 %v832
  %v879 = vpop.f32.mrb[0].mxu0
  %v880 = vadd.f32 0.0, %v879
  %v881 = vpop.f32.mrb[0].mxu0
  %v882 = vpop.f32.mrb[0].mxu0
  %v883 = vpop.f32.mrb[0].mxu0
  %884 = vdwg.mxu0
  %885 = vrot.lane.b32.xlu0 %v279, 56
  %v886 = vpop.permute.xlu0 %885
  %887 = vrot.lane.b32.xlu0 %v280, 56
  %v888 = vpop.permute.xlu0 %887
  %v891 = vsel %vm414, %v821, 0
  %v894 = vsel %vm414, %v822, 0
  %v897 = vsel %vm496, %v888, 0
  %899 = vmatprep.subr.bf16.mxu0 0
  %900 = vmatpush1.bf16.msra.mxu0 %v886
  %901 = vmatprep.subr.bf16.mxu0 0
  %902 = vmatpush1.bf16.msra.mxu0 %v897
  %903 = vmatprep.subr.bf16.mxu0 0
  %904 = vmatpush1.bf16.msra.mxu0 0
  %905 = vmatprep.subr.bf16.mxu0 0
  %906 = vmatpush1.bf16.msra.mxu0 0
  %907 = vmatprep.subr.bf16.mxu0 0
  %908 = vmatpush1.bf16.msra.mxu0 0
  %909 = vmatprep.subr.bf16.mxu0 0
  %910 = vmatpush1.bf16.msra.mxu0 0
  %911 = vmatprep.subr.bf16.mxu0 0
  %912 = vmatpush1.bf16.msra.mxu0 0
  %913 = vmatprep.subr.bf16.mxu0 0
  %914 = vmatpush1.bf16.msra.mxu0 0
  %915 = vmatprep.subr.bf16.mxu0 0
  %916 = vmatpush1.bf16.msra.mxu0 0
  %917 = vmatprep.subr.bf16.mxu0 0
  %918 = vmatpush1.bf16.msra.mxu0 0
  %919 = vmatprep.subr.bf16.mxu0 0
  %920 = vmatpush1.bf16.msra.mxu0 0
  %921 = vmatprep.subr.bf16.mxu0 0
  %922 = vmatpush1.bf16.msra.mxu0 0
  %923 = vmatprep.subr.bf16.mxu0 0
  %924 = vmatpush1.bf16.msra.mxu0 0
  %925 = vmatprep.subr.bf16.mxu0 0
  %926 = vmatpush1.bf16.msra.mxu0 0
  %927 = vmatprep.subr.bf16.mxu0 0
  %928 = vmatpush1.bf16.msra.mxu0 0
  %929 = vmatprep.subr.bf16.mxu0 0
  %930 = vmatpush1.bf16.msra.mxu0 0
  %931 = vmatprep.mubr.bf16.mxu0 0
  %932 = vmatmul.mubr.bf16.gmra.mrb[0].mxu0 %v891
  %v933 = vpop.f32.mrb[0].mxu0
  %v934 = vadd.f32 0.0, %v933
  %v935 = vpop.f32.mrb[0].mxu0
  %v936 = vpop.f32.mrb[0].mxu0
  %v937 = vadd.f32 0.0, %v936
  %v938 = vpop.f32.mrb[0].mxu0
  %939 = vmatprep.mubr.bf16.mxu0 0
  %940 = vmatmul.mubr.bf16.gmra.mrb[0].mxu0 %v894
  %v941 = vpop.f32.mrb[0].mxu0
  %v942 = vadd.f32 0.0, %v941
  %v943 = vpop.f32.mrb[0].mxu0
  %v944 = vpop.f32.mrb[0].mxu0
  %v945 = vpop.f32.mrb[0].mxu0
  %946 = vdwg.mxu0
  %v947 = vpack.c.bf16 %v875, %v872
  %v948 = vpack.c.bf16 %v934, %v880
  %v949 = vpack.c.bf16 %v942, %v937
  %v951 = vsel %vm287, %v947, 0
  %v954 = vsel %vm287, %v948, 0
  %v957 = vsel %vm287, %v949, 0
  %v960 = vsel %vm496, %v270, 0
  %962 = vmatprep.subr.bf16.mxu0 0
  %963 = vmatpush1.bf16.msra.mxu0 %v960
  %964 = vmatprep.subr.bf16.mxu0 0
  %965 = vmatpush1.bf16.msra.mxu0 0
  %966 = vmatprep.subr.bf16.mxu0 0
  %967 = vmatpush1.bf16.msra.mxu0 0
  %968 = vmatprep.subr.bf16.mxu0 0
  %969 = vmatpush1.bf16.msra.mxu0 0
  %970 = vmatprep.subr.bf16.mxu0 0
  %971 = vmatpush1.bf16.msra.mxu0 0
  %972 = vmatprep.subr.bf16.mxu0 0
  %973 = vmatpush1.bf16.msra.mxu0 0
  %974 = vmatprep.subr.bf16.mxu0 0
  %975 = vmatpush1.bf16.msra.mxu0 0
  %976 = vmatprep.subr.bf16.mxu0 0
  %977 = vmatpush1.bf16.msra.mxu0 0
  %978 = vmatprep.subr.bf16.mxu0 0
  %979 = vmatpush1.bf16.msra.mxu0 0
  %980 = vmatprep.subr.bf16.mxu0 0
  %981 = vmatpush1.bf16.msra.mxu0 0
  %982 = vmatprep.subr.bf16.mxu0 0
  %983 = vmatpush1.bf16.msra.mxu0 0
  %984 = vmatprep.subr.bf16.mxu0 0
  %985 = vmatpush1.bf16.msra.mxu0 0
  %986 = vmatprep.subr.bf16.mxu0 0
  %987 = vmatpush1.bf16.msra.mxu0 0
  %988 = vmatprep.subr.bf16.mxu0 0
  %989 = vmatpush1.bf16.msra.mxu0 0
  %990 = vmatprep.subr.bf16.mxu0 0
  %991 = vmatpush1.bf16.msra.mxu0 0
  %992 = vmatprep.subr.bf16.mxu0 0
  %993 = vmatpush1.bf16.msra.mxu0 0
  %994 = vmatprep.mubr.bf16.mxu0 0
  %995 = vmatmul.mubr.bf16.gmra.mrb[0].mxu0 %v951
  %v996 = vpop.f32.mrb[0].mxu0
  %v997 = vadd.f32 0.0, %v996
  %v998 = vpop.f32.mrb[0].mxu0
  %v999 = vpop.f32.mrb[0].mxu0
  %v1000 = vadd.f32 0.0, %v999
  %v1001 = vpop.f32.mrb[0].mxu0
  %1002 = vmatprep.mubr.bf16.mxu0 0
  %1003 = vmatmul.mubr.bf16.gmra.mrb[0].mxu0 %v954
  %v1004 = vpop.f32.mrb[0].mxu0
  %v1005 = vadd.f32 0.0, %v1004
  %v1006 = vpop.f32.mrb[0].mxu0
  %v1007 = vpop.f32.mrb[0].mxu0
  %v1008 = vadd.f32 0.0, %v1007
  %v1009 = vpop.f32.mrb[0].mxu0
  %1010 = vmatprep.mubr.bf16.mxu0 0
  %1011 = vmatmul.mubr.bf16.gmra.mrb[0].mxu0 %v957
  %v1012 = vpop.f32.mrb[0].mxu0
  %v1013 = vadd.f32 0.0, %v1012
  %v1014 = vpop.f32.mrb[0].mxu0
  %v1015 = vpop.f32.mrb[0].mxu0
  %v1016 = vadd.f32 0.0, %v1015
  %v1017 = vpop.f32.mrb[0].mxu0
  %1018 = vdwg.mxu0
  %v1020 = vsel %vm287, %v610, 0
  %v1023 = vsel %vm287, %v611, 0
  %v1026 = vsel %vm287, %v612, 0
  %v1029 = vsel %vm496, %v269, 0
  %1031 = vmatprep.subr.bf16.mxu0 0
  %1032 = vmatpush1.bf16.msra.mxu0 %v1029
  %1033 = vmatprep.subr.bf16.mxu0 0
  %1034 = vmatpush1.bf16.msra.mxu0 0
  %1035 = vmatprep.subr.bf16.mxu0 0
  %1036 = vmatpush1.bf16.msra.mxu0 0
  %1037 = vmatprep.subr.bf16.mxu0 0
  %1038 = vmatpush1.bf16.msra.mxu0 0
  %1039 = vmatprep.subr.bf16.mxu0 0
  %1040 = vmatpush1.bf16.msra.mxu0 0
  %1041 = vmatprep.subr.bf16.mxu0 0
  %1042 = vmatpush1.bf16.msra.mxu0 0
  %1043 = vmatprep.subr.bf16.mxu0 0
  %1044 = vmatpush1.bf16.msra.mxu0 0
  %1045 = vmatprep.subr.bf16.mxu0 0
  %1046 = vmatpush1.bf16.msra.mxu0 0
  %1047 = vmatprep.subr.bf16.mxu0 0
  %1048 = vmatpush1.bf16.msra.mxu0 0
  %1049 = vmatprep.subr.bf16.mxu0 0
  %1050 = vmatpush1.bf16.msra.mxu0 0
  %1051 = vmatprep.subr.bf16.mxu0 0
  %1052 = vmatpush1.bf16.msra.mxu0 0
  %1053 = vmatprep.subr.bf16.mxu0 0
  %1054 = vmatpush1.bf16.msra.mxu0 0
  %1055 = vmatprep.subr.bf16.mxu0 0
  %1056 = vmatpush1.bf16.msra.mxu0 0
  %1057 = vmatprep.subr.bf16.mxu0 0
  %1058 = vmatpush1.bf16.msra.mxu0 0
  %1059 = vmatprep.subr.bf16.mxu0 0
  %1060 = vmatpush1.bf16.msra.mxu0 0
  %1061 = vmatprep.subr.bf16.mxu0 0
  %1062 = vmatpush1.bf16.msra.mxu0 0
  %1063 = vmatprep.mubr.bf16.mxu0 0
  %1064 = vmatmul.mubr.bf16.gmra.mrb[0].mxu0 %v1020
  %v1065 = vpop.f32.mrb[0].mxu0
  %v1066 = vadd.f32 %v997, %v1065
  %v1067 = vpop.f32.mrb[0].mxu0
  %v1068 = vpop.f32.mrb[0].mxu0
  %v1069 = vadd.f32 %v1000, %v1068
  %v1070 = vpop.f32.mrb[0].mxu0
  %1071 = vmatprep.mubr.bf16.mxu0 0
  %1072 = vmatmul.mubr.bf16.gmra.mrb[0].mxu0 %v1023
  %v1073 = vpop.f32.mrb[0].mxu0
  %v1074 = vadd.f32 %v1005, %v1073
  %v1075 = vpop.f32.mrb[0].mxu0
  %v1076 = vpop.f32.mrb[0].mxu0
  %v1077 = vadd.f32 %v1008, %v1076
  %v1078 = vpop.f32.mrb[0].mxu0
  %1079 = vmatprep.mubr.bf16.mxu0 0
  %1080 = vmatmul.mubr.bf16.gmra.mrb[0].mxu0 %v1026
  %v1081 = vpop.f32.mrb[0].mxu0
  %v1082 = vadd.f32 %v1013, %v1081
  %v1083 = vpop.f32.mrb[0].mxu0
  %v1084 = vpop.f32.mrb[0].mxu0
  %v1085 = vadd.f32 %v1016, %v1084
  %v1086 = vpop.f32.mrb[0].mxu0
  %1087 = vdwg.mxu0
  %1088 = vrot.lane.b32.xlu0 %v273, 112
  %v1089 = vpop.permute.xlu0 %1088
  %1090 = vrot.lane.b32.xlu0 %v274, 112
  %v1091 = vpop.permute.xlu0 %1090
  %1092 = vrot.lane.b32.xlu0 %v277, 80
  %v1093 = vpop.permute.xlu0 %1092
  %1094 = vrot.lane.b32.xlu0 %v278, 80
  %v1095 = vpop.permute.xlu0 %1094
  %v1097 = vsel %vm287, %v1089, 0
  %v1100 = vsel %vm287, %v1091, 0
  %v1103 = vsel %vm287, %v1093, 0
  %v1106 = vsel %vm287, %v1095, 0
  %1108 = vmatprep.subr.bf16.mxu0 0
  %1109 = vmatpush1.bf16.xpose.msra.mxu0 %v1103
  %1110 = vmatprep.subr.bf16.mxu0 0
  %1111 = vmatpush1.bf16.xpose.msra.mxu0 %v1106
  %1112 = vmatprep.subr.bf16.mxu0 0
  %1113 = vmatpush1.bf16.xpose.msra.mxu0 0
  %1114 = vmatprep.subr.bf16.mxu0 0
  %1115 = vmatpush1.bf16.xpose.msra.mxu0 0
  %1116 = vmatprep.subr.bf16.mxu0 0
  %1117 = vmatpush1.bf16.xpose.msra.mxu0 0
  %1118 = vmatprep.subr.bf16.mxu0 0
  %1119 = vmatpush1.bf16.xpose.msra.mxu0 0
  %1120 = vmatprep.subr.bf16.mxu0 0
  %1121 = vmatpush1.bf16.xpose.msra.mxu0 0
  %1122 = vmatprep.subr.bf16.mxu0 0
  %1123 = vmatpush1.bf16.xpose.msra.mxu0 0
  %1124 = vmatprep.subr.bf16.mxu0 0
  %1125 = vmatpush1.bf16.xpose.msra.mxu0 0
  %1126 = vmatprep.subr.bf16.mxu0 0
  %1127 = vmatpush1.bf16.xpose.msra.mxu0 0
  %1128 = vmatprep.subr.bf16.mxu0 0
  %1129 = vmatpush1.bf16.xpose.msra.mxu0 0
  %1130 = vmatprep.subr.bf16.mxu0 0
  %1131 = vmatpush1.bf16.xpose.msra.mxu0 0
  %1132 = vmatprep.subr.bf16.mxu0 0
  %1133 = vmatpush1.bf16.xpose.msra.mxu0 0
  %1134 = vmatprep.subr.bf16.mxu0 0
  %1135 = vmatpush1.bf16.xpose.msra.mxu0 0
  %1136 = vmatprep.subr.bf16.mxu0 0
  %1137 = vmatpush1.bf16.xpose.msra.mxu0 0
  %1138 = vmatprep.subr.bf16.mxu0 0
  %1139 = vmatpush1.bf16.xpose.msra.mxu0 0
  %1140 = vmatprep.mubr.bf16.mxu0 0
  %1141 = vmatmul.mubr.bf16.gmra.mrb[0].mxu0 %v1097
  %v1142 = vpop.f32.mrb[0].mxu0
  %v1143 = vadd.f32 %v64, %v1142
  %v1144 = vpop.f32.mrb[0].mxu0
  %v1145 = vpop.f32.mrb[0].mxu0
  %v1146 = vadd.f32 %v64, %v1145
  %v1147 = vpop.f32.mrb[0].mxu0
  %1148 = vmatprep.mubr.bf16.mxu0 0
  %1149 = vmatmul.mubr.bf16.gmra.mrb[0].mxu0 %v1100
  %v1150 = vpop.f32.mrb[0].mxu0
  %v1151 = vadd.f32 %v64, %v1150
  %v1152 = vpop.f32.mrb[0].mxu0
  %v1153 = vpop.f32.mrb[0].mxu0
  %v1154 = vpop.f32.mrb[0].mxu0
  %1155 = vdwg.mxu0
  %1156 = vrot.lane.b32.xlu0 %v275, 112
  %v1157 = vpop.permute.xlu0 %1156
  %1158 = vrot.lane.b32.xlu0 %v276, 112
  %v1159 = vpop.permute.xlu0 %1158
  %1160 = vrot.lane.b32.xlu0 %v279, 80
  %v1161 = vpop.permute.xlu0 %1160
  %1162 = vrot.lane.b32.xlu0 %v280, 80
  %v1163 = vpop.permute.xlu0 %1162
  %v1165 = vsel %vm287, %v1157, 0
  %v1168 = vsel %vm287, %v1159, 0
  %v1171 = vsel %vm287, %v1161, 0
  %v1174 = vsel %vm287, %v1163, 0
  %1176 = vmatprep.subr.bf16.mxu0 0
  %1177 = vmatpush1.bf16.xpose.msra.mxu0 %v1171
  %1178 = vmatprep.subr.bf16.mxu0 0
  %1179 = vmatpush1.bf16.xpose.msra.mxu0 %v1174
  %1180 = vmatprep.subr.bf16.mxu0 0
  %1181 = vmatpush1.bf16.xpose.msra.mxu0 0
  %1182 = vmatprep.subr.bf16.mxu0 0
  %1183 = vmatpush1.bf16.xpose.msra.mxu0 0
  %1184 = vmatprep.subr.bf16.mxu0 0
  %1185 = vmatpush1.bf16.xpose.msra.mxu0 0
  %1186 = vmatprep.subr.bf16.mxu0 0
  %1187 = vmatpush1.bf16.xpose.msra.mxu0 0
  %1188 = vmatprep.subr.bf16.mxu0 0
  %1189 = vmatpush1.bf16.xpose.msra.mxu0 0
  %1190 = vmatprep.subr.bf16.mxu0 0
  %1191 = vmatpush1.bf16.xpose.msra.mxu0 0
  %1192 = vmatprep.subr.bf16.mxu0 0
  %1193 = vmatpush1.bf16.xpose.msra.mxu0 0
  %1194 = vmatprep.subr.bf16.mxu0 0
  %1195 = vmatpush1.bf16.xpose.msra.mxu0 0
  %1196 = vmatprep.subr.bf16.mxu0 0
  %1197 = vmatpush1.bf16.xpose.msra.mxu0 0
  %1198 = vmatprep.subr.bf16.mxu0 0
  %1199 = vmatpush1.bf16.xpose.msra.mxu0 0
  %1200 = vmatprep.subr.bf16.mxu0 0
  %1201 = vmatpush1.bf16.xpose.msra.mxu0 0
  %1202 = vmatprep.subr.bf16.mxu0 0
  %1203 = vmatpush1.bf16.xpose.msra.mxu0 0
  %1204 = vmatprep.subr.bf16.mxu0 0
  %1205 = vmatpush1.bf16.xpose.msra.mxu0 0
  %1206 = vmatprep.subr.bf16.mxu0 0
  %1207 = vmatpush1.bf16.xpose.msra.mxu0 0
  %1208 = vmatprep.mubr.bf16.mxu0 0
  %1209 = vmatmul.mubr.bf16.gmra.mrb[0].mxu0 %v1165
  %v1210 = vpop.f32.mrb[0].mxu0
  %v1211 = vadd.f32 %v64, %v1210
  %v1212 = vpop.f32.mrb[0].mxu0
  %v1213 = vpop.f32.mrb[0].mxu0
  %v1214 = vadd.f32 %v64, %v1213
  %v1215 = vpop.f32.mrb[0].mxu0
  %1216 = vmatprep.mubr.bf16.mxu0 0
  %1217 = vmatmul.mubr.bf16.gmra.mrb[0].mxu0 %v1168
  %v1218 = vpop.f32.mrb[0].mxu0
  %v1219 = vadd.f32 %v64, %v1218
  %v1220 = vpop.f32.mrb[0].mxu0
  %v1221 = vpop.f32.mrb[0].mxu0
  %v1222 = vpop.f32.mrb[0].mxu0
  %1223 = vdwg.mxu0
  %v1224 = vsel %vm414, %v1143, -inf
  %1225 = vmax.xlane.f32.xlu0 %v1224
  %v1226 = vpop.xlane.xlu0 %1225
  %v1227 = vsel %vm414, %v1146, -inf
  %1228 = vmax.xlane.f32.xlu0 %v1227
  %v1229 = vpop.xlane.xlu0 %1228
  %v1230 = vsel %vm414, %v1151, -inf
  %1231 = vmax.xlane.f32.xlu0 %v1230
  %v1232 = vpop.xlane.xlu0 %1231
  %v1233 = vsel %vm414, %v1211, -inf
  %1234 = vmax.xlane.f32.xlu0 %v1233
  %v1235 = vpop.xlane.xlu0 %1234
  %v1236 = vsel %vm414, %v1214, -inf
  %1237 = vmax.xlane.f32.xlu0 %v1236
  %v1238 = vpop.xlane.xlu0 %1237
  %v1239 = vsel %vm414, %v1219, -inf
  %1240 = vmax.xlane.f32.xlu0 %v1239
  %v1241 = vpop.xlane.xlu0 %1240
  %v1242 = vsub.f32 %v1143, %v1226
  %v1243 = vsub.f32 %v1146, %v1229
  %v1244 = vsub.f32 %v1151, %v1232
  %v1245 = vsub.f32 %v1211, %v1235
  %v1246 = vsub.f32 %v1214, %v1238
  %v1247 = vsub.f32 %v1219, %v1241
  %v1248 = vmul.f32 %v1242, 1.442695
  %v1249 = vpow.pop %v1248
  %v1250 = vmul.f32 %v1243, 1.442695
  %v1251 = vpow.pop %v1250
  %v1252 = vmul.f32 %v1244, 1.442695
  %v1253 = vpow.pop %v1252
  %v1254 = vmul.f32 %v1245, 1.442695
  %v1255 = vpow.pop %v1254
  %v1256 = vmul.f32 %v1246, 1.442695
  %v1257 = vpow.pop %v1256
  %v1258 = vmul.f32 %v1247, 1.442695
  %v1259 = vpow.pop %v1258
  %v1260 = vsel %vm414, %v1249, 0.0
  %1261 = vadd.xlane.f32.xlu0 %v1260
  %v1262 = vpop.xlane.xlu0 %1261
  %v1263 = vsel %vm414, %v1251, 0.0
  %1264 = vadd.xlane.f32.xlu0 %v1263
  %v1265 = vpop.xlane.xlu0 %1264
  %v1266 = vsel %vm414, %v1253, 0.0
  %1267 = vadd.xlane.f32.xlu0 %v1266
  %v1268 = vpop.xlane.xlu0 %1267
  %v1269 = vsel %vm414, %v1255, 0.0
  %1270 = vadd.xlane.f32.xlu0 %v1269
  %v1271 = vpop.xlane.xlu0 %1270
  %v1272 = vsel %vm414, %v1257, 0.0
  %1273 = vadd.xlane.f32.xlu0 %v1272
  %v1274 = vpop.xlane.xlu0 %1273
  %v1275 = vsel %vm414, %v1259, 0.0
  %1276 = vadd.xlane.f32.xlu0 %v1275
  %v1277 = vpop.xlane.xlu0 %1276
  %v1278 = vrcp.pop %v1262
  %v1279 = vrcp.pop %v1265
  %v1280 = vrcp.pop %v1268
  %v1281 = vrcp.pop %v1271
  %v1282 = vrcp.pop %v1274
  %v1283 = vrcp.pop %v1277
  %v1284 = vmul.f32 %v1249, %v1278
  %v1285 = vmul.f32 %v1251, %v1279
  %v1286 = vmul.f32 %v1253, %v1280
  %v1287 = vmul.f32 %v1255, %v1281
  %v1288 = vmul.f32 %v1257, %v1282
  %v1289 = vmul.f32 %v1259, %v1283
  %v1290 = vpack.c.bf16 %v1285, %v1284
  %v1291 = vpack.c.bf16 %v1286, %v1286
  %v1292 = vpack.c.bf16 %v1288, %v1287
  %v1293 = vpack.c.bf16 %v1289, %v1289
  %1294 = vrot.lane.b32.xlu0 %v277, 48
  %v1295 = vpop.permute.xlu0 %1294
  %1296 = vrot.lane.b32.xlu0 %v278, 48
  %v1297 = vpop.permute.xlu0 %1296
  %v1300 = vsel %vm414, %v1290, 0
  %v1303 = vsel %vm414, %v1291, 0
  %v1306 = vsel %vm496, %v1297, 0
  %1308 = vmatprep.subr.bf16.mxu0 0
  %1309 = vmatpush1.bf16.msra.mxu0 %v1295
  %1310 = vmatprep.subr.bf16.mxu0 0
  %1311 = vmatpush1.bf16.msra.mxu0 %v1306
  %1312 = vmatprep.subr.bf16.mxu0 0
  %1313 = vmatpush1.bf16.msra.mxu0 0
  %1314 = vmatprep.subr.bf16.mxu0 0
  %1315 = vmatpush1.bf16.msra.mxu0 0
  %1316 = vmatprep.subr.bf16.mxu0 0
  %1317 = vmatpush1.bf16.msra.mxu0 0
  %1318 = vmatprep.subr.bf16.mxu0 0
  %1319 = vmatpush1.bf16.msra.mxu0 0
  %1320 = vmatprep.subr.bf16.mxu0 0
  %1321 = vmatpush1.bf16.msra.mxu0 0
  %1322 = vmatprep.subr.bf16.mxu0 0
  %1323 = vmatpush1.bf16.msra.mxu0 0
  %1324 = vmatprep.subr.bf16.mxu0 0
  %1325 = vmatpush1.bf16.msra.mxu0 0
  %1326 = vmatprep.subr.bf16.mxu0 0
  %1327 = vmatpush1.bf16.msra.mxu0 0
  %1328 = vmatprep.subr.bf16.mxu0 0
  %1329 = vmatpush1.bf16.msra.mxu0 0
  %1330 = vmatprep.subr.bf16.mxu0 0
  %1331 = vmatpush1.bf16.msra.mxu0 0
  %1332 = vmatprep.subr.bf16.mxu0 0
  %1333 = vmatpush1.bf16.msra.mxu0 0
  %1334 = vmatprep.subr.bf16.mxu0 0
  %1335 = vmatpush1.bf16.msra.mxu0 0
  %1336 = vmatprep.subr.bf16.mxu0 0
  %1337 = vmatpush1.bf16.msra.mxu0 0
  %1338 = vmatprep.subr.bf16.mxu0 0
  %1339 = vmatpush1.bf16.msra.mxu0 0
  %1340 = vmatprep.mubr.bf16.mxu0 0
  %1341 = vmatmul.mubr.bf16.gmra.mrb[0].mxu0 %v1300
  %v1342 = vpop.f32.mrb[0].mxu0
  %v1343 = vadd.f32 0.0, %v1342
  %v1344 = vpop.f32.mrb[0].mxu0
  %v1345 = vpop.f32.mrb[0].mxu0
  %v1346 = vadd.f32 0.0, %v1345
  %v1347 = vpop.f32.mrb[0].mxu0
  %1348 = vmatprep.mubr.bf16.mxu0 0
  %1349 = vmatmul.mubr.bf16.gmra.mrb[0].mxu0 %v1303
  %v1350 = vpop.f32.mrb[0].mxu0
  %v1351 = vadd.f32 0.0, %v1350
  %v1352 = vpop.f32.mrb[0].mxu0
  %v1353 = vpop.f32.mrb[0].mxu0
  %v1354 = vpop.f32.mrb[0].mxu0
  %1355 = vdwg.mxu0
  %1356 = vrot.lane.b32.xlu0 %v279, 48
  %v1357 = vpop.permute.xlu0 %1356
  %1358 = vrot.lane.b32.xlu0 %v280, 48
  %v1359 = vpop.permute.xlu0 %1358
  %v1362 = vsel %vm414, %v1292, 0
  %v1365 = vsel %vm414, %v1293, 0
  %v1368 = vsel %vm496, %v1359, 0
  %1370 = vmatprep.subr.bf16.mxu0 0
  %1371 = vmatpush1.bf16.msra.mxu0 %v1357
  %1372 = vmatprep.subr.bf16.mxu0 0
  %1373 = vmatpush1.bf16.msra.mxu0 %v1368
  %1374 = vmatprep.subr.bf16.mxu0 0
  %1375 = vmatpush1.bf16.msra.mxu0 0
  %1376 = vmatprep.subr.bf16.mxu0 0
  %1377 = vmatpush1.bf16.msra.mxu0 0
  %1378 = vmatprep.subr.bf16.mxu0 0
  %1379 = vmatpush1.bf16.msra.mxu0 0
  %1380 = vmatprep.subr.bf16.mxu0 0
  %1381 = vmatpush1.bf16.msra.mxu0 0
  %1382 = vmatprep.subr.bf16.mxu0 0
  %1383 = vmatpush1.bf16.msra.mxu0 0
  %1384 = vmatprep.subr.bf16.mxu0 0
  %1385 = vmatpush1.bf16.msra.mxu0 0
  %1386 = vmatprep.subr.bf16.mxu0 0
  %1387 = vmatpush1.bf16.msra.mxu0 0
  %1388 = vmatprep.subr.bf16.mxu0 0
  %1389 = vmatpush1.bf16.msra.mxu0 0
  %1390 = vmatprep.subr.bf16.mxu0 0
  %1391 = vmatpush1.bf16.msra.mxu0 0
  %1392 = vmatprep.subr.bf16.mxu0 0
  %1393 = vmatpush1.bf16.msra.mxu0 0
  %1394 = vmatprep.subr.bf16.mxu0 0
  %1395 = vmatpush1.bf16.msra.mxu0 0
  %1396 = vmatprep.subr.bf16.mxu0 0
  %1397 = vmatpush1.bf16.msra.mxu0 0
  %1398 = vmatprep.subr.bf16.mxu0 0
  %1399 = vmatpush1.bf16.msra.mxu0 0
  %1400 = vmatprep.subr.bf16.mxu0 0
  %1401 = vmatpush1.bf16.msra.mxu0 0
  %1402 = vmatprep.mubr.bf16.mxu0 0
  %1403 = vmatmul.mubr.bf16.gmra.mrb[0].mxu0 %v1362
  %v1404 = vpop.f32.mrb[0].mxu0
  %v1405 = vadd.f32 0.0, %v1404
  %v1406 = vpop.f32.mrb[0].mxu0
  %v1407 = vpop.f32.mrb[0].mxu0
  %v1408 = vadd.f32 0.0, %v1407
  %v1409 = vpop.f32.mrb[0].mxu0
  %1410 = vmatprep.mubr.bf16.mxu0 0
  %1411 = vmatmul.mubr.bf16.gmra.mrb[0].mxu0 %v1365
  %v1412 = vpop.f32.mrb[0].mxu0
  %v1413 = vadd.f32 0.0, %v1412
  %v1414 = vpop.f32.mrb[0].mxu0
  %v1415 = vpop.f32.mrb[0].mxu0
  %v1416 = vpop.f32.mrb[0].mxu0
  %1417 = vdwg.mxu0
  %v1418 = vpack.c.bf16 %v1346, %v1343
  %v1419 = vpack.c.bf16 %v1405, %v1351
  %v1420 = vpack.c.bf16 %v1413, %v1408
  %v1422 = vsel %vm287, %v1418, 0
  %v1425 = vsel %vm287, %v1419, 0
  %v1428 = vsel %vm287, %v1420, 0
  %v1431 = vsel %vm496, %v271, 0
  %1433 = vmatprep.subr.bf16.mxu0 0
  %1434 = vmatpush1.bf16.msra.mxu0 %v1431
  %1435 = vmatprep.subr.bf16.mxu0 0
  %1436 = vmatpush1.bf16.msra.mxu0 0
  %1437 = vmatprep.subr.bf16.mxu0 0
  %1438 = vmatpush1.bf16.msra.mxu0 0
  %1439 = vmatprep.subr.bf16.mxu0 0
  %1440 = vmatpush1.bf16.msra.mxu0 0
  %1441 = vmatprep.subr.bf16.mxu0 0
  %1442 = vmatpush1.bf16.msra.mxu0 0
  %1443 = vmatprep.subr.bf16.mxu0 0
  %1444 = vmatpush1.bf16.msra.mxu0 0
  %1445 = vmatprep.subr.bf16.mxu0 0
  %1446 = vmatpush1.bf16.msra.mxu0 0
  %1447 = vmatprep.subr.bf16.mxu0 0
  %1448 = vmatpush1.bf16.msra.mxu0 0
  %1449 = vmatprep.subr.bf16.mxu0 0
  %1450 = vmatpush1.bf16.msra.mxu0 0
  %1451 = vmatprep.subr.bf16.mxu0 0
  %1452 = vmatpush1.bf16.msra.mxu0 0
  %1453 = vmatprep.subr.bf16.mxu0 0
  %1454 = vmatpush1.bf16.msra.mxu0 0
  %1455 = vmatprep.subr.bf16.mxu0 0
  %1456 = vmatpush1.bf16.msra.mxu0 0
  %1457 = vmatprep.subr.bf16.mxu0 0
  %1458 = vmatpush1.bf16.msra.mxu0 0
  %1459 = vmatprep.subr.bf16.mxu0 0
  %1460 = vmatpush1.bf16.msra.mxu0 0
  %1461 = vmatprep.subr.bf16.mxu0 0
  %1462 = vmatpush1.bf16.msra.mxu0 0
  %1463 = vmatprep.subr.bf16.mxu0 0
  %1464 = vmatpush1.bf16.msra.mxu0 0
  %1465 = vmatprep.mubr.bf16.mxu0 0
  %1466 = vmatmul.mubr.bf16.gmra.mrb[0].mxu0 %v1422
  %v1467 = vpop.f32.mrb[0].mxu0
  %v1468 = vadd.f32 0.0, %v1467
  %v1469 = vpop.f32.mrb[0].mxu0
  %v1470 = vpop.f32.mrb[0].mxu0
  %v1471 = vadd.f32 0.0, %v1470
  %v1472 = vpop.f32.mrb[0].mxu0
  %1473 = vmatprep.mubr.bf16.mxu0 0
  %1474 = vmatmul.mubr.bf16.gmra.mrb[0].mxu0 %v1425
  %v1475 = vpop.f32.mrb[0].mxu0
  %v1476 = vadd.f32 0.0, %v1475
  %v1477 = vpop.f32.mrb[0].mxu0
  %v1478 = vpop.f32.mrb[0].mxu0
  %v1479 = vadd.f32 0.0, %v1478
  %v1480 = vpop.f32.mrb[0].mxu0
  %1481 = vmatprep.mubr.bf16.mxu0 0
  %1482 = vmatmul.mubr.bf16.gmra.mrb[0].mxu0 %v1428
  %v1483 = vpop.f32.mrb[0].mxu0
  %v1484 = vadd.f32 0.0, %v1483
  %v1485 = vpop.f32.mrb[0].mxu0
  %v1486 = vpop.f32.mrb[0].mxu0
  %v1487 = vadd.f32 0.0, %v1486
  %v1488 = vpop.f32.mrb[0].mxu0
  %1489 = vdwg.mxu0
  %v1490 = vadd.f32 %v1066, %v1468
  %v1491 = vadd.f32 %v1069, %v1471
  %v1492 = vadd.f32 %v1074, %v1476
  %v1493 = vadd.f32 %v1077, %v1479
  %v1494 = vadd.f32 %v1082, %v1484
  %v1495 = vadd.f32 %v1085, %v1487
  %1496 = vrot.lane.b32.xlu0 %v273, 104
  %v1497 = vpop.permute.xlu0 %1496
  %1498 = vrot.lane.b32.xlu0 %v274, 104
  %v1499 = vpop.permute.xlu0 %1498
  %1500 = vrot.lane.b32.xlu0 %v277, 72
  %v1501 = vpop.permute.xlu0 %1500
  %1502 = vrot.lane.b32.xlu0 %v278, 72
  %v1503 = vpop.permute.xlu0 %1502
  %v1505 = vsel %vm287, %v1497, 0
  %v1508 = vsel %vm287, %v1499, 0
  %v1511 = vsel %vm287, %v1501, 0
  %v1514 = vsel %vm287, %v1503, 0
  %1516 = vmatprep.subr.bf16.mxu0 0
  %1517 = vmatpush1.bf16.xpose.msra.mxu0 %v1511
  %1518 = vmatprep.subr.bf16.mxu0 0
  %1519 = vmatpush1.bf16.xpose.msra.mxu0 %v1514
  %1520 = vmatprep.subr.bf16.mxu0 0
  %1521 = vmatpush1.bf16.xpose.msra.mxu0 0
  %1522 = vmatprep.subr.bf16.mxu0 0
  %1523 = vmatpush1.bf16.xpose.msra.mxu0 0
  %1524 = vmatprep.subr.bf16.mxu0 0
  %1525 = vmatpush1.bf16.xpose.msra.mxu0 0
  %1526 = vmatprep.subr.bf16.mxu0 0
  %1527 = vmatpush1.bf16.xpose.msra.mxu0 0
  %1528 = vmatprep.subr.bf16.mxu0 0
  %1529 = vmatpush1.bf16.xpose.msra.mxu0 0
  %1530 = vmatprep.subr.bf16.mxu0 0
  %1531 = vmatpush1.bf16.xpose.msra.mxu0 0
  %1532 = vmatprep.subr.bf16.mxu0 0
  %1533 = vmatpush1.bf16.xpose.msra.mxu0 0
  %1534 = vmatprep.subr.bf16.mxu0 0
  %1535 = vmatpush1.bf16.xpose.msra.mxu0 0
  %1536 = vmatprep.subr.bf16.mxu0 0
  %1537 = vmatpush1.bf16.xpose.msra.mxu0 0
  %1538 = vmatprep.subr.bf16.mxu0 0
  %1539 = vmatpush1.bf16.xpose.msra.mxu0 0
  %1540 = vmatprep.subr.bf16.mxu0 0
  %1541 = vmatpush1.bf16.xpose.msra.mxu0 0
  %1542 = vmatprep.subr.bf16.mxu0 0
  %1543 = vmatpush1.bf16.xpose.msra.mxu0 0
  %1544 = vmatprep.subr.bf16.mxu0 0
  %1545 = vmatpush1.bf16.xpose.msra.mxu0 0
  %1546 = vmatprep.subr.bf16.mxu0 0
  %1547 = vmatpush1.bf16.xpose.msra.mxu0 0
  %1548 = vmatprep.mubr.bf16.mxu0 0
  %1549 = vmatmul.mubr.bf16.gmra.mrb[0].mxu0 %v1505
  %v1550 = vpop.f32.mrb[0].mxu0
  %v1551 = vadd.f32 %v64, %v1550
  %v1552 = vpop.f32.mrb[0].mxu0
  %v1553 = vpop.f32.mrb[0].mxu0
  %v1554 = vadd.f32 %v64, %v1553
  %v1555 = vpop.f32.mrb[0].mxu0
  %1556 = vmatprep.mubr.bf16.mxu0 0
  %1557 = vmatmul.mubr.bf16.gmra.mrb[0].mxu0 %v1508
  %v1558 = vpop.f32.mrb[0].mxu0
  %v1559 = vadd.f32 %v64, %v1558
  %v1560 = vpop.f32.mrb[0].mxu0
  %v1561 = vpop.f32.mrb[0].mxu0
  %v1562 = vpop.f32.mrb[0].mxu0
  %1563 = vdwg.mxu0
  %1564 = vrot.lane.b32.xlu0 %v275, 104
  %v1565 = vpop.permute.xlu0 %1564
  %1566 = vrot.lane.b32.xlu0 %v276, 104
  %v1567 = vpop.permute.xlu0 %1566
  %1568 = vrot.lane.b32.xlu0 %v279, 72
  %v1569 = vpop.permute.xlu0 %1568
  %1570 = vrot.lane.b32.xlu0 %v280, 72
  %v1571 = vpop.permute.xlu0 %1570
  %v1573 = vsel %vm287, %v1565, 0
  %v1576 = vsel %vm287, %v1567, 0
  %v1579 = vsel %vm287, %v1569, 0
  %v1582 = vsel %vm287, %v1571, 0
  %1584 = vmatprep.subr.bf16.mxu0 0
  %1585 = vmatpush1.bf16.xpose.msra.mxu0 %v1579
  %1586 = vmatprep.subr.bf16.mxu0 0
  %1587 = vmatpush1.bf16.xpose.msra.mxu0 %v1582
  %1588 = vmatprep.subr.bf16.mxu0 0
  %1589 = vmatpush1.bf16.xpose.msra.mxu0 0
  %1590 = vmatprep.subr.bf16.mxu0 0
  %1591 = vmatpush1.bf16.xpose.msra.mxu0 0
  %1592 = vmatprep.subr.bf16.mxu0 0
  %1593 = vmatpush1.bf16.xpose.msra.mxu0 0
  %1594 = vmatprep.subr.bf16.mxu0 0
  %1595 = vmatpush1.bf16.xpose.msra.mxu0 0
  %1596 = vmatprep.subr.bf16.mxu0 0
  %1597 = vmatpush1.bf16.xpose.msra.mxu0 0
  %1598 = vmatprep.subr.bf16.mxu0 0
  %1599 = vmatpush1.bf16.xpose.msra.mxu0 0
  %1600 = vmatprep.subr.bf16.mxu0 0
  %1601 = vmatpush1.bf16.xpose.msra.mxu0 0
  %1602 = vmatprep.subr.bf16.mxu0 0
  %1603 = vmatpush1.bf16.xpose.msra.mxu0 0
  %1604 = vmatprep.subr.bf16.mxu0 0
  %1605 = vmatpush1.bf16.xpose.msra.mxu0 0
  %1606 = vmatprep.subr.bf16.mxu0 0
  %1607 = vmatpush1.bf16.xpose.msra.mxu0 0
  %1608 = vmatprep.subr.bf16.mxu0 0
  %1609 = vmatpush1.bf16.xpose.msra.mxu0 0
  %1610 = vmatprep.subr.bf16.mxu0 0
  %1611 = vmatpush1.bf16.xpose.msra.mxu0 0
  %1612 = vmatprep.subr.bf16.mxu0 0
  %1613 = vmatpush1.bf16.xpose.msra.mxu0 0
  %1614 = vmatprep.subr.bf16.mxu0 0
  %1615 = vmatpush1.bf16.xpose.msra.mxu0 0
  %1616 = vmatprep.mubr.bf16.mxu0 0
  %1617 = vmatmul.mubr.bf16.gmra.mrb[0].mxu0 %v1573
  %v1618 = vpop.f32.mrb[0].mxu0
  %v1619 = vadd.f32 %v64, %v1618
  %v1620 = vpop.f32.mrb[0].mxu0
  %v1621 = vpop.f32.mrb[0].mxu0
  %v1622 = vadd.f32 %v64, %v1621
  %v1623 = vpop.f32.mrb[0].mxu0
  %1624 = vmatprep.mubr.bf16.mxu0 0
  %1625 = vmatmul.mubr.bf16.gmra.mrb[0].mxu0 %v1576
  %v1626 = vpop.f32.mrb[0].mxu0
  %v1627 = vadd.f32 %v64, %v1626
  %v1628 = vpop.f32.mrb[0].mxu0
  %v1629 = vpop.f32.mrb[0].mxu0
  %v1630 = vpop.f32.mrb[0].mxu0
  %1631 = vdwg.mxu0
  %v1632 = vsel %vm414, %v1551, -inf
  %1633 = vmax.xlane.f32.xlu0 %v1632
  %v1634 = vpop.xlane.xlu0 %1633
  %v1635 = vsel %vm414, %v1554, -inf
  %1636 = vmax.xlane.f32.xlu0 %v1635
  %v1637 = vpop.xlane.xlu0 %1636
  %v1638 = vsel %vm414, %v1559, -inf
  %1639 = vmax.xlane.f32.xlu0 %v1638
  %v1640 = vpop.xlane.xlu0 %1639
  %v1641 = vsel %vm414, %v1619, -inf
  %1642 = vmax.xlane.f32.xlu0 %v1641
  %v1643 = vpop.xlane.xlu0 %1642
  %v1644 = vsel %vm414, %v1622, -inf
  %1645 = vmax.xlane.f32.xlu0 %v1644
  %v1646 = vpop.xlane.xlu0 %1645
  %v1647 = vsel %vm414, %v1627, -inf
  %1648 = vmax.xlane.f32.xlu0 %v1647
  %v1649 = vpop.xlane.xlu0 %1648
  %v1650 = vsub.f32 %v1551, %v1634
  %v1651 = vsub.f32 %v1554, %v1637
  %v1652 = vsub.f32 %v1559, %v1640
  %v1653 = vsub.f32 %v1619, %v1643
  %v1654 = vsub.f32 %v1622, %v1646
  %v1655 = vsub.f32 %v1627, %v1649
  %v1656 = vmul.f32 %v1650, 1.442695
  %v1657 = vpow.pop %v1656
  %v1658 = vmul.f32 %v1651, 1.442695
  %v1659 = vpow.pop %v1658
  %v1660 = vmul.f32 %v1652, 1.442695
  %v1661 = vpow.pop %v1660
  %v1662 = vmul.f32 %v1653, 1.442695
  %v1663 = vpow.pop %v1662
  %v1664 = vmul.f32 %v1654, 1.442695
  %v1665 = vpow.pop %v1664
  %v1666 = vmul.f32 %v1655, 1.442695
  %v1667 = vpow.pop %v1666
  %v1668 = vsel %vm414, %v1657, 0.0
  %1669 = vadd.xlane.f32.xlu0 %v1668
  %v1670 = vpop.xlane.xlu0 %1669
  %v1671 = vsel %vm414, %v1659, 0.0
  %1672 = vadd.xlane.f32.xlu0 %v1671
  %v1673 = vpop.xlane.xlu0 %1672
  %v1674 = vsel %vm414, %v1661, 0.0
  %1675 = vadd.xlane.f32.xlu0 %v1674
  %v1676 = vpop.xlane.xlu0 %1675
  %v1677 = vsel %vm414, %v1663, 0.0
  %1678 = vadd.xlane.f32.xlu0 %v1677
  %v1679 = vpop.xlane.xlu0 %1678
  %v1680 = vsel %vm414, %v1665, 0.0
  %1681 = vadd.xlane.f32.xlu0 %v1680
  %v1682 = vpop.xlane.xlu0 %1681
  %v1683 = vsel %vm414, %v1667, 0.0
  %1684 = vadd.xlane.f32.xlu0 %v1683
  %v1685 = vpop.xlane.xlu0 %1684
  %v1686 = vrcp.pop %v1670
  %v1687 = vrcp.pop %v1673
  %v1688 = vrcp.pop %v1676
  %v1689 = vrcp.pop %v1679
  %v1690 = vrcp.pop %v1682
  %v1691 = vrcp.pop %v1685
  %v1692 = vmul.f32 %v1657, %v1686
  %v1693 = vmul.f32 %v1659, %v1687
  %v1694 = vmul.f32 %v1661, %v1688
  %v1695 = vmul.f32 %v1663, %v1689
  %v1696 = vmul.f32 %v1665, %v1690
  %v1697 = vmul.f32 %v1667, %v1691
  %v1698 = vpack.c.bf16 %v1693, %v1692
  %v1699 = vpack.c.bf16 %v1694, %v1694
  %v1700 = vpack.c.bf16 %v1696, %v1695
  %v1701 = vpack.c.bf16 %v1697, %v1697
  %1702 = vrot.lane.b32.xlu0 %v277, 40
  %v1703 = vpop.permute.xlu0 %1702
  %1704 = vrot.lane.b32.xlu0 %v278, 40
  %v1705 = vpop.permute.xlu0 %1704
  %v1708 = vsel %vm414, %v1698, 0
  %v1711 = vsel %vm414, %v1699, 0
  %v1714 = vsel %vm496, %v1705, 0
  %1716 = vmatprep.subr.bf16.mxu0 0
  %1717 = vmatpush1.bf16.msra.mxu0 %v1703
  %1718 = vmatprep.subr.bf16.mxu0 0
  %1719 = vmatpush1.bf16.msra.mxu0 %v1714
  %1720 = vmatprep.subr.bf16.mxu0 0
  %1721 = vmatpush1.bf16.msra.mxu0 0
  %1722 = vmatprep.subr.bf16.mxu0 0
  %1723 = vmatpush1.bf16.msra.mxu0 0
  %1724 = vmatprep.subr.bf16.mxu0 0
  %1725 = vmatpush1.bf16.msra.mxu0 0
  %1726 = vmatprep.subr.bf16.mxu0 0
  %1727 = vmatpush1.bf16.msra.mxu0 0
  %1728 = vmatprep.subr.bf16.mxu0 0
  %1729 = vmatpush1.bf16.msra.mxu0 0
  %1730 = vmatprep.subr.bf16.mxu0 0
  %1731 = vmatpush1.bf16.msra.mxu0 0
  %1732 = vmatprep.subr.bf16.mxu0 0
  %1733 = vmatpush1.bf16.msra.mxu0 0
  %1734 = vmatprep.subr.bf16.mxu0 0
  %1735 = vmatpush1.bf16.msra.mxu0 0
  %1736 = vmatprep.subr.bf16.mxu0 0
  %1737 = vmatpush1.bf16.msra.mxu0 0
  %1738 = vmatprep.subr.bf16.mxu0 0
  %1739 = vmatpush1.bf16.msra.mxu0 0
  %1740 = vmatprep.subr.bf16.mxu0 0
  %1741 = vmatpush1.bf16.msra.mxu0 0
  %1742 = vmatprep.subr.bf16.mxu0 0
  %1743 = vmatpush1.bf16.msra.mxu0 0
  %1744 = vmatprep.subr.bf16.mxu0 0
  %1745 = vmatpush1.bf16.msra.mxu0 0
  %1746 = vmatprep.subr.bf16.mxu0 0
  %1747 = vmatpush1.bf16.msra.mxu0 0
  %1748 = vmatprep.mubr.bf16.mxu0 0
  %1749 = vmatmul.mubr.bf16.gmra.mrb[0].mxu0 %v1708
  %v1750 = vpop.f32.mrb[0].mxu0
  %v1751 = vadd.f32 0.0, %v1750
  %v1752 = vpop.f32.mrb[0].mxu0
  %v1753 = vpop.f32.mrb[0].mxu0
  %v1754 = vadd.f32 0.0, %v1753
  %v1755 = vpop.f32.mrb[0].mxu0
  %1756 = vmatprep.mubr.bf16.mxu0 0
  %1757 = vmatmul.mubr.bf16.gmra.mrb[0].mxu0 %v1711
  %v1758 = vpop.f32.mrb[0].mxu0
  %v1759 = vadd.f32 0.0, %v1758
  %v1760 = vpop.f32.mrb[0].mxu0
  %v1761 = vpop.f32.mrb[0].mxu0
  %v1762 = vpop.f32.mrb[0].mxu0
  %1763 = vdwg.mxu0
  %1764 = vrot.lane.b32.xlu0 %v279, 40
  %v1765 = vpop.permute.xlu0 %1764
  %1766 = vrot.lane.b32.xlu0 %v280, 40
  %v1767 = vpop.permute.xlu0 %1766
  %v1770 = vsel %vm414, %v1700, 0
  %v1773 = vsel %vm414, %v1701, 0
  %v1776 = vsel %vm496, %v1767, 0
  %1778 = vmatprep.subr.bf16.mxu0 0
  %1779 = vmatpush1.bf16.msra.mxu0 %v1765
  %1780 = vmatprep.subr.bf16.mxu0 0
  %1781 = vmatpush1.bf16.msra.mxu0 %v1776
  %1782 = vmatprep.subr.bf16.mxu0 0
  %1783 = vmatpush1.bf16.msra.mxu0 0
  %1784 = vmatprep.subr.bf16.mxu0 0
  %1785 = vmatpush1.bf16.msra.mxu0 0
  %1786 = vmatprep.subr.bf16.mxu0 0
  %1787 = vmatpush1.bf16.msra.mxu0 0
  %1788 = vmatprep.subr.bf16.mxu0 0
  %1789 = vmatpush1.bf16.msra.mxu0 0
  %1790 = vmatprep.subr.bf16.mxu0 0
  %1791 = vmatpush1.bf16.msra.mxu0 0
  %1792 = vmatprep.subr.bf16.mxu0 0
  %1793 = vmatpush1.bf16.msra.mxu0 0
  %1794 = vmatprep.subr.bf16.mxu0 0
  %1795 = vmatpush1.bf16.msra.mxu0 0
  %1796 = vmatprep.subr.bf16.mxu0 0
  %1797 = vmatpush1.bf16.msra.mxu0 0
  %1798 = vmatprep.subr.bf16.mxu0 0
  %1799 = vmatpush1.bf16.msra.mxu0 0
  %1800 = vmatprep.subr.bf16.mxu0 0
  %1801 = vmatpush1.bf16.msra.mxu0 0
  %1802 = vmatprep.subr.bf16.mxu0 0
  %1803 = vmatpush1.bf16.msra.mxu0 0
  %1804 = vmatprep.subr.bf16.mxu0 0
  %1805 = vmatpush1.bf16.msra.mxu0 0
  %1806 = vmatprep.subr.bf16.mxu0 0
  %1807 = vmatpush1.bf16.msra.mxu0 0
  %1808 = vmatprep.subr.bf16.mxu0 0
  %1809 = vmatpush1.bf16.msra.mxu0 0
  %1810 = vmatprep.mubr.bf16.mxu0 0
  %1811 = vmatmul.mubr.bf16.gmra.mrb[0].mxu0 %v1770
  %v1812 = vpop.f32.mrb[0].mxu0
  %v1813 = vadd.f32 0.0, %v1812
  %v1814 = vpop.f32.mrb[0].mxu0
  %v1815 = vpop.f32.mrb[0].mxu0
  %v1816 = vadd.f32 0.0, %v1815
  %v1817 = vpop.f32.mrb[0].mxu0
  %1818 = vmatprep.mubr.bf16.mxu0 0
  %1819 = vmatmul.mubr.bf16.gmra.mrb[0].mxu0 %v1773
  %v1820 = vpop.f32.mrb[0].mxu0
  %v1821 = vadd.f32 0.0, %v1820
  %v1822 = vpop.f32.mrb[0].mxu0
  %v1823 = vpop.f32.mrb[0].mxu0
  %v1824 = vpop.f32.mrb[0].mxu0
  %1825 = vdwg.mxu0
  %v1826 = vpack.c.bf16 %v1754, %v1751
  %v1827 = vpack.c.bf16 %v1813, %v1759
  %v1828 = vpack.c.bf16 %v1821, %v1816
  %v1830 = vsel %vm287, %v1826, 0
  %v1833 = vsel %vm287, %v1827, 0
  %v1836 = vsel %vm287, %v1828, 0
  %v1839 = vsel %vm496, %v272, 0
  %1841 = vmatprep.subr.bf16.mxu0 0
  %1842 = vmatpush1.bf16.msra.mxu0 %v1839
  %1843 = vmatprep.subr.bf16.mxu0 0
  %1844 = vmatpush1.bf16.msra.mxu0 0
  %1845 = vmatprep.subr.bf16.mxu0 0
  %1846 = vmatpush1.bf16.msra.mxu0 0
  %1847 = vmatprep.subr.bf16.mxu0 0
  %1848 = vmatpush1.bf16.msra.mxu0 0
  %1849 = vmatprep.subr.bf16.mxu0 0
  %1850 = vmatpush1.bf16.msra.mxu0 0
  %1851 = vmatprep.subr.bf16.mxu0 0
  %1852 = vmatpush1.bf16.msra.mxu0 0
  %1853 = vmatprep.subr.bf16.mxu0 0
  %1854 = vmatpush1.bf16.msra.mxu0 0
  %1855 = vmatprep.subr.bf16.mxu0 0
  %1856 = vmatpush1.bf16.msra.mxu0 0
  %1857 = vmatprep.subr.bf16.mxu0 0
  %1858 = vmatpush1.bf16.msra.mxu0 0
  %1859 = vmatprep.subr.bf16.mxu0 0
  %1860 = vmatpush1.bf16.msra.mxu0 0
  %1861 = vmatprep.subr.bf16.mxu0 0
  %1862 = vmatpush1.bf16.msra.mxu0 0
  %1863 = vmatprep.subr.bf16.mxu0 0
  %1864 = vmatpush1.bf16.msra.mxu0 0
  %1865 = vmatprep.subr.bf16.mxu0 0
  %1866 = vmatpush1.bf16.msra.mxu0 0
  %1867 = vmatprep.subr.bf16.mxu0 0
  %1868 = vmatpush1.bf16.msra.mxu0 0
  %1869 = vmatprep.subr.bf16.mxu0 0
  %1870 = vmatpush1.bf16.msra.mxu0 0
  %1871 = vmatprep.subr.bf16.mxu0 0
  %1872 = vmatpush1.bf16.msra.mxu0 0
  %1873 = vmatprep.mubr.bf16.mxu0 0
  %1874 = vmatmul.mubr.bf16.gmra.mrb[0].mxu0 %v1830
  %v1875 = vpop.f32.mrb[0].mxu0
  %v1876 = vadd.f32 0.0, %v1875
  %v1877 = vpop.f32.mrb[0].mxu0
  %v1878 = vpop.f32.mrb[0].mxu0
  %v1879 = vadd.f32 0.0, %v1878
  %v1880 = vpop.f32.mrb[0].mxu0
  %1881 = vmatprep.mubr.bf16.mxu0 0
  %1882 = vmatmul.mubr.bf16.gmra.mrb[0].mxu0 %v1833
  %v1883 = vpop.f32.mrb[0].mxu0
  %v1884 = vadd.f32 0.0, %v1883
  %v1885 = vpop.f32.mrb[0].mxu0
  %v1886 = vpop.f32.mrb[0].mxu0
  %v1887 = vadd.f32 0.0, %v1886
  %v1888 = vpop.f32.mrb[0].mxu0
  %1889 = vmatprep.mubr.bf16.mxu0 0
  %1890 = vmatmul.mubr.bf16.gmra.mrb[0].mxu0 %v1836
  %v1891 = vpop.f32.mrb[0].mxu0
  %v1892 = vadd.f32 0.0, %v1891
  %v1893 = vpop.f32.mrb[0].mxu0
  %v1894 = vpop.f32.mrb[0].mxu0
  %v1895 = vadd.f32 0.0, %v1894
  %v1896 = vpop.f32.mrb[0].mxu0
  %1897 = vdwg.mxu0
  %v1898 = vadd.f32 %v1490, %v1876
  %v1899 = vadd.f32 %v1491, %v1879
  %v1900 = vadd.f32 %v1492, %v1884
  %v1901 = vadd.f32 %v1493, %v1887
  %v1902 = vadd.f32 %v1494, %v1892
  %v1903 = vadd.f32 %v1495, %v1895
  %v1904 = vld [vmem:[%s7] sm:$0x1]
  %v1906 = vlaneseq
  %v1907 = vshrl.u32 %v1906, 7
  %v1908 = vsub.s32 0, %v1907
  %v1909 = vrot.slane %v1904, %v1908
  %v1911 = vadd.f32 %v1898, %v1909
  %v1912 = vadd.f32 %v1899, %v1909
  %v1913 = vadd.f32 %v1900, %v1909
  %v1914 = vadd.f32 %v1901, %v1909
  %v1915 = vadd.f32 %v1902, %v1909
  %v1916 = vadd.f32 %v1903, %v1909
  %v1917 = vadd.f32 %v54, %v1911
  %v1918 = vadd.f32 %v55, %v1912
  %v1919 = vadd.f32 %v56, %v1913
  %v1920 = vadd.f32 %v57, %v1914
  %v1921 = vadd.f32 %v58, %v1915
  %v1922 = vadd.f32 %v59, %v1916
  %v1923 = vsel %vm65, %v1917, 0.0
  %1924 = vadd.xlane.f32.xlu0 %v1923
  %v1925 = vpop.xlane.xlu0 %1924
  %v1926 = vsel %vm65, %v1918, 0.0
  %1927 = vadd.xlane.f32.xlu0 %v1926
  %v1928 = vpop.xlane.xlu0 %1927
  %v1929 = vsel %vm65, %v1919, 0.0
  %1930 = vadd.xlane.f32.xlu0 %v1929
  %v1931 = vpop.xlane.xlu0 %1930
  %v1932 = vsel %vm65, %v1920, 0.0
  %1933 = vadd.xlane.f32.xlu0 %v1932
  %v1934 = vpop.xlane.xlu0 %1933
  %v1935 = vsel %vm65, %v1921, 0.0
  %1936 = vadd.xlane.f32.xlu0 %v1935
  %v1937 = vpop.xlane.xlu0 %1936
  %v1938 = vsel %vm65, %v1922, 0.0
  %1939 = vadd.xlane.f32.xlu0 %v1938
  %v1940 = vpop.xlane.xlu0 %1939
  %v1941 = vmul.f32 %v1925, %v84
  %v1942 = vmul.f32 %v1928, %v84
  %v1943 = vmul.f32 %v1931, %v84
  %v1944 = vmul.f32 %v1934, %v84
  %v1945 = vmul.f32 %v1937, %v84
  %v1946 = vmul.f32 %v1940, %v84
  %v1947 = vsub.f32 %v1917, %v1941
  %v1948 = vsub.f32 %v1918, %v1942
  %v1949 = vsub.f32 %v1919, %v1943
  %v1950 = vsub.f32 %v1920, %v1944
  %v1951 = vsub.f32 %v1921, %v1945
  %v1952 = vsub.f32 %v1922, %v1946
  %v1953 = vmul.f32 %v1947, %v1947
  %v1954 = vmul.f32 %v1948, %v1948
  %v1955 = vmul.f32 %v1949, %v1949
  %v1956 = vmul.f32 %v1950, %v1950
  %v1957 = vmul.f32 %v1951, %v1951
  %v1958 = vmul.f32 %v1952, %v1952
  %v1959 = vsel %vm65, %v1953, 0.0
  %1960 = vadd.xlane.f32.xlu0 %v1959
  %v1961 = vpop.xlane.xlu0 %1960
  %v1962 = vsel %vm65, %v1954, 0.0
  %1963 = vadd.xlane.f32.xlu0 %v1962
  %v1964 = vpop.xlane.xlu0 %1963
  %v1965 = vsel %vm65, %v1955, 0.0
  %1966 = vadd.xlane.f32.xlu0 %v1965
  %v1967 = vpop.xlane.xlu0 %1966
  %v1968 = vsel %vm65, %v1956, 0.0
  %1969 = vadd.xlane.f32.xlu0 %v1968
  %v1970 = vpop.xlane.xlu0 %1969
  %v1971 = vsel %vm65, %v1957, 0.0
  %1972 = vadd.xlane.f32.xlu0 %v1971
  %v1973 = vpop.xlane.xlu0 %1972
  %v1974 = vsel %vm65, %v1958, 0.0
  %1975 = vadd.xlane.f32.xlu0 %v1974
  %v1976 = vpop.xlane.xlu0 %1975
  %v1977 = vmul.f32 %v1961, %v84
  %v1978 = vmul.f32 %v1964, %v84
  %v1979 = vmul.f32 %v1967, %v84
  %v1980 = vmul.f32 %v1970, %v84
  %v1981 = vmul.f32 %v1973, %v84
  %v1982 = vmul.f32 %v1976, %v84
  %v1983 = vadd.f32 %v1977, 1e-06
  %v1984 = vadd.f32 %v1978, 1e-06
  %v1985 = vadd.f32 %v1979, 1e-06
  %v1986 = vadd.f32 %v1980, 1e-06
  %v1987 = vadd.f32 %v1981, 1e-06
  %v1988 = vadd.f32 %v1982, 1e-06
  %v1989 = vrsqrt.pop %v1983
  %v1990 = vrsqrt.pop %v1984
  %v1991 = vrsqrt.pop %v1985
  %v1992 = vrsqrt.pop %v1986
  %v1993 = vrsqrt.pop %v1987
  %v1994 = vrsqrt.pop %v1988
  %v1995 = vmul.f32 %v1947, %v1989
  %v1996 = vmul.f32 %v1948, %v1990
  %v1997 = vmul.f32 %v1949, %v1991
  %v1998 = vmul.f32 %v1950, %v1992
  %v1999 = vmul.f32 %v1951, %v1993
  %v2000 = vmul.f32 %v1952, %v1994
  %v2001 = vld [vmem:[%s8] sm:$0x1]
  %v2003 = vlaneseq
  %v2004 = vshrl.u32 %v2003, 7
  %v2005 = vsub.s32 0, %v2004
  %v2006 = vrot.slane %v2001, %v2005
  %v2008 = vmul.f32 %v1995, %v2006
  %v2009 = vmul.f32 %v1996, %v2006
  %v2010 = vmul.f32 %v1997, %v2006
  %v2011 = vmul.f32 %v1998, %v2006
  %v2012 = vmul.f32 %v1999, %v2006
  %v2013 = vmul.f32 %v2000, %v2006
  %v2014 = vld [vmem:[%s9] sm:$0x1]
  %v2016 = vlaneseq
  %v2017 = vshrl.u32 %v2016, 7
  %v2018 = vsub.s32 0, %v2017
  %v2019 = vrot.slane %v2014, %v2018
  %v2021 = vadd.f32 %v2008, %v2019
  %v2022 = vadd.f32 %v2009, %v2019
  %v2023 = vadd.f32 %v2010, %v2019
  %v2024 = vadd.f32 %v2011, %v2019
  %v2025 = vadd.f32 %v2012, %v2019
  %v2026 = vadd.f32 %v2013, %v2019
  %v2027 = vpack.c.bf16 %v2022, %v2021
  %v2028 = vpack.c.bf16 %v2024, %v2023
  %v2029 = vpack.c.bf16 %v2026, %v2025
  %v2030 = vld [vmem:[%s10] sm:$0xf]
  %v2031 = vld [vmem:[%s10 + $0x4] sm:$0xf]
  %v2032 = vld [vmem:[%s10 + $0x8] sm:$0xf]
  %v2033 = vld [vmem:[%s10 + $0xc] sm:$0xf]
  %v2034 = vld [vmem:[%s11] sm:$0x1]
  %v2036 = vlaneseq
  %v2037 = vshrl.u32 %v2036, 7
  %v2038 = vsub.s32 0, %v2037
  %v2039 = vrot.slane %v2034, %v2038
  %v2045 = vunpack.c.l.b16 %v2030
  %v2046 = vunpack.c.l.b16 %v2031
  %v2047 = vunpack.c.l.b16 %v2032
  %v2048 = vunpack.c.l.b16 %v2033
  %v2049 = vpack.c.b16 %v2046, %v2045
  %v2050 = vpack.c.b16 %v2048, %v2047
  %v2054 = vsel %vm65, %v2027, 0
  %v2057 = vsel %vm65, %v2028, 0
  %v2060 = vsel %vm65, %v2029, 0
  %2062 = vmatprep.subr.bf16.mxu0 0
  %2063 = vmatpush1.bf16.msra.mxu0 %v2049
  %2064 = vmatprep.subr.bf16.mxu0 0
  %2065 = vmatpush1.bf16.msra.mxu0 %v2050
  %2066 = vmatprep.subr.bf16.mxu0 0
  %2067 = vmatpush1.bf16.msra.mxu0 0
  %2068 = vmatprep.subr.bf16.mxu0 0
  %2069 = vmatpush1.bf16.msra.mxu0 0
  %2070 = vmatprep.subr.bf16.mxu0 0
  %2071 = vmatpush1.bf16.msra.mxu0 0
  %2072 = vmatprep.subr.bf16.mxu0 0
  %2073 = vmatpush1.bf16.msra.mxu0 0
  %2074 = vmatprep.subr.bf16.mxu0 0
  %2075 = vmatpush1.bf16.msra.mxu0 0
  %2076 = vmatprep.subr.bf16.mxu0 0
  %2077 = vmatpush1.bf16.msra.mxu0 0
  %2078 = vmatprep.subr.bf16.mxu0 0
  %2079 = vmatpush1.bf16.msra.mxu0 0
  %2080 = vmatprep.subr.bf16.mxu0 0
  %2081 = vmatpush1.bf16.msra.mxu0 0
  %2082 = vmatprep.subr.bf16.mxu0 0
  %2083 = vmatpush1.bf16.msra.mxu0 0
  %2084 = vmatprep.subr.bf16.mxu0 0
  %2085 = vmatpush1.bf16.msra.mxu0 0
  %2086 = vmatprep.subr.bf16.mxu0 0
  %2087 = vmatpush1.bf16.msra.mxu0 0
  %2088 = vmatprep.subr.bf16.mxu0 0
  %2089 = vmatpush1.bf16.msra.mxu0 0
  %2090 = vmatprep.subr.bf16.mxu0 0
  %2091 = vmatpush1.bf16.msra.mxu0 0
  %2092 = vmatprep.subr.bf16.mxu0 0
  %2093 = vmatpush1.bf16.msra.mxu0 0
  %2094 = vmatprep.mubr.bf16.mxu0 0
  %2095 = vmatmul.mubr.bf16.gmra.mrb[0].mxu0 %v2054
  %v2096 = vpop.f32.mrb[0].mxu0
  %v2097 = vadd.f32 %v2039, %v2096
  %v2098 = vpop.f32.mrb[0].mxu0
  %v2099 = vpop.f32.mrb[0].mxu0
  %v2100 = vadd.f32 %v2039, %v2099
  %v2101 = vpop.f32.mrb[0].mxu0
  %2102 = vmatprep.mubr.bf16.mxu0 0
  %2103 = vmatmul.mubr.bf16.gmra.mrb[0].mxu0 %v2057
  %v2104 = vpop.f32.mrb[0].mxu0
  %v2105 = vadd.f32 %v2039, %v2104
  %v2106 = vpop.f32.mrb[0].mxu0
  %v2107 = vpop.f32.mrb[0].mxu0
  %v2108 = vadd.f32 %v2039, %v2107
  %v2109 = vpop.f32.mrb[0].mxu0
  %2110 = vmatprep.mubr.bf16.mxu0 0
  %2111 = vmatmul.mubr.bf16.gmra.mrb[0].mxu0 %v2060
  %v2112 = vpop.f32.mrb[0].mxu0
  %v2113 = vadd.f32 %v2039, %v2112
  %v2114 = vpop.f32.mrb[0].mxu0
  %v2115 = vpop.f32.mrb[0].mxu0
  %v2116 = vadd.f32 %v2039, %v2115
  %v2117 = vpop.f32.mrb[0].mxu0
  %2118 = vdwg.mxu0
  %v2119 = vmul.f32 %v2097, %v2097
  %v2120 = vmul.f32 %v2100, %v2100
  %v2121 = vmul.f32 %v2105, %v2105
  %v2122 = vmul.f32 %v2108, %v2108
  %v2123 = vmul.f32 %v2113, %v2113
  %v2124 = vmul.f32 %v2116, %v2116
  %v2125 = vmul.f32 %v2097, %v2119
  %v2126 = vmul.f32 %v2100, %v2120
  %v2127 = vmul.f32 %v2105, %v2121
  %v2128 = vmul.f32 %v2108, %v2122
  %v2129 = vmul.f32 %v2113, %v2123
  %v2130 = vmul.f32 %v2116, %v2124
  %v2131 = vmul.f32 %v2125, 0.044715
  %v2132 = vmul.f32 %v2126, 0.044715
  %v2133 = vmul.f32 %v2127, 0.044715
  %v2134 = vmul.f32 %v2128, 0.044715
  %v2135 = vmul.f32 %v2129, 0.044715
  %v2136 = vmul.f32 %v2130, 0.044715
  %v2137 = vadd.f32 %v2097, %v2131
  %v2138 = vadd.f32 %v2100, %v2132
  %v2139 = vadd.f32 %v2105, %v2133
  %v2140 = vadd.f32 %v2108, %v2134
  %v2141 = vadd.f32 %v2113, %v2135
  %v2142 = vadd.f32 %v2116, %v2136
  %v2143 = vmul.f32 %v2137, 0.7978846
  %v2144 = vmul.f32 %v2138, 0.7978846
  %v2145 = vmul.f32 %v2139, 0.7978846
  %v2146 = vmul.f32 %v2140, 0.7978846
  %v2147 = vmul.f32 %v2141, 0.7978846
  %v2148 = vmul.f32 %v2142, 0.7978846
  %v2149 = vtanh.pop %v2143
  %v2150 = vtanh.pop %v2144
  %v2151 = vtanh.pop %v2145
  %v2152 = vtanh.pop %v2146
  %v2153 = vtanh.pop %v2147
  %v2154 = vtanh.pop %v2148
  %v2155 = vadd.f32 %v2149, 1.0
  %v2156 = vadd.f32 %v2150, 1.0
  %v2157 = vadd.f32 %v2151, 1.0
  %v2158 = vadd.f32 %v2152, 1.0
  %v2159 = vadd.f32 %v2153, 1.0
  %v2160 = vadd.f32 %v2154, 1.0
  %v2161 = vmul.f32 %v2155, 0.5
  %v2162 = vmul.f32 %v2156, 0.5
  %v2163 = vmul.f32 %v2157, 0.5
  %v2164 = vmul.f32 %v2158, 0.5
  %v2165 = vmul.f32 %v2159, 0.5
  %v2166 = vmul.f32 %v2160, 0.5
  %v2167 = vmul.f32 %v2097, %v2161
  %v2168 = vmul.f32 %v2100, %v2162
  %v2169 = vmul.f32 %v2105, %v2163
  %v2170 = vmul.f32 %v2108, %v2164
  %v2171 = vmul.f32 %v2113, %v2165
  %v2172 = vmul.f32 %v2116, %v2166
  %v2173 = vpack.c.bf16 %v2168, %v2167
  %v2174 = vpack.c.bf16 %v2170, %v2169
  %v2175 = vpack.c.bf16 %v2172, %v2171
  %v2176 = vld [vmem:[%s12] sm:$0xf]
  %v2177 = vld [vmem:[%s12 + $0x4] sm:$0xf]
  %v2178 = vld [vmem:[%s12 + $0x8] sm:$0xf]
  %v2179 = vld [vmem:[%s12 + $0xc] sm:$0xf]
  %v2180 = vld [vmem:[%s12 + $0x10] sm:$0xf]
  %v2181 = vld [vmem:[%s12 + $0x14] sm:$0xf]
  %v2182 = vld [vmem:[%s12 + $0x18] sm:$0xf]
  %v2183 = vld [vmem:[%s12 + $0x1c] sm:$0xf]
  %v2184 = vld [vmem:[%s12 + $0x20] sm:$0xf]
  %v2185 = vld [vmem:[%s12 + $0x24] sm:$0xf]
  %v2186 = vld [vmem:[%s12 + $0x28] sm:$0xf]
  %v2187 = vld [vmem:[%s12 + $0x2c] sm:$0xf]
  %v2188 = vld [vmem:[%s12 + $0x30] sm:$0xf]
  %v2189 = vld [vmem:[%s12 + $0x34] sm:$0xf]
  %v2190 = vld [vmem:[%s12 + $0x38] sm:$0xf]
  %v2191 = vld [vmem:[%s12 + $0x3c] sm:$0xf]
  %v2192 = vld [vmem:[%s13] sm:$0x1]
  %v2194 = vlaneseq
  %v2195 = vshrl.u32 %v2194, 7
  %v2196 = vsub.s32 0, %v2195
  %v2197 = vrot.slane %v2192, %v2196
  %v2215 = vunpack.c.l.b16 %v2176
  %v2216 = vunpack.c.l.b16 %v2177
  %v2217 = vunpack.c.l.b16 %v2178
  %v2218 = vunpack.c.l.b16 %v2179
  %v2219 = vunpack.c.l.b16 %v2180
  %v2220 = vunpack.c.l.b16 %v2181
  %v2221 = vunpack.c.l.b16 %v2182
  %v2222 = vunpack.c.l.b16 %v2183
  %v2223 = vunpack.c.l.b16 %v2184
  %v2224 = vunpack.c.l.b16 %v2185
  %v2225 = vunpack.c.l.b16 %v2186
  %v2226 = vunpack.c.l.b16 %v2187
  %v2227 = vunpack.c.l.b16 %v2188
  %v2228 = vunpack.c.l.b16 %v2189
  %v2229 = vunpack.c.l.b16 %v2190
  %v2230 = vunpack.c.l.b16 %v2191
  %v2231 = vpack.c.b16 %v2216, %v2215
  %v2232 = vpack.c.b16 %v2218, %v2217
  %v2233 = vpack.c.b16 %v2220, %v2219
  %v2234 = vpack.c.b16 %v2222, %v2221
  %v2235 = vpack.c.b16 %v2224, %v2223
  %v2236 = vpack.c.b16 %v2226, %v2225
  %v2237 = vpack.c.b16 %v2228, %v2227
  %v2238 = vpack.c.b16 %v2230, %v2229
  %2247 = vmatprep.subr.bf16.mxu0 0
  %2248 = vmatpush1.bf16.msra.mxu0 %v2231
  %2249 = vmatprep.subr.bf16.mxu0 0
  %2250 = vmatpush1.bf16.msra.mxu0 %v2232
  %2251 = vmatprep.subr.bf16.mxu0 0
  %2252 = vmatpush1.bf16.msra.mxu0 %v2233
  %2253 = vmatprep.subr.bf16.mxu0 0
  %2254 = vmatpush1.bf16.msra.mxu0 %v2234
  %2255 = vmatprep.subr.bf16.mxu0 0
  %2256 = vmatpush1.bf16.msra.mxu0 %v2235
  %2257 = vmatprep.subr.bf16.mxu0 0
  %2258 = vmatpush1.bf16.msra.mxu0 %v2236
  %2259 = vmatprep.subr.bf16.mxu0 0
  %2260 = vmatpush1.bf16.msra.mxu0 %v2237
  %2261 = vmatprep.subr.bf16.mxu0 0
  %2262 = vmatpush1.bf16.msra.mxu0 %v2238
  %2263 = vmatprep.subr.bf16.mxu0 0
  %2264 = vmatpush1.bf16.msra.mxu0 0
  %2265 = vmatprep.subr.bf16.mxu0 0
  %2266 = vmatpush1.bf16.msra.mxu0 0
  %2267 = vmatprep.subr.bf16.mxu0 0
  %2268 = vmatpush1.bf16.msra.mxu0 0
  %2269 = vmatprep.subr.bf16.mxu0 0
  %2270 = vmatpush1.bf16.msra.mxu0 0
  %2271 = vmatprep.subr.bf16.mxu0 0
  %2272 = vmatpush1.bf16.msra.mxu0 0
  %2273 = vmatprep.subr.bf16.mxu0 0
  %2274 = vmatpush1.bf16.msra.mxu0 0
  %2275 = vmatprep.subr.bf16.mxu0 0
  %2276 = vmatpush1.bf16.msra.mxu0 0
  %2277 = vmatprep.subr.bf16.mxu0 0
  %2278 = vmatpush1.bf16.msra.mxu0 0
  %2279 = vmatprep.mubr.bf16.mxu0 0
  %2280 = vmatmul.mubr.bf16.gmra.mrb[0].mxu0 %v2173
  %v2281 = vpop.f32.mrb[0].mxu0
  %v2282 = vadd.f32 %v2197, %v2281
  %v2283 = vpop.f32.mrb[0].mxu0
  %v2284 = vpop.f32.mrb[0].mxu0
  %v2285 = vadd.f32 %v2197, %v2284
  %v2286 = vpop.f32.mrb[0].mxu0
  %2287 = vmatprep.mubr.bf16.mxu0 0
  %2288 = vmatmul.mubr.bf16.gmra.mrb[0].mxu0 %v2174
  %v2289 = vpop.f32.mrb[0].mxu0
  %v2290 = vadd.f32 %v2197, %v2289
  %v2291 = vpop.f32.mrb[0].mxu0
  %v2292 = vpop.f32.mrb[0].mxu0
  %v2293 = vadd.f32 %v2197, %v2292
  %v2294 = vpop.f32.mrb[0].mxu0
  %2295 = vmatprep.mubr.bf16.mxu0 0
  %2296 = vmatmul.mubr.bf16.gmra.mrb[0].mxu0 %v2175
  %v2297 = vpop.f32.mrb[0].mxu0
  %v2298 = vadd.f32 %v2197, %v2297
  %v2299 = vpop.f32.mrb[0].mxu0
  %v2300 = vpop.f32.mrb[0].mxu0
  %v2301 = vadd.f32 %v2197, %v2300
  %v2302 = vpop.f32.mrb[0].mxu0
  %2303 = vdwg.mxu0
  %v2304 = vadd.f32 %v1917, %v2282
  %v2305 = vadd.f32 %v1918, %v2285
  %v2306 = vadd.f32 %v1919, %v2290
  %v2307 = vadd.f32 %v1920, %v2293
  %v2308 = vadd.f32 %v1921, %v2298
  %v2309 = vadd.f32 %v1922, %v2301
  %2310 = vst.msk [vmem:[%s16] sm:$0xff] %vm65, %v2304
  %2311 = vst.msk [vmem:[%s16 + $0x8] sm:$0xff] %vm65, %v2305
  %2312 = vst.msk [vmem:[%s16 + $0x10] sm:$0xff] %vm65, %v2306
  %2313 = vst.msk [vmem:[%s16 + $0x18] sm:$0xff] %vm65, %v2307
  %2314 = vst.msk [vmem:[%s16 + $0x20] sm:$0xff] %vm65, %v2308
  %2315 = vst.msk [vmem:[%s16 + $0x28] sm:$0xff] %vm65, %v2309
  // Predicated region
  $region62: #{transreid_forward.2} parent=0 // pred_check
    _
  $region63: #{transreid_forward.2} parent=0 // pred_check_branch
    %2317 = sbr.rel (0) target = $region65
  $region64: #{transreid_forward.2} parent=0 // pred_region
    _
  $region65: #{transreid_forward.2} parent=0 // pred_fallthru
    _
  // Predicated region
  $region66: #{transreid_forward.2} parent=0 // pred_check
    _
  $region67: #{transreid_forward.2} parent=0 // pred_check_branch
    %2319 = sbr.rel (0) target = $region69
  $region68: #{transreid_forward.2} parent=0 // pred_region
    _
  $region69: #{transreid_forward.2} parent=0 // pred_fallthru
    _

// kernel: transreid_forward.3
$region0: #{transreid_forward.3}
  #allocation0 [shape = 'u32[]', space=smem, size = 0x4, offset = 0x4, fixed_abs, tag = 'smem constant byte address 0x4 - core index']
  #allocation1 [shape = 'u32[144,128]{1,0:T(1,128)}', space=vmem, size = 0x12000, scoped, tag = 'internal scratch']
  #allocation2 [shape = 's32[1]{0}', space=sflag, size = 0x4, scoped, tag = 'scoped memory for transreid_forward.3']
  #allocation3 [shape = 'u8[512]{0}', space=smem, size = 0x200, scoped, tag = 'prefetched SMEM operand 0']
  %s0 = inlined_call_operand.vmem [shape: s32[5], index: 0, kind: input, shape index: {}]
  %s1 = inlined_call_operand.vmem [shape: f32[5,2,24,32], index: 1, kind: input, shape index: {}]
  %s2 = inlined_call_operand.vmem [shape: f32[1,32], index: 2, kind: input, shape index: {}]
  %s3 = inlined_call_operand.vmem [shape: f32[1,32], index: 3, kind: input, shape index: {}]
  %s4 = inlined_call_operand.vmem [shape: bf16[32,96], index: 4, kind: input, shape index: {}]
  %s5 = inlined_call_operand.vmem [shape: f32[1,96], index: 5, kind: input, shape index: {}]
  %s6 = inlined_call_operand.vmem [shape: bf16[32,32], index: 6, kind: input, shape index: {}]
  %s7 = inlined_call_operand.vmem [shape: f32[1,32], index: 7, kind: input, shape index: {}]
  %s8 = inlined_call_operand.vmem [shape: f32[1,32], index: 8, kind: input, shape index: {}]
  %s9 = inlined_call_operand.vmem [shape: f32[1,32], index: 9, kind: input, shape index: {}]
  %s10 = inlined_call_operand.vmem [shape: bf16[32,128], index: 10, kind: input, shape index: {}]
  %s11 = inlined_call_operand.vmem [shape: f32[1,128], index: 11, kind: input, shape index: {}]
  %s12 = inlined_call_operand.vmem [shape: bf16[128,32], index: 12, kind: input, shape index: {}]
  %s13 = inlined_call_operand.vmem [shape: f32[1,32], index: 13, kind: input, shape index: {}]
  %s14 = inlined_call_operand.vmem [shape: f32[1,32], index: 14, kind: input, shape index: {}]
  %s15 = inlined_call_operand.vmem [shape: f32[1,32], index: 15, kind: input, shape index: {}]
  %s16 = inlined_call_operand.vmem [shape: f32[5,2,24,32], index: 16, kind: output, shape index: {}]
  %s17 = sld [smem:[#allocation0]]
  $region93: #{transreid_forward.3} parent=0
    _
  %s19 = ssub.s32 1, %s17
  %s20 = scalar_select 0, %s19, %s17
  %s21 = sshll.u32 %s0, 4
  %s22 = int_to_ptr.vmem [resolvable:$true] %s21
  %24 = dma.vmem_to_smem %s22, 16, [#allocation3], [#allocation2]
  %25 = dma.done [#allocation2], 16
  %26 = sfence
  loop: start=0, step=1, limit=7
  $region2: #{transreid_forward.3} parent=0 // loop_pre_header
    _
  $region3: #{transreid_forward.3} parent=0 // loop_header
    %s28 = sphi 0, %s32
    %p29 = scmp.ge.s32.totalorder %s28, 7
    %s38 = sphi 0, %s40
    %s41 = sphi 0, %s38
    %s42 = sphi 0, %s41
    %s58 = sphi 0, %s42
    %s62 = sphi 0, %s62
    %s64 = sphi 0, %s62
    %s65 = sphi 0, %s64
    %s79 = sphi 0, %s65
    %s83 = sphi 0, %s83
    %s85 = sphi 0, %s83
    %s86 = sphi 0, %s85
    %s100 = sphi 0, %s86
    %s104 = sphi 0, %s104
    %s106 = sphi 0, %s104
    %s107 = sphi 0, %s106
    %s121 = sphi 0, %s107
    %s125 = sphi 0, %s125
    %s127 = sphi 0, %s125
    %s128 = sphi 0, %s127
    %s142 = sphi 0, %s128
    %s146 = sphi 0, %s146
    %s148 = sphi 0, %s146
    %s149 = sphi 0, %s148
    %s163 = sphi 0, %s149
    %s167 = sphi 0, %s167
    %s169 = sphi 0, %s167
    %s170 = sphi 0, %s169
    %s184 = sphi 0, %s170
    %s188 = sphi 0, %s188
    %s190 = sphi 0, %s188
    %s191 = sphi 0, %s190
    %s205 = sphi 0, %s191
    %s209 = sphi 0, %s209
    %s211 = sphi 0, %s209
    %s212 = sphi 0, %s211
    %s226 = sphi 0, %s212
    %s230 = sphi 0, %s230
    %s232 = sphi 0, %s230
    %s233 = sphi 0, %s232
    %s247 = sphi 0, %s233
    %s251 = sphi 0, %s251
    %s253 = sphi 0, %s251
    %s254 = sphi 0, %s253
    %s268 = sphi 0, %s254
    %s272 = sphi 0, %s272
    %s274 = sphi 0, %s272
    %s275 = sphi 0, %s274
    %s289 = sphi 0, %s275
    %s293 = sphi 0, %s293
    %s295 = sphi 0, %s293
    %s296 = sphi 0, %s295
    %s310 = sphi 0, %s296
    %s314 = sphi 0, %s314
    %s316 = sphi 0, %s314
    %s317 = sphi 0, %s316
    %s331 = sphi 0, %s317
    %s335 = sphi 0, %s335
    %s337 = sphi 0, %s335
    %s338 = sphi 0, %s337
    %s352 = sphi 0, %s338
    %s358 = sphi 0, %s360
    %s361 = sphi 0, %s358
    %s362 = sphi 0, %s361
    %s378 = sphi 0, %s362
  $region4: #{transreid_forward.3} parent=0 // loop_header_branch
    %31 = sbr.rel (%p29) target = $region8
  $region5: #{transreid_forward.3} parent=0 // loop_body
    %s33 = ssub.s32 %s28, 1
    %s34 = ssub.s32 %s28, 2
    %s35 = sadd.s32 %s28, 1
    %s36 = ssub.s32 %s28, %s35
    %p37 = scmp.eq.s32.totalorder %s36, 0
    %s39 = sadd.s32 %s38, 1
    %s40 = scalar_select %p37, %s38, %s39
    %p43 = pneg %p37
    %p44 = scmp.eq.s32.totalorder %s28, 4
    %p45 = por %p43, %p44
    %p46 = scmp.ne.s32.totalorder %s38, %s41
    %p47 = scmp.eq.s32.totalorder %s28, 0
    %p48 = por %p46, %p47
    %p49 = scmp.ne.s32.totalorder %s38, %s41
    %p50 = scmp.eq.s32.totalorder %s33, 4
    %p51 = por %p49, %p50
    %p52 = scmp.ne.s32.totalorder %s41, %s42
    %p53 = scmp.eq.s32.totalorder %s33, 0
    %p54 = por %p52, %p53
    %p55 = scmp.ne.s32.totalorder %s41, %s42
    %p56 = scmp.eq.s32.totalorder %s34, 4
    %p57 = por %p55, %p56
    %p59 = scmp.ne.s32.totalorder %s42, %s58
    %p60 = scmp.eq.s32.totalorder %s34, 0
    %p61 = por %p59, %p60
    %s63 = sadd.s32 %s62, 1
    %p66 = scmp.eq.s32.totalorder %s28, 4
    %p67 = scmp.ne.s32.totalorder %s62, %s64
    %p68 = scmp.eq.s32.totalorder %s28, 0
    %p69 = por %p67, %p68
    %p70 = scmp.ne.s32.totalorder %s62, %s64
    %p71 = scmp.eq.s32.totalorder %s33, 4
    %p72 = por %p70, %p71
    %p73 = scmp.ne.s32.totalorder %s64, %s65
    %p74 = scmp.eq.s32.totalorder %s33, 0
    %p75 = por %p73, %p74
    %p76 = scmp.ne.s32.totalorder %s64, %s65
    %p77 = scmp.eq.s32.totalorder %s34, 4
    %p78 = por %p76, %p77
    %p80 = scmp.ne.s32.totalorder %s65, %s79
    %p81 = scmp.eq.s32.totalorder %s34, 0
    %p82 = por %p80, %p81
    %s84 = sadd.s32 %s83, 1
    %p87 = scmp.eq.s32.totalorder %s28, 4
    %p88 = scmp.ne.s32.totalorder %s83, %s85
    %p89 = scmp.eq.s32.totalorder %s28, 0
    %p90 = por %p88, %p89
    %p91 = scmp.ne.s32.totalorder %s83, %s85
    %p92 = scmp.eq.s32.totalorder %s33, 4
    %p93 = por %p91, %p92
    %p94 = scmp.ne.s32.totalorder %s85, %s86
    %p95 = scmp.eq.s32.totalorder %s33, 0
    %p96 = por %p94, %p95
    %p97 = scmp.ne.s32.totalorder %s85, %s86
    %p98 = scmp.eq.s32.totalorder %s34, 4
    %p99 = por %p97, %p98
    %p101 = scmp.ne.s32.totalorder %s86, %s100
    %p102 = scmp.eq.s32.totalorder %s34, 0
    %p103 = por %p101, %p102
    %s105 = sadd.s32 %s104, 1
    %p108 = scmp.eq.s32.totalorder %s28, 4
    %p109 = scmp.ne.s32.totalorder %s104, %s106
    %p110 = scmp.eq.s32.totalorder %s28, 0
    %p111 = por %p109, %p110
    %p112 = scmp.ne.s32.totalorder %s104, %s106
    %p113 = scmp.eq.s32.totalorder %s33, 4
    %p114 = por %p112, %p113
    %p115 = scmp.ne.s32.totalorder %s106, %s107
    %p116 = scmp.eq.s32.totalorder %s33, 0
    %p117 = por %p115, %p116
    %p118 = scmp.ne.s32.totalorder %s106, %s107
    %p119 = scmp.eq.s32.totalorder %s34, 4
    %p120 = por %p118, %p119
    %p122 = scmp.ne.s32.totalorder %s107, %s121
    %p123 = scmp.eq.s32.totalorder %s34, 0
    %p124 = por %p122, %p123
    %s126 = sadd.s32 %s125, 1
    %p129 = scmp.eq.s32.totalorder %s28, 4
    %p130 = scmp.ne.s32.totalorder %s125, %s127
    %p131 = scmp.eq.s32.totalorder %s28, 0
    %p132 = por %p130, %p131
    %p133 = scmp.ne.s32.totalorder %s125, %s127
    %p134 = scmp.eq.s32.totalorder %s33, 4
    %p135 = por %p133, %p134
    %p136 = scmp.ne.s32.totalorder %s127, %s128
    %p137 = scmp.eq.s32.totalorder %s33, 0
    %p138 = por %p136, %p137
    %p139 = scmp.ne.s32.totalorder %s127, %s128
    %p140 = scmp.eq.s32.totalorder %s34, 4
    %p141 = por %p139, %p140
    %p143 = scmp.ne.s32.totalorder %s128, %s142
    %p144 = scmp.eq.s32.totalorder %s34, 0
    %p145 = por %p143, %p144
    %s147 = sadd.s32 %s146, 1
    %p150 = scmp.eq.s32.totalorder %s28, 4
    %p151 = scmp.ne.s32.totalorder %s146, %s148
    %p152 = scmp.eq.s32.totalorder %s28, 0
    %p153 = por %p151, %p152
    %p154 = scmp.ne.s32.totalorder %s146, %s148
    %p155 = scmp.eq.s32.totalorder %s33, 4
    %p156 = por %p154, %p155
    %p157 = scmp.ne.s32.totalorder %s148, %s149
    %p158 = scmp.eq.s32.totalorder %s33, 0
    %p159 = por %p157, %p158
    %p160 = scmp.ne.s32.totalorder %s148, %s149
    %p161 = scmp.eq.s32.totalorder %s34, 4
    %p162 = por %p160, %p161
    %p164 = scmp.ne.s32.totalorder %s149, %s163
    %p165 = scmp.eq.s32.totalorder %s34, 0
    %p166 = por %p164, %p165
    %s168 = sadd.s32 %s167, 1
    %p171 = scmp.eq.s32.totalorder %s28, 4
    %p172 = scmp.ne.s32.totalorder %s167, %s169
    %p173 = scmp.eq.s32.totalorder %s28, 0
    %p174 = por %p172, %p173
    %p175 = scmp.ne.s32.totalorder %s167, %s169
    %p176 = scmp.eq.s32.totalorder %s33, 4
    %p177 = por %p175, %p176
    %p178 = scmp.ne.s32.totalorder %s169, %s170
    %p179 = scmp.eq.s32.totalorder %s33, 0
    %p180 = por %p178, %p179
    %p181 = scmp.ne.s32.totalorder %s169, %s170
    %p182 = scmp.eq.s32.totalorder %s34, 4
    %p183 = por %p181, %p182
    %p185 = scmp.ne.s32.totalorder %s170, %s184
    %p186 = scmp.eq.s32.totalorder %s34, 0
    %p187 = por %p185, %p186
    %s189 = sadd.s32 %s188, 1
    %p192 = scmp.eq.s32.totalorder %s28, 4
    %p193 = scmp.ne.s32.totalorder %s188, %s190
    %p194 = scmp.eq.s32.totalorder %s28, 0
    %p195 = por %p193, %p194
    %p196 = scmp.ne.s32.totalorder %s188, %s190
    %p197 = scmp.eq.s32.totalorder %s33, 4
    %p198 = por %p196, %p197
    %p199 = scmp.ne.s32.totalorder %s190, %s191
    %p200 = scmp.eq.s32.totalorder %s33, 0
    %p201 = por %p199, %p200
    %p202 = scmp.ne.s32.totalorder %s190, %s191
    %p203 = scmp.eq.s32.totalorder %s34, 4
    %p204 = por %p202, %p203
    %p206 = scmp.ne.s32.totalorder %s191, %s205
    %p207 = scmp.eq.s32.totalorder %s34, 0
    %p208 = por %p206, %p207
    %s210 = sadd.s32 %s209, 1
    %p213 = scmp.eq.s32.totalorder %s28, 4
    %p214 = scmp.ne.s32.totalorder %s209, %s211
    %p215 = scmp.eq.s32.totalorder %s28, 0
    %p216 = por %p214, %p215
    %p217 = scmp.ne.s32.totalorder %s209, %s211
    %p218 = scmp.eq.s32.totalorder %s33, 4
    %p219 = por %p217, %p218
    %p220 = scmp.ne.s32.totalorder %s211, %s212
    %p221 = scmp.eq.s32.totalorder %s33, 0
    %p222 = por %p220, %p221
    %p223 = scmp.ne.s32.totalorder %s211, %s212
    %p224 = scmp.eq.s32.totalorder %s34, 4
    %p225 = por %p223, %p224
    %p227 = scmp.ne.s32.totalorder %s212, %s226
    %p228 = scmp.eq.s32.totalorder %s34, 0
    %p229 = por %p227, %p228
    %s231 = sadd.s32 %s230, 1
    %p234 = scmp.eq.s32.totalorder %s28, 4
    %p235 = scmp.ne.s32.totalorder %s230, %s232
    %p236 = scmp.eq.s32.totalorder %s28, 0
    %p237 = por %p235, %p236
    %p238 = scmp.ne.s32.totalorder %s230, %s232
    %p239 = scmp.eq.s32.totalorder %s33, 4
    %p240 = por %p238, %p239
    %p241 = scmp.ne.s32.totalorder %s232, %s233
    %p242 = scmp.eq.s32.totalorder %s33, 0
    %p243 = por %p241, %p242
    %p244 = scmp.ne.s32.totalorder %s232, %s233
    %p245 = scmp.eq.s32.totalorder %s34, 4
    %p246 = por %p244, %p245
    %p248 = scmp.ne.s32.totalorder %s233, %s247
    %p249 = scmp.eq.s32.totalorder %s34, 0
    %p250 = por %p248, %p249
    %s252 = sadd.s32 %s251, 1
    %p255 = scmp.eq.s32.totalorder %s28, 4
    %p256 = scmp.ne.s32.totalorder %s251, %s253
    %p257 = scmp.eq.s32.totalorder %s28, 0
    %p258 = por %p256, %p257
    %p259 = scmp.ne.s32.totalorder %s251, %s253
    %p260 = scmp.eq.s32.totalorder %s33, 4
    %p261 = por %p259, %p260
    %p262 = scmp.ne.s32.totalorder %s253, %s254
    %p263 = scmp.eq.s32.totalorder %s33, 0
    %p264 = por %p262, %p263
    %p265 = scmp.ne.s32.totalorder %s253, %s254
    %p266 = scmp.eq.s32.totalorder %s34, 4
    %p267 = por %p265, %p266
    %p269 = scmp.ne.s32.totalorder %s254, %s268
    %p270 = scmp.eq.s32.totalorder %s34, 0
    %p271 = por %p269, %p270
    %s273 = sadd.s32 %s272, 1
    %p276 = scmp.eq.s32.totalorder %s28, 4
    %p277 = scmp.ne.s32.totalorder %s272, %s274
    %p278 = scmp.eq.s32.totalorder %s28, 0
    %p279 = por %p277, %p278
    %p280 = scmp.ne.s32.totalorder %s272, %s274
    %p281 = scmp.eq.s32.totalorder %s33, 4
    %p282 = por %p280, %p281
    %p283 = scmp.ne.s32.totalorder %s274, %s275
    %p284 = scmp.eq.s32.totalorder %s33, 0
    %p285 = por %p283, %p284
    %p286 = scmp.ne.s32.totalorder %s274, %s275
    %p287 = scmp.eq.s32.totalorder %s34, 4
    %p288 = por %p286, %p287
    %p290 = scmp.ne.s32.totalorder %s275, %s289
    %p291 = scmp.eq.s32.totalorder %s34, 0
    %p292 = por %p290, %p291
    %s294 = sadd.s32 %s293, 1
    %p297 = scmp.eq.s32.totalorder %s28, 4
    %p298 = scmp.ne.s32.totalorder %s293, %s295
    %p299 = scmp.eq.s32.totalorder %s28, 0
    %p300 = por %p298, %p299
    %p301 = scmp.ne.s32.totalorder %s293, %s295
    %p302 = scmp.eq.s32.totalorder %s33, 4
    %p303 = por %p301, %p302
    %p304 = scmp.ne.s32.totalorder %s295, %s296
    %p305 = scmp.eq.s32.totalorder %s33, 0
    %p306 = por %p304, %p305
    %p307 = scmp.ne.s32.totalorder %s295, %s296
    %p308 = scmp.eq.s32.totalorder %s34, 4
    %p309 = por %p307, %p308
    %p311 = scmp.ne.s32.totalorder %s296, %s310
    %p312 = scmp.eq.s32.totalorder %s34, 0
    %p313 = por %p311, %p312
    %s315 = sadd.s32 %s314, 1
    %p318 = scmp.eq.s32.totalorder %s28, 4
    %p319 = scmp.ne.s32.totalorder %s314, %s316
    %p320 = scmp.eq.s32.totalorder %s28, 0
    %p321 = por %p319, %p320
    %p322 = scmp.ne.s32.totalorder %s314, %s316
    %p323 = scmp.eq.s32.totalorder %s33, 4
    %p324 = por %p322, %p323
    %p325 = scmp.ne.s32.totalorder %s316, %s317
    %p326 = scmp.eq.s32.totalorder %s33, 0
    %p327 = por %p325, %p326
    %p328 = scmp.ne.s32.totalorder %s316, %s317
    %p329 = scmp.eq.s32.totalorder %s34, 4
    %p330 = por %p328, %p329
    %p332 = scmp.ne.s32.totalorder %s317, %s331
    %p333 = scmp.eq.s32.totalorder %s34, 0
    %p334 = por %p332, %p333
    %s336 = sadd.s32 %s335, 1
    %p339 = scmp.eq.s32.totalorder %s28, 4
    %p340 = scmp.ne.s32.totalorder %s335, %s337
    %p341 = scmp.eq.s32.totalorder %s28, 0
    %p342 = por %p340, %p341
    %p343 = scmp.ne.s32.totalorder %s335, %s337
    %p344 = scmp.eq.s32.totalorder %s33, 4
    %p345 = por %p343, %p344
    %p346 = scmp.ne.s32.totalorder %s337, %s338
    %p347 = scmp.eq.s32.totalorder %s33, 0
    %p348 = por %p346, %p347
    %p349 = scmp.ne.s32.totalorder %s337, %s338
    %p350 = scmp.eq.s32.totalorder %s34, 4
    %p351 = por %p349, %p350
    %p353 = scmp.ne.s32.totalorder %s338, %s352
    %p354 = scmp.eq.s32.totalorder %s34, 0
    %p355 = por %p353, %p354
    %s356 = ssub.s32 %s28, %s35
    %p357 = scmp.eq.s32.totalorder %s356, 0
    %s359 = sadd.s32 %s358, 1
    %s360 = scalar_select %p357, %s358, %s359
    %p363 = pneg %p357
    %p364 = scmp.eq.s32.totalorder %s28, 4
    %p365 = por %p363, %p364
    %p366 = scmp.ne.s32.totalorder %s358, %s361
    %p367 = scmp.eq.s32.totalorder %s28, 0
    %p368 = por %p366, %p367
    %p369 = scmp.ne.s32.totalorder %s358, %s361
    %p370 = scmp.eq.s32.totalorder %s33, 4
    %p371 = por %p369, %p370
    %p372 = scmp.ne.s32.totalorder %s361, %s362
    %p373 = scmp.eq.s32.totalorder %s33, 0
    %p374 = por %p372, %p373
    %p375 = scmp.ne.s32.totalorder %s361, %s362
    %p376 = scmp.eq.s32.totalorder %s34, 4
    %p377 = por %p375, %p376
    %p379 = scmp.ne.s32.totalorder %s362, %s378
    %p380 = scmp.eq.s32.totalorder %s34, 0
    %p381 = por %p379, %p380
    %p382 = scmp.le.s32.totalorder 1, %s28
    %p383 = scmp.lt.s32.totalorder %s28, 6
    %p384 = pnand %p382, %p383
    %p385 = pneg %p384
    // Predicated region
    $region9: #{transreid_forward.3} parent=5 // pred_check
      _
    $region10: #{transreid_forward.3} parent=5 // pred_check_branch
      %387 = sbr.rel (%p384) target = $region12
    $region11: #{transreid_forward.3} parent=5 // pred_region
      %s388 = ssub.s32 %s28, 1
      // Predicated region
      $region13: #{transreid_forward.3} parent=11 // pred_check
        %p389 = pneg %p75
      $region14: #{transreid_forward.3} parent=11 // pred_check_branch
        %391 = sbr.rel (%p389) target = $region16
      $region15: #{transreid_forward.3} parent=11 // pred_region
        _
      $region16: #{transreid_forward.3} parent=11 // pred_fallthru
        _
      // Predicated region
      $region17: #{transreid_forward.3} parent=11 // pred_check
        %p392 = pneg %p96
      $region18: #{transreid_forward.3} parent=11 // pred_check_branch
        %394 = sbr.rel (%p392) target = $region20
      $region19: #{transreid_forward.3} parent=11 // pred_region
        _
      $region20: #{transreid_forward.3} parent=11 // pred_fallthru
        _
      // Predicated region
      $region21: #{transreid_forward.3} parent=11 // pred_check
        %p395 = pneg %p117
      $region22: #{transreid_forward.3} parent=11 // pred_check_branch
        %397 = sbr.rel (%p395) target = $region24
      $region23: #{transreid_forward.3} parent=11 // pred_region
        _
      $region24: #{transreid_forward.3} parent=11 // pred_fallthru
        _
      // Predicated region
      $region25: #{transreid_forward.3} parent=11 // pred_check
        %p398 = pneg %p138
      $region26: #{transreid_forward.3} parent=11 // pred_check_branch
        %400 = sbr.rel (%p398) target = $region28
      $region27: #{transreid_forward.3} parent=11 // pred_region
        _
      $region28: #{transreid_forward.3} parent=11 // pred_fallthru
        _
      // Predicated region
      $region29: #{transreid_forward.3} parent=11 // pred_check
        %p401 = pneg %p159
      $region30: #{transreid_forward.3} parent=11 // pred_check_branch
        %403 = sbr.rel (%p401) target = $region32
      $region31: #{transreid_forward.3} parent=11 // pred_region
        _
      $region32: #{transreid_forward.3} parent=11 // pred_fallthru
        _
      // Predicated region
      $region33: #{transreid_forward.3} parent=11 // pred_check
        %p404 = pneg %p180
      $region34: #{transreid_forward.3} parent=11 // pred_check_branch
        %406 = sbr.rel (%p404) target = $region36
      $region35: #{transreid_forward.3} parent=11 // pred_region
        _
      $region36: #{transreid_forward.3} parent=11 // pred_fallthru
        _
      // Predicated region
      $region37: #{transreid_forward.3} parent=11 // pred_check
        %p407 = pneg %p201
      $region38: #{transreid_forward.3} parent=11 // pred_check_branch
        %409 = sbr.rel (%p407) target = $region40
      $region39: #{transreid_forward.3} parent=11 // pred_region
        _
      $region40: #{transreid_forward.3} parent=11 // pred_fallthru
        _
      // Predicated region
      $region41: #{transreid_forward.3} parent=11 // pred_check
        %p410 = pneg %p222
      $region42: #{transreid_forward.3} parent=11 // pred_check_branch
        %412 = sbr.rel (%p410) target = $region44
      $region43: #{transreid_forward.3} parent=11 // pred_region
        _
      $region44: #{transreid_forward.3} parent=11 // pred_fallthru
        _
      // Predicated region
      $region45: #{transreid_forward.3} parent=11 // pred_check
        %p413 = pneg %p243
      $region46: #{transreid_forward.3} parent=11 // pred_check_branch
        %415 = sbr.rel (%p413) target = $region48
      $region47: #{transreid_forward.3} parent=11 // pred_region
        _
      $region48: #{transreid_forward.3} parent=11 // pred_fallthru
        _
      // Predicated region
      $region49: #{transreid_forward.3} parent=11 // pred_check
        %p416 = pneg %p264
      $region50: #{transreid_forward.3} parent=11 // pred_check_branch
        %418 = sbr.rel (%p416) target = $region52
      $region51: #{transreid_forward.3} parent=11 // pred_region
        _
      $region52: #{transreid_forward.3} parent=11 // pred_fallthru
        _
      // Predicated region
      $region53: #{transreid_forward.3} parent=11 // pred_check
        %p419 = pneg %p285
      $region54: #{transreid_forward.3} parent=11 // pred_check_branch
        %421 = sbr.rel (%p419) target = $region56
      $region55: #{transreid_forward.3} parent=11 // pred_region
        _
      $region56: #{transreid_forward.3} parent=11 // pred_fallthru
        _
      // Predicated region
      $region57: #{transreid_forward.3} parent=11 // pred_check
        %p422 = pneg %p306
      $region58: #{transreid_forward.3} parent=11 // pred_check_branch
        %424 = sbr.rel (%p422) target = $region60
      $region59: #{transreid_forward.3} parent=11 // pred_region
        _
      $region60: #{transreid_forward.3} parent=11 // pred_fallthru
        _
      // Predicated region
      $region61: #{transreid_forward.3} parent=11 // pred_check
        %p425 = pneg %p327
      $region62: #{transreid_forward.3} parent=11 // pred_check_branch
        %427 = sbr.rel (%p425) target = $region64
      $region63: #{transreid_forward.3} parent=11 // pred_region
        _
      $region64: #{transreid_forward.3} parent=11 // pred_fallthru
        _
      // Predicated region
      $region65: #{transreid_forward.3} parent=11 // pred_check
        %p428 = pneg %p348
      $region66: #{transreid_forward.3} parent=11 // pred_check_branch
        %430 = sbr.rel (%p428) target = $region68
      $region67: #{transreid_forward.3} parent=11 // pred_region
        _
      $region68: #{transreid_forward.3} parent=11 // pred_fallthru
        _
    $region12: #{transreid_forward.3} parent=5 // pred_fallthru
      _
    %p431 = scmp.lt.s32.totalorder %s28, 5
    // Predicated region
    $region69: #{transreid_forward.3} parent=5 // pred_check
      %p432 = pneg %p431
    $region70: #{transreid_forward.3} parent=5 // pred_check_branch
      %434 = sbr.rel (%p432) target = $region72
    $region71: #{transreid_forward.3} parent=5 // pred_region
      // Predicated region
      $region73: #{transreid_forward.3} parent=71 // pred_check
        %p435 = pneg %p48
      $region74: #{transreid_forward.3} parent=71 // pred_check_branch
        %437 = sbr.rel (%p435) target = $region76
      $region75: #{transreid_forward.3} parent=71 // pred_region
        %p438 = scmp.lt.s32.totalorder %s28, 4
        %s439 = scalar_select %p438, %s28, 4
        %s440 = smul.addr %s439, 6
        %s441 = smul.addr %s440, 8
        %s442 = scalar_lea.vmem %s1, %s441
      $region76: #{transreid_forward.3} parent=71 // pred_fallthru
        _
    $region72: #{transreid_forward.3} parent=5 // pred_fallthru
      _
    %p443 = scmp.le.s32.totalorder 1, %s28
    %p444 = scmp.lt.s32.totalorder %s28, 6
    %p445 = pnand %p443, %p444
    %p446 = pneg %p445
    // Predicated region
    $region77: #{transreid_forward.3} parent=5 // pred_check
      _
    $region78: #{transreid_forward.3} parent=5 // pred_check_branch
      %448 = sbr.rel (%p445) target = $region80
    $region79: #{transreid_forward.3} parent=5 // pred_region
      %s449 = ssub.s32 %s28, 1
      %p450 = scmp.lt.s32.totalorder %s33, 4
      %s451 = scalar_select %p450, %s33, 4
      %s452 = smul.addr %s451, 6
      %s453 = smul.addr %s452, 8
      %s454 = scalar_lea.vmem %s1, %s453
      %p455 = pneg %p54
      %p456 = pneg %p51
      %p457 = pneg %p75
      %p458 = pneg %p72
      %p459 = pneg %p96
      %p460 = pneg %p93
      %p461 = pneg %p117
      %p462 = pneg %p114
      %p463 = pneg %p138
      %p464 = pneg %p135
      %p465 = pneg %p159
      %p466 = pneg %p156
      %p467 = pneg %p180
      %p468 = pneg %p177
      %p469 = pneg %p201
      %p470 = pneg %p198
      %p471 = pneg %p222
      %p472 = pneg %p219
      %p473 = pneg %p243
      %p474 = pneg %p240
      %p475 = pneg %p264
      %p476 = pneg %p261
      %p477 = pneg %p285
      %p478 = pneg %p282
      %p479 = pneg %p306
      %p480 = pneg %p303
      %p481 = pneg %p327
      %p482 = pneg %p324
      %p483 = pneg %p348
      %p484 = pneg %p345
      %p485 = pneg %p374
      %p486 = pneg %p371
      %p487 = scmp.lt.s32.totalorder %s33, 4
      %s488 = scalar_select %p487, %s33, 4
      %s489 = smul.addr %s488, 6
      %s490 = smul.addr %s489, 8
      %s491 = scalar_lea.vmem %s16, %s490
      %p492 = scmp.lt.s32.totalorder %s33, 4
      %s493 = scalar_select %p492, %s33, 4
      %s494 = smul.addr %s493, 6
      %s495 = smul.addr %s494, 8
      %s496 = scalar_lea.vmem %s1, %s495
      %p497 = scmp.lt.s32.totalorder %s33, 4
      %s498 = scalar_select %p497, %s33, 4
      %s499 = smul.addr %s498, 6
      %s500 = smul.addr %s499, 8
      %s501 = scalar_lea.vmem %s16, %s500
      %s503 = sld [smem:[#allocation3 + %s33]]
      %v504 = vld [vmem:[%s496] sm:$0xff]
      %v505 = vld [vmem:[%s496 + $0x8] sm:$0xff]
      %v506 = vld [vmem:[%s496 + $0x10] sm:$0xff]
      %v507 = vld [vmem:[%s496 + $0x18] sm:$0xff]
      %v508 = vld [vmem:[%s496 + $0x20] sm:$0xff]
      %v509 = vld [vmem:[%s496 + $0x28] sm:$0xff]
      %v510 = vlaneseq
      %v511 = vand.u32 %v510, 127
      %v512 = vstv %s503
      %vm513 = vcmp.lt.s32.totalorder %v511, %v512
      %v514 = vsel %vm513, 0.0, -1e+30
      %vm515 = vcmask 261120
      %v516 = vsel %vm515, %v504, 0.0
      %517 = vadd.xlane.f32.xlu0 %v516
      %v518 = vpop.xlane.xlu0 %517
      %v519 = vsel %vm515, %v505, 0.0
      %520 = vadd.xlane.f32.xlu0 %v519
      %v521 = vpop.xlane.xlu0 %520
      %v522 = vsel %vm515, %v506, 0.0
      %523 = vadd.xlane.f32.xlu0 %v522
      %v524 = vpop.xlane.xlu0 %523
      %v525 = vsel %vm515, %v507, 0.0
      %526 = vadd.xlane.f32.xlu0 %v525
      %v527 = vpop.xlane.xlu0 %526
      %v528 = vsel %vm515, %v508, 0.0
      %529 = vadd.xlane.f32.xlu0 %v528
      %v530 = vpop.xlane.xlu0 %529
      %v531 = vsel %vm515, %v509, 0.0
      %532 = vadd.xlane.f32.xlu0 %v531
      %v533 = vpop.xlane.xlu0 %532
      %v534 = vrcp.pop 32.0
      %v535 = vmul.f32 %v518, %v534
      %v536 = vmul.f32 %v521, %v534
      %v537 = vmul.f32 %v524, %v534
      %v538 = vmul.f32 %v527, %v534
      %v539 = vmul.f32 %v530, %v534
      %v540 = vmul.f32 %v533, %v534
      %v541 = vsub.f32 %v504, %v535
      %v542 = vsub.f32 %v505, %v536
      %v543 = vsub.f32 %v506, %v537
      %v544 = vsub.f32 %v507, %v538
      %v545 = vsub.f32 %v508, %v539
      %v546 = vsub.f32 %v509, %v540
      %v547 = vmul.f32 %v541, %v541
      %v548 = vmul.f32 %v542, %v542
      %v549 = vmul.f32 %v543, %v543
      %v550 = vmul.f32 %v544, %v544
      %v551 = vmul.f32 %v545, %v545
      %v552 = vmul.f32 %v546, %v546
      %v553 = vsel %vm515, %v547, 0.0
      %554 = vadd.xlane.f32.xlu0 %v553
      %v555 = vpop.xlane.xlu0 %554
      %v556 = vsel %vm515, %v548, 0.0
      %557 = vadd.xlane.f32.xlu0 %v556
      %v558 = vpop.xlane.xlu0 %557
      %v559 = vsel %vm515, %v549, 0.0
      %560 = vadd.xlane.f32.xlu0 %v559
      %v561 = vpop.xlane.xlu0 %560
      %v562 = vsel %vm515, %v550, 0.0
      %563 = vadd.xlane.f32.xlu0 %v562
      %v564 = vpop.xlane.xlu0 %563
      %v565 = vsel %vm515, %v551, 0.0
      %566 = vadd.xlane.f32.xlu0 %v565
      %v567 = vpop.xlane.xlu0 %566
      %v568 = vsel %vm515, %v552, 0.0
      %569 = vadd.xlane.f32.xlu0 %v568
      %v570 = vpop.xlane.xlu0 %569
      %v571 = vmul.f32 %v555, %v534
      %v572 = vmul.f32 %v558, %v534
      %v573 = vmul.f32 %v561, %v534
      %v574 = vmul.f32 %v564, %v534
      %v575 = vmul.f32 %v567, %v534
      %v576 = vmul.f32 %v570, %v534
      %v577 = vadd.f32 %v571, 1e-06
      %v578 = vadd.f32 %v572, 1e-06
      %v579 = vadd.f32 %v573, 1e-06
      %v580 = vadd.f32 %v574, 1e-06
      %v581 = vadd.f32 %v575, 1e-06
      %v582 = vadd.f32 %v576, 1e-06
      %v583 = vrsqrt.pop %v577
      %v584 = vrsqrt.pop %v578
      %v585 = vrsqrt.pop %v579
      %v586 = vrsqrt.pop %v580
      %v587 = vrsqrt.pop %v581
      %v588 = vrsqrt.pop %v582
      %v589 = vmul.f32 %v541, %v583
      %v590 = vmul.f32 %v542, %v584
      %v591 = vmul.f32 %v543, %v585
      %v592 = vmul.f32 %v544, %v586
      %v593 = vmul.f32 %v545, %v587
      %v594 = vmul.f32 %v546, %v588
      %v595 = vld [vmem:[%s2] sm:$0x1]
      %v597 = vlaneseq
      %v598 = vshrl.u32 %v597, 7
      %v599 = vsub.s32 0, %v598
      %v600 = vrot.slane %v595, %v599
      %v602 = vmul.f32 %v589, %v600
      %v603 = vmul.f32 %v590, %v600
      %v604 = vmul.f32 %v591, %v600
      %v605 = vmul.f32 %v592, %v600
      %v606 = vmul.f32 %v593, %v600
      %v607 = vmul.f32 %v594, %v600
      %v608 = vld [vmem:[%s3] sm:$0x1]
      %v610 = vlaneseq
      %v611 = vshrl.u32 %v610, 7
      %v612 = vsub.s32 0, %v611
      %v613 = vrot.slane %v608, %v612
      %v615 = vadd.f32 %v602, %v613
      %v616 = vadd.f32 %v603, %v613
      %v617 = vadd.f32 %v604, %v613
      %v618 = vadd.f32 %v605, %v613
      %v619 = vadd.f32 %v606, %v613
      %v620 = vadd.f32 %v607, %v613
      %v621 = vpack.c.bf16 %v616, %v615
      %v622 = vpack.c.bf16 %v618, %v617
      %v623 = vpack.c.bf16 %v620, %v619
      %v624 = vld [vmem:[%s4] sm:$0xf]
      %v625 = vld [vmem:[%s4 + $0x4] sm:$0xf]
      %v626 = vld [vmem:[%s4 + $0x8] sm:$0xf]
      %v627 = vld [vmem:[%s4 + $0xc] sm:$0xf]
      %v628 = vld [vmem:[%s5] sm:$0x1]
      %v630 = vlaneseq
      %v631 = vshrl.u32 %v630, 7
      %v632 = vsub.s32 0, %v631
      %v633 = vrot.slane %v628, %v632
      %v639 = vunpack.c.l.b16 %v624
      %v640 = vunpack.c.l.b16 %v625
      %v641 = vunpack.c.l.b16 %v626
      %v642 = vunpack.c.l.b16 %v627
      %v643 = vpack.c.b16 %v640, %v639
      %v644 = vpack.c.b16 %v642, %v641
      %v648 = vsel %vm515, %v621, 0
      %v651 = vsel %vm515, %v622, 0
      %v654 = vsel %vm515, %v623, 0
      %656 = vmatprep.subr.bf16.mxu0 0
      %657 = vmatpush1.bf16.msra.mxu0 %v643
      %658 = vmatprep.subr.bf16.mxu0 0
      %659 = vmatpush1.bf16.msra.mxu0 %v644
      %660 = vmatprep.subr.bf16.mxu0 0
      %661 = vmatpush1.bf16.msra.mxu0 0
      %662 = vmatprep.subr.bf16.mxu0 0
      %663 = vmatpush1.bf16.msra.mxu0 0
      %664 = vmatprep.subr.bf16.mxu0 0
      %665 = vmatpush1.bf16.msra.mxu0 0
      %666 = vmatprep.subr.bf16.mxu0 0
      %667 = vmatpush1.bf16.msra.mxu0 0
      %668 = vmatprep.subr.bf16.mxu0 0
      %669 = vmatpush1.bf16.msra.mxu0 0
      %670 = vmatprep.subr.bf16.mxu0 0
      %671 = vmatpush1.bf16.msra.mxu0 0
      %672 = vmatprep.subr.bf16.mxu0 0
      %673 = vmatpush1.bf16.msra.mxu0 0
      %674 = vmatprep.subr.bf16.mxu0 0
      %675 = vmatpush1.bf16.msra.mxu0 0
      %676 = vmatprep.subr.bf16.mxu0 0
      %677 = vmatpush1.bf16.msra.mxu0 0
      %678 = vmatprep.subr.bf16.mxu0 0
      %679 = vmatpush1.bf16.msra.mxu0 0
      %680 = vmatprep.subr.bf16.mxu0 0
      %681 = vmatpush1.bf16.msra.mxu0 0
      %682 = vmatprep.subr.bf16.mxu0 0
      %683 = vmatpush1.bf16.msra.mxu0 0
      %684 = vmatprep.subr.bf16.mxu0 0
      %685 = vmatpush1.bf16.msra.mxu0 0
      %686 = vmatprep.subr.bf16.mxu0 0
      %687 = vmatpush1.bf16.msra.mxu0 0
      %688 = vmatprep.mubr.bf16.mxu0 0
      %689 = vmatmul.mubr.bf16.gmra.mrb[0].mxu0 %v648
      %v690 = vpop.f32.mrb[0].mxu0
      %v691 = vadd.f32 %v633, %v690
      %v692 = vpop.f32.mrb[0].mxu0
      %v693 = vpop.f32.mrb[0].mxu0
      %v694 = vadd.f32 %v633, %v693
      %v695 = vpop.f32.mrb[0].mxu0
      %696 = vmatprep.mubr.bf16.mxu0 0
      %697 = vmatmul.mubr.bf16.gmra.mrb[0].mxu0 %v651
      %v698 = vpop.f32.mrb[0].mxu0
      %v699 = vadd.f32 %v633, %v698
      %v700 = vpop.f32.mrb[0].mxu0
      %v701 = vpop.f32.mrb[0].mxu0
      %v702 = vadd.f32 %v633, %v701
      %v703 = vpop.f32.mrb[0].mxu0
      %704 = vmatprep.mubr.bf16.mxu0 0
      %705 = vmatmul.mubr.bf16.gmra.mrb[0].mxu0 %v654
      %v706 = vpop.f32.mrb[0].mxu0
      %v707 = vadd.f32 %v633, %v706
      %v708 = vpop.f32.mrb[0].mxu0
      %v709 = vpop.f32.mrb[0].mxu0
      %v710 = vadd.f32 %v633, %v709
      %v711 = vpop.f32.mrb[0].mxu0
      %712 = vdwg.mxu0
      %v713 = vmul.f32 %v691, 0.35355338
      %v714 = vmul.f32 %v694, 0.35355338
      %v715 = vmul.f32 %v699, 0.35355338
      %v716 = vmul.f32 %v702, 0.35355338
      %v717 = vmul.f32 %v707, 0.35355338
      %v718 = vmul.f32 %v710, 0.35355338
      %v719 = vld [vmem:[%s6] sm:$0xf]
      %v720 = vld [vmem:[%s6 + $0x4] sm:$0xf]
      %v721 = vld [vmem:[%s6 + $0x8] sm:$0xf]
      %v722 = vld [vmem:[%s6 + $0xc] sm:$0xf]
      %v723 = vpack.c.bf16 %v714, %v713
      %v724 = vpack.c.bf16 %v715, %v715
      %v725 = vpack.c.bf16 %v717, %v716
      %v726 = vpack.c.bf16 %v718, %v718
      %v727 = vpack.c.bf16 %v694, %v691
      %v728 = vpack.c.bf16 %v699, %v699
      %v729 = vpack.c.bf16 %v707, %v702
      %v730 = vpack.c.bf16 %v710, %v710
      %733 = vrot.lane.b32.xlu0 %v727, 96
      %v734 = vpop.permute.xlu0 %733
      %735 = vrot.lane.b32.xlu0 %v728, 96
      %v736 = vpop.permute.xlu0 %735
      %vm737 = vcmask 64512
      %v739 = vsel %vm737, %v723, 0
      %v742 = vsel %vm737, %v724, 0
      %v745 = vsel %vm737, %v734, 0
      %v748 = vsel %vm737, %v736, 0
      %750 = vmatprep.subr.bf16.mxu0 0
      %751 = vmatpush1.bf16.xpose.msra.mxu0 %v745
      %752 = vmatprep.subr.bf16.mxu0 0
      %753 = vmatpush1.bf16.xpose.msra.mxu0 %v748
      %754 = vmatprep.subr.bf16.mxu0 0
      %755 = vmatpush1.bf16.xpose.msra.mxu0 0
      %756 = vmatprep.subr.bf16.mxu0 0
      %757 = vmatpush1.bf16.xpose.msra.mxu0 0
      %758 = vmatprep.subr.bf16.mxu0 0
      %759 = vmatpush1.bf16.xpose.msra.mxu0 0
      %760 = vmatprep.subr.bf16.mxu0 0
      %761 = vmatpush1.bf16.xpose.msra.mxu0 0
      %762 = vmatprep.subr.bf16.mxu0 0
      %763 = vmatpush1.bf16.xpose.msra.mxu0 0
      %764 = vmatprep.subr.bf16.mxu0 0
      %765 = vmatpush1.bf16.xpose.msra.mxu0 0
      %766 = vmatprep.subr.bf16.mxu0 0
      %767 = vmatpush1.bf16.xpose.msra.mxu0 0
      %768 = vmatprep.subr.bf16.mxu0 0
      %769 = vmatpush1.bf16.xpose.msra.mxu0 0
      %770 = vmatprep.subr.bf16.mxu0 0
      %771 = vmatpush1.bf16.xpose.msra.mxu0 0
      %772 = vmatprep.subr.bf16.mxu0 0
      %773 = vmatpush1.bf16.xpose.msra.mxu0 0
      %774 = vmatprep.subr.bf16.mxu0 0
      %775 = vmatpush1.bf16.xpose.msra.mxu0 0
      %776 = vmatprep.subr.bf16.mxu0 0
      %777 = vmatpush1.bf16.xpose.msra.mxu0 0
      %778 = vmatprep.subr.bf16.mxu0 0
      %779 = vmatpush1.bf16.xpose.msra.mxu0 0
      %780 = vmatprep.subr.bf16.mxu0 0
      %781 = vmatpush1.bf16.xpose.msra.mxu0 0
      %782 = vmatprep.mubr.bf16.mxu0 0
      %783 = vmatmul.mubr.bf16.gmra.mrb[0].mxu0 %v739
      %v784 = vpop.f32.mrb[0].mxu0
      %v785 = vadd.f32 %v514, %v784
      %v786 = vpop.f32.mrb[0].mxu0
      %v787 = vpop.f32.mrb[0].mxu0
      %v788 = vadd.f32 %v514, %v787
      %v789 = vpop.f32.mrb[0].mxu0
      %790 = vmatprep.mubr.bf16.mxu0 0
      %791 = vmatmul.mubr.bf16.gmra.mrb[0].mxu0 %v742
      %v792 = vpop.f32.mrb[0].mxu0
      %v793 = vadd.f32 %v514, %v792
      %v794 = vpop.f32.mrb[0].mxu0
      %v795 = vpop.f32.mrb[0].mxu0
      %v796 = vpop.f32.mrb[0].mxu0
      %797 = vdwg.mxu0
      %800 = vrot.lane.b32.xlu0 %v729, 96
      %v801 = vpop.permute.xlu0 %800
      %802 = vrot.lane.b32.xlu0 %v730, 96
      %v803 = vpop.permute.xlu0 %802
      %v805 = vsel %vm737, %v725, 0
      %v808 = vsel %vm737, %v726, 0
      %v811 = vsel %vm737, %v801, 0
      %v814 = vsel %vm737, %v803, 0
      %816 = vmatprep.subr.bf16.mxu0 0
      %817 = vmatpush1.bf16.xpose.msra.mxu0 %v811
      %818 = vmatprep.subr.bf16.mxu0 0
      %819 = vmatpush1.bf16.xpose.msra.mxu0 %v814
      %820 = vmatprep.subr.bf16.mxu0 0
      %821 = vmatpush1.bf16.xpose.msra.mxu0 0
      %822 = vmatprep.subr.bf16.mxu0 0
      %823 = vmatpush1.bf16.xpose.msra.mxu0 0
      %824 = vmatprep.subr.bf16.mxu0 0
      %825 = vmatpush1.bf16.xpose.msra.mxu0 0
      %826 = vmatprep.subr.bf16.mxu0 0
      %827 = vmatpush1.bf16.xpose.msra.mxu0 0
      %828 = vmatprep.subr.bf16.mxu0 0
      %829 = vmatpush1.bf16.xpose.msra.mxu0 0
      %830 = vmatprep.subr.bf16.mxu0 0
      %831 = vmatpush1.bf16.xpose.msra.mxu0 0
      %832 = vmatprep.subr.bf16.mxu0 0
      %833 = vmatpush1.bf16.xpose.msra.mxu0 0
      %834 = vmatprep.subr.bf16.mxu0 0
      %835 = vmatpush1.bf16.xpose.msra.mxu0 0
      %836 = vmatprep.subr.bf16.mxu0 0
      %837 = vmatpush1.bf16.xpose.msra.mxu0 0
      %838 = vmatprep.subr.bf16.mxu0 0
      %839 = vmatpush1.bf16.xpose.msra.mxu0 0
      %840 = vmatprep.subr.bf16.mxu0 0
      %841 = vmatpush1.bf16.xpose.msra.mxu0 0
      %842 = vmatprep.subr.bf16.mxu0 0
      %843 = vmatpush1.bf16.xpose.msra.mxu0 0
      %844 = vmatprep.subr.bf16.mxu0 0
      %845 = vmatpush1.bf16.xpose.msra.mxu0 0
      %846 = vmatprep.subr.bf16.mxu0 0
      %847 = vmatpush1.bf16.xpose.msra.mxu0 0
      %848 = vmatprep.mubr.bf16.mxu0 0
      %849 = vmatmul.mubr.bf16.gmra.mrb[0].mxu0 %v805
      %v850 = vpop.f32.mrb[0].mxu0
      %v851 = vadd.f32 %v514, %v850
      %v852 = vpop.f32.mrb[0].mxu0
      %v853 = vpop.f32.mrb[0].mxu0
      %v854 = vadd.f32 %v514, %v853
      %v855 = vpop.f32.mrb[0].mxu0
      %856 = vmatprep.mubr.bf16.mxu0 0
      %857 = vmatmul.mubr.bf16.gmra.mrb[0].mxu0 %v808
      %v858 = vpop.f32.mrb[0].mxu0
      %v859 = vadd.f32 %v514, %v858
      %v860 = vpop.f32.mrb[0].mxu0
      %v861 = vpop.f32.mrb[0].mxu0
      %v862 = vpop.f32.mrb[0].mxu0
      %863 = vdwg.mxu0
      %vm864 = vcmask 195584
      %v865 = vsel %vm864, %v785, -inf
      %866 = vmax.xlane.f32.xlu0 %v865
      %v867 = vpop.xlane.xlu0 %866
      %v868 = vsel %vm864, %v788, -inf
      %869 = vmax.xlane.f32.xlu0 %v868
      %v870 = vpop.xlane.xlu0 %869
      %v871 = vsel %vm864, %v793, -inf
      %872 = vmax.xlane.f32.xlu0 %v871
      %v873 = vpop.xlane.xlu0 %872
      %v874 = vsel %vm864, %v851, -inf
      %875 = vmax.xlane.f32.xlu0 %v874
      %v876 = vpop.xlane.xlu0 %875
      %v877 = vsel %vm864, %v854, -inf
      %878 = vmax.xlane.f32.xlu0 %v877
      %v879 = vpop.xlane.xlu0 %878
      %v880 = vsel %vm864, %v859, -inf
      %881 = vmax.xlane.f32.xlu0 %v880
      %v882 = vpop.xlane.xlu0 %881
      %v883 = vsub.f32 %v785, %v867
      %v884 = vsub.f32 %v788, %v870
      %v885 = vsub.f32 %v793, %v873
      %v886 = vsub.f32 %v851, %v876
      %v887 = vsub.f32 %v854, %v879
      %v888 = vsub.f32 %v859, %v882
      %v889 = vmul.f32 %v883, 1.442695
      %v890 = vpow.pop %v889
      %v891 = vmul.f32 %v884, 1.442695
      %v892 = vpow.pop %v891
      %v893 = vmul.f32 %v885, 1.442695
      %v894 = vpow.pop %v893
      %v895 = vmul.f32 %v886, 1.442695
      %v896 = vpow.pop %v895
      %v897 = vmul.f32 %v887, 1.442695
      %v898 = vpow.pop %v897
      %v899 = vmul.f32 %v888, 1.442695
      %v900 = vpow.pop %v899
      %v901 = vsel %vm864, %v890, 0.0
      %902 = vadd.xlane.f32.xlu0 %v901
      %v903 = vpop.xlane.xlu0 %902
      %v904 = vsel %vm864, %v892, 0.0
      %905 = vadd.xlane.f32.xlu0 %v904
      %v906 = vpop.xlane.xlu0 %905
      %v907 = vsel %vm864, %v894, 0.0
      %908 = vadd.xlane.f32.xlu0 %v907
      %v909 = vpop.xlane.xlu0 %908
      %v910 = vsel %vm864, %v896, 0.0
      %911 = vadd.xlane.f32.xlu0 %v910
      %v912 = vpop.xlane.xlu0 %911
      %v913 = vsel %vm864, %v898, 0.0
      %914 = vadd.xlane.f32.xlu0 %v913
      %v915 = vpop.xlane.xlu0 %914
      %v916 = vsel %vm864, %v900, 0.0
      %917 = vadd.xlane.f32.xlu0 %v916
      %v918 = vpop.xlane.xlu0 %917
      %v919 = vrcp.pop %v903
      %v920 = vrcp.pop %v906
      %v921 = vrcp.pop %v909
      %v922 = vrcp.pop %v912
      %v923 = vrcp.pop %v915
      %v924 = vrcp.pop %v918
      %v925 = vmul.f32 %v890, %v919
      %v926 = vmul.f32 %v892, %v920
      %v927 = vmul.f32 %v894, %v921
      %v928 = vmul.f32 %v896, %v922
      %v929 = vmul.f32 %v898, %v923
      %v930 = vmul.f32 %v900, %v924
      %v931 = vpack.c.bf16 %v926, %v925
      %v932 = vpack.c.bf16 %v927, %v927
      %v933 = vpack.c.bf16 %v929, %v928
      %v934 = vpack.c.bf16 %v930, %v930
      %935 = vrot.lane.b32.xlu0 %v727, 64
      %v936 = vpop.permute.xlu0 %935
      %937 = vrot.lane.b32.xlu0 %v728, 64
      %v938 = vpop.permute.xlu0 %937
      %v941 = vsel %vm864, %v931, 0
      %v944 = vsel %vm864, %v932, 0
      %vm946 = vcmask 1043456
      %v948 = vsel %vm946, %v938, 0
      %950 = vmatprep.subr.bf16.mxu0 0
      %951 = vmatpush1.bf16.msra.mxu0 %v936
      %952 = vmatprep.subr.bf16.mxu0 0
      %953 = vmatpush1.bf16.msra.mxu0 %v948
      %954 = vmatprep.subr.bf16.mxu0 0
      %955 = vmatpush1.bf16.msra.mxu0 0
      %956 = vmatprep.subr.bf16.mxu0 0
      %957 = vmatpush1.bf16.msra.mxu0 0
      %958 = vmatprep.subr.bf16.mxu0 0
      %959 = vmatpush1.bf16.msra.mxu0 0
      %960 = vmatprep.subr.bf16.mxu0 0
      %961 = vmatpush1.bf16.msra.mxu0 0
      %962 = vmatprep.subr.bf16.mxu0 0
      %963 = vmatpush1.bf16.msra.mxu0 0
      %964 = vmatprep.subr.bf16.mxu0 0
      %965 = vmatpush1.bf16.msra.mxu0 0
      %966 = vmatprep.subr.bf16.mxu0 0
      %967 = vmatpush1.bf16.msra.mxu0 0
      %968 = vmatprep.subr.bf16.mxu0 0
      %969 = vmatpush1.bf16.msra.mxu0 0
      %970 = vmatprep.subr.bf16.mxu0 0
      %971 = vmatpush1.bf16.msra.mxu0 0
      %972 = vmatprep.subr.bf16.mxu0 0
      %973 = vmatpush1.bf16.msra.mxu0 0
      %974 = vmatprep.subr.bf16.mxu0 0
      %975 = vmatpush1.bf16.msra.mxu0 0
      %976 = vmatprep.subr.bf16.mxu0 0
      %977 = vmatpush1.bf16.msra.mxu0 0
      %978 = vmatprep.subr.bf16.mxu0 0
      %979 = vmatpush1.bf16.msra.mxu0 0
      %980 = vmatprep.subr.bf16.mxu0 0
      %981 = vmatpush1.bf16.msra.mxu0 0
      %982 = vmatprep.mubr.bf16.mxu0 0
      %983 = vmatmul.mubr.bf16.gmra.mrb[0].mxu0 %v941
      %v984 = vpop.f32.mrb[0].mxu0
      %v985 = vadd.f32 0.0, %v984
      %v986 = vpop.f32.mrb[0].mxu0
      %v987 = vpop.f32.mrb[0].mxu0
      %v988 = vadd.f32 0.0, %v987
      %v989 = vpop.f32.mrb[0].mxu0
      %990 = vmatprep.mubr.bf16.mxu0 0
      %991 = vmatmul.mubr.bf16.gmra.mrb[0].mxu0 %v944
      %v992 = vpop.f32.mrb[0].mxu0
      %v993 = vadd.f32 0.0, %v992
      %v994 = vpop.f32.mrb[0].mxu0
      %v995 = vpop.f32.mrb[0].mxu0
      %v996 = vpop.f32.mrb[0].mxu0
      %997 = vdwg.mxu0
      %998 = vrot.lane.b32.xlu0 %v729, 64
      %v999 = vpop.permute.xlu0 %998
      %1000 = vrot.lane.b32.xlu0 %v730, 64
      %v1001 = vpop.permute.xlu0 %1000
      %v1004 = vsel %vm864, %v933, 0
      %v1007 = vsel %vm864, %v934, 0
      %v1010 = vsel %vm946, %v1001, 0
      %1012 = vmatprep.subr.bf16.mxu0 0
      %1013 = vmatpush1.bf16.msra.mxu0 %v999
      %1014 = vmatprep.subr.bf16.mxu0 0
      %1015 = vmatpush1.bf16.msra.mxu0 %v1010
      %1016 = vmatprep.subr.bf16.mxu0 0
      %1017 = vmatpush1.bf16.msra.mxu0 0
      %1018 = vmatprep.subr.bf16.mxu0 0
      %1019 = vmatpush1.bf16.msra.mxu0 0
      %1020 = vmatprep.subr.bf16.mxu0 0
      %1021 = vmatpush1.bf16.msra.mxu0 0
      %1022 = vmatprep.subr.bf16.mxu0 0
      %1023 = vmatpush1.bf16.msra.mxu0 0
      %1024 = vmatprep.subr.bf16.mxu0 0
      %1025 = vmatpush1.bf16.msra.mxu0 0
      %1026 = vmatprep.subr.bf16.mxu0 0
      %1027 = vmatpush1.bf16.msra.mxu0 0
      %1028 = vmatprep.subr.bf16.mxu0 0
      %1029 = vmatpush1.bf16.msra.mxu0 0
      %1030 = vmatprep.subr.bf16.mxu0 0
      %1031 = vmatpush1.bf16.msra.mxu0 0
      %1032 = vmatprep.subr.bf16.mxu0 0
      %1033 = vmatpush1.bf16.msra.mxu0 0
      %1034 = vmatprep.subr.bf16.mxu0 0
      %1035 = vmatpush1.bf16.msra.mxu0 0
      %1036 = vmatprep.subr.bf16.mxu0 0
      %1037 = vmatpush1.bf16.msra.mxu0 0
      %1038 = vmatprep.subr.bf16.mxu0 0
      %1039 = vmatpush1.bf16.msra.mxu0 0
      %1040 = vmatprep.subr.bf16.mxu0 0
      %1041 = vmatpush1.bf16.msra.mxu0 0
      %1042 = vmatprep.subr.bf16.mxu0 0
      %1043 = vmatpush1.bf16.msra.mxu0 0
      %1044 = vmatprep.mubr.bf16.mxu0 0
      %1045 = vmatmul.mubr.bf16.gmra.mrb[0].mxu0 %v1004
      %v1046 = vpop.f32.mrb[0].mxu0
      %v1047 = vadd.f32 0.0, %v1046
      %v1048 = vpop.f32.mrb[0].mxu0
      %v1049 = vpop.f32.mrb[0].mxu0
      %v1050 = vadd.f32 0.0, %v1049
      %v1051 = vpop.f32.mrb[0].mxu0
      %1052 = vmatprep.mubr.bf16.mxu0 0
      %1053 = vmatmul.mubr.bf16.gmra.mrb[0].mxu0 %v1007
      %v1054 = vpop.f32.mrb[0].mxu0
      %v1055 = vadd.f32 0.0, %v1054
      %v1056 = vpop.f32.mrb[0].mxu0
      %v1057 = vpop.f32.mrb[0].mxu0
      %v1058 = vpop.f32.mrb[0].mxu0
      %1059 = vdwg.mxu0
      %v1060 = vpack.c.bf16 %v988, %v985
      %v1061 = vpack.c.bf16 %v1047, %v993
      %v1062 = vpack.c.bf16 %v1055, %v1050
      %1065 = vrot.lane.b32.xlu0 %v723, 120
      %v1066 = vpop.permute.xlu0 %1065
      %1067 = vrot.lane.b32.xlu0 %v724, 120
      %v1068 = vpop.permute.xlu0 %1067
      %1069 = vrot.lane.b32.xlu0 %v727, 88
      %v1070 = vpop.permute.xlu0 %1069
      %1071 = vrot.lane.b32.xlu0 %v728, 88
      %v1072 = vpop.permute.xlu0 %1071
      %v1074 = vsel %vm737, %v1066, 0
      %v1077 = vsel %vm737, %v1068, 0
      %v1080 = vsel %vm737, %v1070, 0
      %v1083 = vsel %vm737, %v1072, 0
      %1085 = vmatprep.subr.bf16.mxu0 0
      %1086 = vmatpush1.bf16.xpose.msra.mxu0 %v1080
      %1087 = vmatprep.subr.bf16.mxu0 0
      %1088 = vmatpush1.bf16.xpose.msra.mxu0 %v1083
      %1089 = vmatprep.subr.bf16.mxu0 0
      %1090 = vmatpush1.bf16.xpose.msra.mxu0 0
      %1091 = vmatprep.subr.bf16.mxu0 0
      %1092 = vmatpush1.bf16.xpose.msra.mxu0 0
      %1093 = vmatprep.subr.bf16.mxu0 0
      %1094 = vmatpush1.bf16.xpose.msra.mxu0 0
      %1095 = vmatprep.subr.bf16.mxu0 0
      %1096 = vmatpush1.bf16.xpose.msra.mxu0 0
      %1097 = vmatprep.subr.bf16.mxu0 0
      %1098 = vmatpush1.bf16.xpose.msra.mxu0 0
      %1099 = vmatprep.subr.bf16.mxu0 0
      %1100 = vmatpush1.bf16.xpose.msra.mxu0 0
      %1101 = vmatprep.subr.bf16.mxu0 0
      %1102 = vmatpush1.bf16.xpose.msra.mxu0 0
      %1103 = vmatprep.subr.bf16.mxu0 0
      %1104 = vmatpush1.bf16.xpose.msra.mxu0 0
      %1105 = vmatprep.subr.bf16.mxu0 0
      %1106 = vmatpush1.bf16.xpose.msra.mxu0 0
      %1107 = vmatprep.subr.bf16.mxu0 0
      %1108 = vmatpush1.bf16.xpose.msra.mxu0 0
      %1109 = vmatprep.subr.bf16.mxu0 0
      %1110 = vmatpush1.bf16.xpose.msra.mxu0 0
      %1111 = vmatprep.subr.bf16.mxu0 0
      %1112 = vmatpush1.bf16.xpose.msra.mxu0 0
      %1113 = vmatprep.subr.bf16.mxu0 0
      %1114 = vmatpush1.bf16.xpose.msra.mxu0 0
      %1115 = vmatprep.subr.bf16.mxu0 0
      %1116 = vmatpush1.bf16.xpose.msra.mxu0 0
      %1117 = vmatprep.mubr.bf16.mxu0 0
      %1118 = vmatmul.mubr.bf16.gmra.mrb[0].mxu0 %v1074
      %v1119 = vpop.f32.mrb[0].mxu0
      %v1120 = vadd.f32 %v514, %v1119
      %v1121 = vpop.f32.mrb[0].mxu0
      %v1122 = vpop.f32.mrb[0].mxu0
      %v1123 = vadd.f32 %v514, %v1122
      %v1124 = vpop.f32.mrb[0].mxu0
      %1125 = vmatprep.mubr.bf16.mxu0 0
      %1126 = vmatmul.mubr.bf16.gmra.mrb[0].mxu0 %v1077
      %v1127 = vpop.f32.mrb[0].mxu0
      %v1128 = vadd.f32 %v514, %v1127
      %v1129 = vpop.f32.mrb[0].mxu0
      %v1130 = vpop.f32.mrb[0].mxu0
      %v1131 = vpop.f32.mrb[0].mxu0
      %1132 = vdwg.mxu0
      %1135 = vrot.lane.b32.xlu0 %v725, 120
      %v1136 = vpop.permute.xlu0 %1135
      %1137 = vrot.lane.b32.xlu0 %v726, 120
      %v1138 = vpop.permute.xlu0 %1137
      %1139 = vrot.lane.b32.xlu0 %v729, 88
      %v1140 = vpop.permute.xlu0 %1139
      %1141 = vrot.lane.b32.xlu0 %v730, 88
      %v1142 = vpop.permute.xlu0 %1141
      %v1144 = vsel %vm737, %v1136, 0
      %v1147 = vsel %vm737, %v1138, 0
      %v1150 = vsel %vm737, %v1140, 0
      %v1153 = vsel %vm737, %v1142, 0
      %1155 = vmatprep.subr.bf16.mxu0 0
      %1156 = vmatpush1.bf16.xpose.msra.mxu0 %v1150
      %1157 = vmatprep.subr.bf16.mxu0 0
      %1158 = vmatpush1.bf16.xpose.msra.mxu0 %v1153
      %1159 = vmatprep.subr.bf16.mxu0 0
      %1160 = vmatpush1.bf16.xpose.msra.mxu0 0
      %1161 = vmatprep.subr.bf16.mxu0 0
      %1162 = vmatpush1.bf16.xpose.msra.mxu0 0
      %1163 = vmatprep.subr.bf16.mxu0 0
      %1164 = vmatpush1.bf16.xpose.msra.mxu0 0
      %1165 = vmatprep.subr.bf16.mxu0 0
      %1166 = vmatpush1.bf16.xpose.msra.mxu0 0
      %1167 = vmatprep.subr.bf16.mxu0 0
      %1168 = vmatpush1.bf16.xpose.msra.mxu0 0
      %1169 = vmatprep.subr.bf16.mxu0 0
      %1170 = vmatpush1.bf16.xpose.msra.mxu0 0
      %1171 = vmatprep.subr.bf16.mxu0 0
      %1172 = vmatpush1.bf16.xpose.msra.mxu0 0
      %1173 = vmatprep.subr.bf16.mxu0 0
      %1174 = vmatpush1.bf16.xpose.msra.mxu0 0
      %1175 = vmatprep.subr.bf16.mxu0 0
      %1176 = vmatpush1.bf16.xpose.msra.mxu0 0
      %1177 = vmatprep.subr.bf16.mxu0 0
      %1178 = vmatpush1.bf16.xpose.msra.mxu0 0
      %1179 = vmatprep.subr.bf16.mxu0 0
      %1180 = vmatpush1.bf16.xpose.msra.mxu0 0
      %1181 = vmatprep.subr.bf16.mxu0 0
      %1182 = vmatpush1.bf16.xpose.msra.mxu0 0
      %1183 = vmatprep.subr.bf16.mxu0 0
      %1184 = vmatpush1.bf16.xpose.msra.mxu0 0
      %1185 = vmatprep.subr.bf16.mxu0 0
      %1186 = vmatpush1.bf16.xpose.msra.mxu0 0
      %1187 = vmatprep.mubr.bf16.mxu0 0
      %1188 = vmatmul.mubr.bf16.gmra.mrb[0].mxu0 %v1144
      %v1189 = vpop.f32.mrb[0].mxu0
      %v1190 = vadd.f32 %v514, %v1189
      %v1191 = vpop.f32.mrb[0].mxu0
      %v1192 = vpop.f32.mrb[0].mxu0
      %v1193 = vadd.f32 %v514, %v1192
      %v1194 = vpop.f32.mrb[0].mxu0
      %1195 = vmatprep.mubr.bf16.mxu0 0
      %1196 = vmatmul.mubr.bf16.gmra.mrb[0].mxu0 %v1147
      %v1197 = vpop.f32.mrb[0].mxu0
      %v1198 = vadd.f32 %v514, %v1197
      %v1199 = vpop.f32.mrb[0].mxu0
      %v1200 = vpop.f32.mrb[0].mxu0
      %v1201 = vpop.f32.mrb[0].mxu0
      %1202 = vdwg.mxu0
      %v1203 = vsel %vm864, %v1120, -inf
      %1204 = vmax.xlane.f32.xlu0 %v1203
      %v1205 = vpop.xlane.xlu0 %1204
      %v1206 = vsel %vm864, %v1123, -inf
      %1207 = vmax.xlane.f32.xlu0 %v1206
      %v1208 = vpop.xlane.xlu0 %1207
      %v1209 = vsel %vm864, %v1128, -inf
      %1210 = vmax.xlane.f32.xlu0 %v1209
      %v1211 = vpop.xlane.xlu0 %1210
      %v1212 = vsel %vm864, %v1190, -inf
      %1213 = vmax.xlane.f32.xlu0 %v1212
      %v1214 = vpop.xlane.xlu0 %1213
      %v1215 = vsel %vm864, %v1193, -inf
      %1216 = vmax.xlane.f32.xlu0 %v1215
      %v1217 = vpop.xlane.xlu0 %1216
      %v1218 = vsel %vm864, %v1198, -inf
      %1219 = vmax.xlane.f32.xlu0 %v1218
      %v1220 = vpop.xlane.xlu0 %1219
      %v1221 = vsub.f32 %v1120, %v1205
      %v1222 = vsub.f32 %v1123, %v1208
      %v1223 = vsub.f32 %v1128, %v1211
      %v1224 = vsub.f32 %v1190, %v1214
      %v1225 = vsub.f32 %v1193, %v1217
      %v1226 = vsub.f32 %v1198, %v1220
      %v1227 = vmul.f32 %v1221, 1.442695
      %v1228 = vpow.pop %v1227
      %v1229 = vmul.f32 %v1222, 1.442695
      %v1230 = vpow.pop %v1229
      %v1231 = vmul.f32 %v1223, 1.442695
      %v1232 = vpow.pop %v1231
      %v1233 = vmul.f32 %v1224, 1.442695
      %v1234 = vpow.pop %v1233
      %v1235 = vmul.f32 %v1225, 1.442695
      %v1236 = vpow.pop %v1235
      %v1237 = vmul.f32 %v1226, 1.442695
      %v1238 = vpow.pop %v1237
      %v1239 = vsel %vm864, %v1228, 0.0
      %1240 = vadd.xlane.f32.xlu0 %v1239
      %v1241 = vpop.xlane.xlu0 %1240
      %v1242 = vsel %vm864, %v1230, 0.0
      %1243 = vadd.xlane.f32.xlu0 %v1242
      %v1244 = vpop.xlane.xlu0 %1243
      %v1245 = vsel %vm864, %v1232, 0.0
      %1246 = vadd.xlane.f32.xlu0 %v1245
      %v1247 = vpop.xlane.xlu0 %1246
      %v1248 = vsel %vm864, %v1234, 0.0
      %1249 = vadd.xlane.f32.xlu0 %v1248
      %v1250 = vpop.xlane.xlu0 %1249
      %v1251 = vsel %vm864, %v1236, 0.0
      %1252 = vadd.xlane.f32.xlu0 %v1251
      %v1253 = vpop.xlane.xlu0 %1252
      %v1254 = vsel %vm864, %v1238, 0.0
      %1255 = vadd.xlane.f32.xlu0 %v1254
      %v1256 = vpop.xlane.xlu0 %1255
      %v1257 = vrcp.pop %v1241
      %v1258 = vrcp.pop %v1244
      %v1259 = vrcp.pop %v1247
      %v1260 = vrcp.pop %v1250
      %v1261 = vrcp.pop %v1253
      %v1262 = vrcp.pop %v1256
      %v1263 = vmul.f32 %v1228, %v1257
      %v1264 = vmul.f32 %v1230, %v1258
      %v1265 = vmul.f32 %v1232, %v1259
      %v1266 = vmul.f32 %v1234, %v1260
      %v1267 = vmul.f32 %v1236, %v1261
      %v1268 = vmul.f32 %v1238, %v1262
      %v1269 = vpack.c.bf16 %v1264, %v1263
      %v1270 = vpack.c.bf16 %v1265, %v1265
      %v1271 = vpack.c.bf16 %v1267, %v1266
      %v1272 = vpack.c.bf16 %v1268, %v1268
      %1273 = vrot.lane.b32.xlu0 %v727, 56
      %v1274 = vpop.permute.xlu0 %1273
      %1275 = vrot.lane.b32.xlu0 %v728, 56
      %v1276 = vpop.permute.xlu0 %1275
      %v1279 = vsel %vm864, %v1269, 0
      %v1282 = vsel %vm864, %v1270, 0
      %v1285 = vsel %vm946, %v1276, 0
      %1287 = vmatprep.subr.bf16.mxu0 0
      %1288 = vmatpush1.bf16.msra.mxu0 %v1274
      %1289 = vmatprep.subr.bf16.mxu0 0
      %1290 = vmatpush1.bf16.msra.mxu0 %v1285
      %1291 = vmatprep.subr.bf16.mxu0 0
      %1292 = vmatpush1.bf16.msra.mxu0 0
      %1293 = vmatprep.subr.bf16.mxu0 0
      %1294 = vmatpush1.bf16.msra.mxu0 0
      %1295 = vmatprep.subr.bf16.mxu0 0
      %1296 = vmatpush1.bf16.msra.mxu0 0
      %1297 = vmatprep.subr.bf16.mxu0 0
      %1298 = vmatpush1.bf16.msra.mxu0 0
      %1299 = vmatprep.subr.bf16.mxu0 0
      %1300 = vmatpush1.bf16.msra.mxu0 0
      %1301 = vmatprep.subr.bf16.mxu0 0
      %1302 = vmatpush1.bf16.msra.mxu0 0
      %1303 = vmatprep.subr.bf16.mxu0 0
      %1304 = vmatpush1.bf16.msra.mxu0 0
      %1305 = vmatprep.subr.bf16.mxu0 0
      %1306 = vmatpush1.bf16.msra.mxu0 0
      %1307 = vmatprep.subr.bf16.mxu0 0
      %1308 = vmatpush1.bf16.msra.mxu0 0
      %1309 = vmatprep.subr.bf16.mxu0 0
      %1310 = vmatpush1.bf16.msra.mxu0 0
      %1311 = vmatprep.subr.bf16.mxu0 0
      %1312 = vmatpush1.bf16.msra.mxu0 0
      %1313 = vmatprep.subr.bf16.mxu0 0
      %1314 = vmatpush1.bf16.msra.mxu0 0
      %1315 = vmatprep.subr.bf16.mxu0 0
      %1316 = vmatpush1.bf16.msra.mxu0 0
      %1317 = vmatprep.subr.bf16.mxu0 0
      %1318 = vmatpush1.bf16.msra.mxu0 0
      %1319 = vmatprep.mubr.bf16.mxu0 0
      %1320 = vmatmul.mubr.bf16.gmra.mrb[0].mxu0 %v1279
      %v1321 = vpop.f32.mrb[0].mxu0
      %v1322 = vadd.f32 0.0, %v1321
      %v1323 = vpop.f32.mrb[0].mxu0
      %v1324 = vpop.f32.mrb[0].mxu0
      %v1325 = vadd.f32 0.0, %v1324
      %v1326 = vpop.f32.mrb[0].mxu0
      %1327 = vmatprep.mubr.bf16.mxu0 0
      %1328 = vmatmul.mubr.bf16.gmra.mrb[0].mxu0 %v1282
      %v1329 = vpop.f32.mrb[0].mxu0
      %v1330 = vadd.f32 0.0, %v1329
      %v1331 = vpop.f32.mrb[0].mxu0
      %v1332 = vpop.f32.mrb[0].mxu0
      %v1333 = vpop.f32.mrb[0].mxu0
      %1334 = vdwg.mxu0
      %1335 = vrot.lane.b32.xlu0 %v729, 56
      %v1336 = vpop.permute.xlu0 %1335
      %1337 = vrot.lane.b32.xlu0 %v730, 56
      %v1338 = vpop.permute.xlu0 %1337
      %v1341 = vsel %vm864, %v1271, 0
      %v1344 = vsel %vm864, %v1272, 0
      %v1347 = vsel %vm946, %v1338, 0
      %1349 = vmatprep.subr.bf16.mxu0 0
      %1350 = vmatpush1.bf16.msra.mxu0 %v1336
      %1351 = vmatprep.subr.bf16.mxu0 0
      %1352 = vmatpush1.bf16.msra.mxu0 %v1347
      %1353 = vmatprep.subr.bf16.mxu0 0
      %1354 = vmatpush1.bf16.msra.mxu0 0
      %1355 = vmatprep.subr.bf16.mxu0 0
      %1356 = vmatpush1.bf16.msra.mxu0 0
      %1357 = vmatprep.subr.bf16.mxu0 0
      %1358 = vmatpush1.bf16.msra.mxu0 0
      %1359 = vmatprep.subr.bf16.mxu0 0
      %1360 = vmatpush1.bf16.msra.mxu0 0
      %1361 = vmatprep.subr.bf16.mxu0 0
      %1362 = vmatpush1.bf16.msra.mxu0 0
      %1363 = vmatprep.subr.bf16.mxu0 0
      %1364 = vmatpush1.bf16.msra.mxu0 0
      %1365 = vmatprep.subr.bf16.mxu0 0
      %1366 = vmatpush1.bf16.msra.mxu0 0
      %1367 = vmatprep.subr.bf16.mxu0 0
      %1368 = vmatpush1.bf16.msra.mxu0 0
      %1369 = vmatprep.subr.bf16.mxu0 0
      %1370 = vmatpush1.bf16.msra.mxu0 0
      %1371 = vmatprep.subr.bf16.mxu0 0
      %1372 = vmatpush1.bf16.msra.mxu0 0
      %1373 = vmatprep.subr.bf16.mxu0 0
      %1374 = vmatpush1.bf16.msra.mxu0 0
      %1375 = vmatprep.subr.bf16.mxu0 0
      %1376 = vmatpush1.bf16.msra.mxu0 0
      %1377 = vmatprep.subr.bf16.mxu0 0
      %1378 = vmatpush1.bf16.msra.mxu0 0
      %1379 = vmatprep.subr.bf16.mxu0 0
      %1380 = vmatpush1.bf16.msra.mxu0 0
      %1381 = vmatprep.mubr.bf16.mxu0 0
      %1382 = vmatmul.mubr.bf16.gmra.mrb[0].mxu0 %v1341
      %v1383 = vpop.f32.mrb[0].mxu0
      %v1384 = vadd.f32 0.0, %v1383
      %v1385 = vpop.f32.mrb[0].mxu0
      %v1386 = vpop.f32.mrb[0].mxu0
      %v1387 = vadd.f32 0.0, %v1386
      %v1388 = vpop.f32.mrb[0].mxu0
      %1389 = vmatprep.mubr.bf16.mxu0 0
      %1390 = vmatmul.mubr.bf16.gmra.mrb[0].mxu0 %v1344
      %v1391 = vpop.f32.mrb[0].mxu0
      %v1392 = vadd.f32 0.0, %v1391
      %v1393 = vpop.f32.mrb[0].mxu0
      %v1394 = vpop.f32.mrb[0].mxu0
      %v1395 = vpop.f32.mrb[0].mxu0
      %1396 = vdwg.mxu0
      %v1397 = vpack.c.bf16 %v1325, %v1322
      %v1398 = vpack.c.bf16 %v1384, %v1330
      %v1399 = vpack.c.bf16 %v1392, %v1387
      %v1401 = vsel %vm737, %v1397, 0
      %v1404 = vsel %vm737, %v1398, 0
      %v1407 = vsel %vm737, %v1399, 0
      %v1410 = vsel %vm946, %v720, 0
      %1412 = vmatprep.subr.bf16.mxu0 0
      %1413 = vmatpush1.bf16.msra.mxu0 %v1410
      %1414 = vmatprep.subr.bf16.mxu0 0
      %1415 = vmatpush1.bf16.msra.mxu0 0
      %1416 = vmatprep.subr.bf16.mxu0 0
      %1417 = vmatpush1.bf16.msra.mxu0 0
      %1418 = vmatprep.subr.bf16.mxu0 0
      %1419 = vmatpush1.bf16.msra.mxu0 0
      %1420 = vmatprep.subr.bf16.mxu0 0
      %1421 = vmatpush1.bf16.msra.mxu0 0
      %1422 = vmatprep.subr.bf16.mxu0 0
      %1423 = vmatpush1.bf16.msra.mxu0 0
      %1424 = vmatprep.subr.bf16.mxu0 0
      %1425 = vmatpush1.bf16.msra.mxu0 0
      %1426 = vmatprep.subr.bf16.mxu0 0
      %1427 = vmatpush1.bf16.msra.mxu0 0
      %1428 = vmatprep.subr.bf16.mxu0 0
      %1429 = vmatpush1.bf16.msra.mxu0 0
      %1430 = vmatprep.subr.bf16.mxu0 0
      %1431 = vmatpush1.bf16.msra.mxu0 0
      %1432 = vmatprep.subr.bf16.mxu0 0
      %1433 = vmatpush1.bf16.msra.mxu0 0
      %1434 = vmatprep.subr.bf16.mxu0 0
      %1435 = vmatpush1.bf16.msra.mxu0 0
      %1436 = vmatprep.subr.bf16.mxu0 0
      %1437 = vmatpush1.bf16.msra.mxu0 0
      %1438 = vmatprep.subr.bf16.mxu0 0
      %1439 = vmatpush1.bf16.msra.mxu0 0
      %1440 = vmatprep.subr.bf16.mxu0 0
      %1441 = vmatpush1.bf16.msra.mxu0 0
      %1442 = vmatprep.subr.bf16.mxu0 0
      %1443 = vmatpush1.bf16.msra.mxu0 0
      %1444 = vmatprep.mubr.bf16.mxu0 0
      %1445 = vmatmul.mubr.bf16.gmra.mrb[0].mxu0 %v1401
      %v1446 = vpop.f32.mrb[0].mxu0
      %v1447 = vadd.f32 0.0, %v1446
      %v1448 = vpop.f32.mrb[0].mxu0
      %v1449 = vpop.f32.mrb[0].mxu0
      %v1450 = vadd.f32 0.0, %v1449
      %v1451 = vpop.f32.mrb[0].mxu0
      %1452 = vmatprep.mubr.bf16.mxu0 0
      %1453 = vmatmul.mubr.bf16.gmra.mrb[0].mxu0 %v1404
      %v1454 = vpop.f32.mrb[0].mxu0
      %v1455 = vadd.f32 0.0, %v1454
      %v1456 = vpop.f32.mrb[0].mxu0
      %v1457 = vpop.f32.mrb[0].mxu0
      %v1458 = vadd.f32 0.0, %v1457
      %v1459 = vpop.f32.mrb[0].mxu0
      %1460 = vmatprep.mubr.bf16.mxu0 0
      %1461 = vmatmul.mubr.bf16.gmra.mrb[0].mxu0 %v1407
      %v1462 = vpop.f32.mrb[0].mxu0
      %v1463 = vadd.f32 0.0, %v1462
      %v1464 = vpop.f32.mrb[0].mxu0
      %v1465 = vpop.f32.mrb[0].mxu0
      %v1466 = vadd.f32 0.0, %v1465
      %v1467 = vpop.f32.mrb[0].mxu0
      %1468 = vdwg.mxu0
      %v1470 = vsel %vm737, %v1060, 0
      %v1473 = vsel %vm737, %v1061, 0
      %v1476 = vsel %vm737, %v1062, 0
      %v1479 = vsel %vm946, %v719, 0
      %1481 = vmatprep.subr.bf16.mxu0 0
      %1482 = vmatpush1.bf16.msra.mxu0 %v1479
      %1483 = vmatprep.subr.bf16.mxu0 0
      %1484 = vmatpush1.bf16.msra.mxu0 0
      %1485 = vmatprep.subr.bf16.mxu0 0
      %1486 = vmatpush1.bf16.msra.mxu0 0
      %1487 = vmatprep.subr.bf16.mxu0 0
      %1488 = vmatpush1.bf16.msra.mxu0 0
      %1489 = vmatprep.subr.bf16.mxu0 0
      %1490 = vmatpush1.bf16.msra.mxu0 0
      %1491 = vmatprep.subr.bf16.mxu0 0
      %1492 = vmatpush1.bf16.msra.mxu0 0
      %1493 = vmatprep.subr.bf16.mxu0 0
      %1494 = vmatpush1.bf16.msra.mxu0 0
      %1495 = vmatprep.subr.bf16.mxu0 0
      %1496 = vmatpush1.bf16.msra.mxu0 0
      %1497 = vmatprep.subr.bf16.mxu0 0
      %1498 = vmatpush1.bf16.msra.mxu0 0
      %1499 = vmatprep.subr.bf16.mxu0 0
      %1500 = vmatpush1.bf16.msra.mxu0 0
      %1501 = vmatprep.subr.bf16.mxu0 0
      %1502 = vmatpush1.bf16.msra.mxu0 0
      %1503 = vmatprep.subr.bf16.mxu0 0
      %1504 = vmatpush1.bf16.msra.mxu0 0
      %1505 = vmatprep.subr.bf16.mxu0 0
      %1506 = vmatpush1.bf16.msra.mxu0 0
      %1507 = vmatprep.subr.bf16.mxu0 0
      %1508 = vmatpush1.bf16.msra.mxu0 0
      %1509 = vmatprep.subr.bf16.mxu0 0
      %1510 = vmatpush1.bf16.msra.mxu0 0
      %1511 = vmatprep.subr.bf16.mxu0 0
      %1512 = vmatpush1.bf16.msra.mxu0 0
      %1513 = vmatprep.mubr.bf16.mxu0 0
      %1514 = vmatmul.mubr.bf16.gmra.mrb[0].mxu0 %v1470
      %v1515 = vpop.f32.mrb[0].mxu0
      %v1516 = vadd.f32 %v1447, %v1515
      %v1517 = vpop.f32.mrb[0].mxu0
      %v1518 = vpop.f32.mrb[0].mxu0
      %v1519 = vadd.f32 %v1450, %v1518
      %v1520 = vpop.f32.mrb[0].mxu0
      %1521 = vmatprep.mubr.bf16.mxu0 0
      %1522 = vmatmul.mubr.bf16.gmra.mrb[0].mxu0 %v1473
      %v1523 = vpop.f32.mrb[0].mxu0
      %v1524 = vadd.f32 %v1455, %v1523
      %v1525 = vpop.f32.mrb[0].mxu0
      %v1526 = vpop.f32.mrb[0].mxu0
      %v1527 = vadd.f32 %v1458, %v1526
      %v1528 = vpop.f32.mrb[0].mxu0
      %1529 = vmatprep.mubr.bf16.mxu0 0
      %1530 = vmatmul.mubr.bf16.gmra.mrb[0].mxu0 %v1476
      %v1531 = vpop.f32.mrb[0].mxu0
      %v1532 = vadd.f32 %v1463, %v1531
      %v1533 = vpop.f32.mrb[0].mxu0
      %v1534 = vpop.f32.mrb[0].mxu0
      %v1535 = vadd.f32 %v1466, %v1534
      %v1536 = vpop.f32.mrb[0].mxu0
      %1537 = vdwg.mxu0
      %1538 = vrot.lane.b32.xlu0 %v723, 112
      %v1539 = vpop.permute.xlu0 %1538
      %1540 = vrot.lane.b32.xlu0 %v724, 112
      %v1541 = vpop.permute.xlu0 %1540
      %1542 = vrot.lane.b32.xlu0 %v727, 80
      %v1543 = vpop.permute.xlu0 %1542
      %1544 = vrot.lane.b32.xlu0 %v728, 80
      %v1545 = vpop.permute.xlu0 %1544
      %v1547 = vsel %vm737, %v1539, 0
      %v1550 = vsel %vm737, %v1541, 0
      %v1553 = vsel %vm737, %v1543, 0
      %v1556 = vsel %vm737, %v1545, 0
      %1558 = vmatprep.subr.bf16.mxu0 0
      %1559 = vmatpush1.bf16.xpose.msra.mxu0 %v1553
      %1560 = vmatprep.subr.bf16.mxu0 0
      %1561 = vmatpush1.bf16.xpose.msra.mxu0 %v1556
      %1562 = vmatprep.subr.bf16.mxu0 0
      %1563 = vmatpush1.bf16.xpose.msra.mxu0 0
      %1564 = vmatprep.subr.bf16.mxu0 0
      %1565 = vmatpush1.bf16.xpose.msra.mxu0 0
      %1566 = vmatprep.subr.bf16.mxu0 0
      %1567 = vmatpush1.bf16.xpose.msra.mxu0 0
      %1568 = vmatprep.subr.bf16.mxu0 0
      %1569 = vmatpush1.bf16.xpose.msra.mxu0 0
      %1570 = vmatprep.subr.bf16.mxu0 0
      %1571 = vmatpush1.bf16.xpose.msra.mxu0 0
      %1572 = vmatprep.subr.bf16.mxu0 0
      %1573 = vmatpush1.bf16.xpose.msra.mxu0 0
      %1574 = vmatprep.subr.bf16.mxu0 0
      %1575 = vmatpush1.bf16.xpose.msra.mxu0 0
      %1576 = vmatprep.subr.bf16.mxu0 0
      %1577 = vmatpush1.bf16.xpose.msra.mxu0 0
      %1578 = vmatprep.subr.bf16.mxu0 0
      %1579 = vmatpush1.bf16.xpose.msra.mxu0 0
      %1580 = vmatprep.subr.bf16.mxu0 0
      %1581 = vmatpush1.bf16.xpose.msra.mxu0 0
      %1582 = vmatprep.subr.bf16.mxu0 0
      %1583 = vmatpush1.bf16.xpose.msra.mxu0 0
      %1584 = vmatprep.subr.bf16.mxu0 0
      %1585 = vmatpush1.bf16.xpose.msra.mxu0 0
      %1586 = vmatprep.subr.bf16.mxu0 0
      %1587 = vmatpush1.bf16.xpose.msra.mxu0 0
      %1588 = vmatprep.subr.bf16.mxu0 0
      %1589 = vmatpush1.bf16.xpose.msra.mxu0 0
      %1590 = vmatprep.mubr.bf16.mxu0 0
      %1591 = vmatmul.mubr.bf16.gmra.mrb[0].mxu0 %v1547
      %v1592 = vpop.f32.mrb[0].mxu0
      %v1593 = vadd.f32 %v514, %v1592
      %v1594 = vpop.f32.mrb[0].mxu0
      %v1595 = vpop.f32.mrb[0].mxu0
      %v1596 = vadd.f32 %v514, %v1595
      %v1597 = vpop.f32.mrb[0].mxu0
      %1598 = vmatprep.mubr.bf16.mxu0 0
      %1599 = vmatmul.mubr.bf16.gmra.mrb[0].mxu0 %v1550
      %v1600 = vpop.f32.mrb[0].mxu0
      %v1601 = vadd.f32 %v514, %v1600
      %v1602 = vpop.f32.mrb[0].mxu0
      %v1603 = vpop.f32.mrb[0].mxu0
      %v1604 = vpop.f32.mrb[0].mxu0
      %1605 = vdwg.mxu0
      %1606 = vrot.lane.b32.xlu0 %v725, 112
      %v1607 = vpop.permute.xlu0 %1606
      %1608 = vrot.lane.b32.xlu0 %v726, 112
      %v1609 = vpop.permute.xlu0 %1608
      %1610 = vrot.lane.b32.xlu0 %v729, 80
      %v1611 = vpop.permute.xlu0 %1610
      %1612 = vrot.lane.b32.xlu0 %v730, 80
      %v1613 = vpop.permute.xlu0 %1612
      %v1615 = vsel %vm737, %v1607, 0
      %v1618 = vsel %vm737, %v1609, 0
      %v1621 = vsel %vm737, %v1611, 0
      %v1624 = vsel %vm737, %v1613, 0
      %1626 = vmatprep.subr.bf16.mxu0 0
      %1627 = vmatpush1.bf16.xpose.msra.mxu0 %v1621
      %1628 = vmatprep.subr.bf16.mxu0 0
      %1629 = vmatpush1.bf16.xpose.msra.mxu0 %v1624
      %1630 = vmatprep.subr.bf16.mxu0 0
      %1631 = vmatpush1.bf16.xpose.msra.mxu0 0
      %1632 = vmatprep.subr.bf16.mxu0 0
      %1633 = vmatpush1.bf16.xpose.msra.mxu0 0
      %1634 = vmatprep.subr.bf16.mxu0 0
      %1635 = vmatpush1.bf16.xpose.msra.mxu0 0
      %1636 = vmatprep.subr.bf16.mxu0 0
      %1637 = vmatpush1.bf16.xpose.msra.mxu0 0
      %1638 = vmatprep.subr.bf16.mxu0 0
      %1639 = vmatpush1.bf16.xpose.msra.mxu0 0
      %1640 = vmatprep.subr.bf16.mxu0 0
      %1641 = vmatpush1.bf16.xpose.msra.mxu0 0
      %1642 = vmatprep.subr.bf16.mxu0 0
      %1643 = vmatpush1.bf16.xpose.msra.mxu0 0
      %1644 = vmatprep.subr.bf16.mxu0 0
      %1645 = vmatpush1.bf16.xpose.msra.mxu0 0
      %1646 = vmatprep.subr.bf16.mxu0 0
      %1647 = vmatpush1.bf16.xpose.msra.mxu0 0
      %1648 = vmatprep.subr.bf16.mxu0 0
      %1649 = vmatpush1.bf16.xpose.msra.mxu0 0
      %1650 = vmatprep.subr.bf16.mxu0 0
      %1651 = vmatpush1.bf16.xpose.msra.mxu0 0
      %1652 = vmatprep.subr.bf16.mxu0 0
      %1653 = vmatpush1.bf16.xpose.msra.mxu0 0
      %1654 = vmatprep.subr.bf16.mxu0 0
      %1655 = vmatpush1.bf16.xpose.msra.mxu0 0
      %1656 = vmatprep.subr.bf16.mxu0 0
      %1657 = vmatpush1.bf16.xpose.msra.mxu0 0
      %1658 = vmatprep.mubr.bf16.mxu0 0
      %1659 = vmatmul.mubr.bf16.gmra.mrb[0].mxu0 %v1615
      %v1660 = vpop.f32.mrb[0].mxu0
      %v1661 = vadd.f32 %v514, %v1660
      %v1662 = vpop.f32.mrb[0].mxu0
      %v1663 = vpop.f32.mrb[0].mxu0
      %v1664 = vadd.f32 %v514, %v1663
      %v1665 = vpop.f32.mrb[0].mxu0
      %1666 = vmatprep.mubr.bf16.mxu0 0
      %1667 = vmatmul.mubr.bf16.gmra.mrb[0].mxu0 %v1618
      %v1668 = vpop.f32.mrb[0].mxu0
      %v1669 = vadd.f32 %v514, %v1668
      %v1670 = vpop.f32.mrb[0].mxu0
      %v1671 = vpop.f32.mrb[0].mxu0
      %v1672 = vpop.f32.mrb[0].mxu0
      %1673 = vdwg.mxu0
      %v1674 = vsel %vm864, %v1593, -inf
      %1675 = vmax.xlane.f32.xlu0 %v1674
      %v1676 = vpop.xlane.xlu0 %1675
      %v1677 = vsel %vm864, %v1596, -inf
      %1678 = vmax.xlane.f32.xlu0 %v1677
      %v1679 = vpop.xlane.xlu0 %1678
      %v1680 = vsel %vm864, %v1601, -inf
      %1681 = vmax.xlane.f32.xlu0 %v1680
      %v1682 = vpop.xlane.xlu0 %1681
      %v1683 = vsel %vm864, %v1661, -inf
      %1684 = vmax.xlane.f32.xlu0 %v1683
      %v1685 = vpop.xlane.xlu0 %1684
      %v1686 = vsel %vm864, %v1664, -inf
      %1687 = vmax.xlane.f32.xlu0 %v1686
      %v1688 = vpop.xlane.xlu0 %1687
      %v1689 = vsel %vm864, %v1669, -inf
      %1690 = vmax.xlane.f32.xlu0 %v1689
      %v1691 = vpop.xlane.xlu0 %1690
      %v1692 = vsub.f32 %v1593, %v1676
      %v1693 = vsub.f32 %v1596, %v1679
      %v1694 = vsub.f32 %v1601, %v1682
      %v1695 = vsub.f32 %v1661, %v1685
      %v1696 = vsub.f32 %v1664, %v1688
      %v1697 = vsub.f32 %v1669, %v1691
      %v1698 = vmul.f32 %v1692, 1.442695
      %v1699 = vpow.pop %v1698
      %v1700 = vmul.f32 %v1693, 1.442695
      %v1701 = vpow.pop %v1700
      %v1702 = vmul.f32 %v1694, 1.442695
      %v1703 = vpow.pop %v1702
      %v1704 = vmul.f32 %v1695, 1.442695
      %v1705 = vpow.pop %v1704
      %v1706 = vmul.f32 %v1696, 1.442695
      %v1707 = vpow.pop %v1706
      %v1708 = vmul.f32 %v1697, 1.442695
      %v1709 = vpow.pop %v1708
      %v1710 = vsel %vm864, %v1699, 0.0
      %1711 = vadd.xlane.f32.xlu0 %v1710
      %v1712 = vpop.xlane.xlu0 %1711
      %v1713 = vsel %vm864, %v1701, 0.0
      %1714 = vadd.xlane.f32.xlu0 %v1713
      %v1715 = vpop.xlane.xlu0 %1714
      %v1716 = vsel %vm864, %v1703, 0.0
      %1717 = vadd.xlane.f32.xlu0 %v1716
      %v1718 = vpop.xlane.xlu0 %1717
      %v1719 = vsel %vm864, %v1705, 0.0
      %1720 = vadd.xlane.f32.xlu0 %v1719
      %v1721 = vpop.xlane.xlu0 %1720
      %v1722 = vsel %vm864, %v1707, 0.0
      %1723 = vadd.xlane.f32.xlu0 %v1722
      %v1724 = vpop.xlane.xlu0 %1723
      %v1725 = vsel %vm864, %v1709, 0.0
      %1726 = vadd.xlane.f32.xlu0 %v1725
      %v1727 = vpop.xlane.xlu0 %1726
      %v1728 = vrcp.pop %v1712
      %v1729 = vrcp.pop %v1715
      %v1730 = vrcp.pop %v1718
      %v1731 = vrcp.pop %v1721
      %v1732 = vrcp.pop %v1724
      %v1733 = vrcp.pop %v1727
      %v1734 = vmul.f32 %v1699, %v1728
      %v1735 = vmul.f32 %v1701, %v1729
      %v1736 = vmul.f32 %v1703, %v1730
      %v1737 = vmul.f32 %v1705, %v1731
      %v1738 = vmul.f32 %v1707, %v1732
      %v1739 = vmul.f32 %v1709, %v1733
      %v1740 = vpack.c.bf16 %v1735, %v1734
      %v1741 = vpack.c.bf16 %v1736, %v1736
      %v1742 = vpack.c.bf16 %v1738, %v1737
      %v1743 = vpack.c.bf16 %v1739, %v1739
      %1744 = vrot.lane.b32.xlu0 %v727, 48
      %v1745 = vpop.permute.xlu0 %1744
      %1746 = vrot.lane.b32.xlu0 %v728, 48
      %v1747 = vpop.permute.xlu0 %1746
      %v1750 = vsel %vm864, %v1740, 0
      %v1753 = vsel %vm864, %v1741, 0
      %v1756 = vsel %vm946, %v1747, 0
      %1758 = vmatprep.subr.bf16.mxu0 0
      %1759 = vmatpush1.bf16.msra.mxu0 %v1745
      %1760 = vmatprep.subr.bf16.mxu0 0
      %1761 = vmatpush1.bf16.msra.mxu0 %v1756
      %1762 = vmatprep.subr.bf16.mxu0 0
      %1763 = vmatpush1.bf16.msra.mxu0 0
      %1764 = vmatprep.subr.bf16.mxu0 0
      %1765 = vmatpush1.bf16.msra.mxu0 0
      %1766 = vmatprep.subr.bf16.mxu0 0
      %1767 = vmatpush1.bf16.msra.mxu0 0
      %1768 = vmatprep.subr.bf16.mxu0 0
      %1769 = vmatpush1.bf16.msra.mxu0 0
      %1770 = vmatprep.subr.bf16.mxu0 0
      %1771 = vmatpush1.bf16.msra.mxu0 0
      %1772 = vmatprep.subr.bf16.mxu0 0
      %1773 = vmatpush1.bf16.msra.mxu0 0
      %1774 = vmatprep.subr.bf16.mxu0 0
      %1775 = vmatpush1.bf16.msra.mxu0 0
      %1776 = vmatprep.subr.bf16.mxu0 0
      %1777 = vmatpush1.bf16.msra.mxu0 0
      %1778 = vmatprep.subr.bf16.mxu0 0
      %1779 = vmatpush1.bf16.msra.mxu0 0
      %1780 = vmatprep.subr.bf16.mxu0 0
      %1781 = vmatpush1.bf16.msra.mxu0 0
      %1782 = vmatprep.subr.bf16.mxu0 0
      %1783 = vmatpush1.bf16.msra.mxu0 0
      %1784 = vmatprep.subr.bf16.mxu0 0
      %1785 = vmatpush1.bf16.msra.mxu0 0
      %1786 = vmatprep.subr.bf16.mxu0 0
      %1787 = vmatpush1.bf16.msra.mxu0 0
      %1788 = vmatprep.subr.bf16.mxu0 0
      %1789 = vmatpush1.bf16.msra.mxu0 0
      %1790 = vmatprep.mubr.bf16.mxu0 0
      %1791 = vmatmul.mubr.bf16.gmra.mrb[0].mxu0 %v1750
      %v1792 = vpop.f32.mrb[0].mxu0
      %v1793 = vadd.f32 0.0, %v1792
      %v1794 = vpop.f32.mrb[0].mxu0
      %v1795 = vpop.f32.mrb[0].mxu0
      %v1796 = vadd.f32 0.0, %v1795
      %v1797 = vpop.f32.mrb[0].mxu0
      %1798 = vmatprep.mubr.bf16.mxu0 0
      %1799 = vmatmul.mubr.bf16.gmra.mrb[0].mxu0 %v1753
      %v1800 = vpop.f32.mrb[0].mxu0
      %v1801 = vadd.f32 0.0, %v1800
      %v1802 = vpop.f32.mrb[0].mxu0
      %v1803 = vpop.f32.mrb[0].mxu0
      %v1804 = vpop.f32.mrb[0].mxu0
      %1805 = vdwg.mxu0
      %1806 = vrot.lane.b32.xlu0 %v729, 48
      %v1807 = vpop.permute.xlu0 %1806
      %1808 = vrot.lane.b32.xlu0 %v730, 48
      %v1809 = vpop.permute.xlu0 %1808
      %v1812 = vsel %vm864, %v1742, 0
      %v1815 = vsel %vm864, %v1743, 0
      %v1818 = vsel %vm946, %v1809, 0
      %1820 = vmatprep.subr.bf16.mxu0 0
      %1821 = vmatpush1.bf16.msra.mxu0 %v1807
      %1822 = vmatprep.subr.bf16.mxu0 0
      %1823 = vmatpush1.bf16.msra.mxu0 %v1818
      %1824 = vmatprep.subr.bf16.mxu0 0
      %1825 = vmatpush1.bf16.msra.mxu0 0
      %1826 = vmatprep.subr.bf16.mxu0 0
      %1827 = vmatpush1.bf16.msra.mxu0 0
      %1828 = vmatprep.subr.bf16.mxu0 0
      %1829 = vmatpush1.bf16.msra.mxu0 0
      %1830 = vmatprep.subr.bf16.mxu0 0
      %1831 = vmatpush1.bf16.msra.mxu0 0
      %1832 = vmatprep.subr.bf16.mxu0 0
      %1833 = vmatpush1.bf16.msra.mxu0 0
      %1834 = vmatprep.subr.bf16.mxu0 0
      %1835 = vmatpush1.bf16.msra.mxu0 0
      %1836 = vmatprep.subr.bf16.mxu0 0
      %1837 = vmatpush1.bf16.msra.mxu0 0
      %1838 = vmatprep.subr.bf16.mxu0 0
      %1839 = vmatpush1.bf16.msra.mxu0 0
      %1840 = vmatprep.subr.bf16.mxu0 0
      %1841 = vmatpush1.bf16.msra.mxu0 0
      %1842 = vmatprep.subr.bf16.mxu0 0
      %1843 = vmatpush1.bf16.msra.mxu0 0
      %1844 = vmatprep.subr.bf16.mxu0 0
      %1845 = vmatpush1.bf16.msra.mxu0 0
      %1846 = vmatprep.subr.bf16.mxu0 0
      %1847 = vmatpush1.bf16.msra.mxu0 0
      %1848 = vmatprep.subr.bf16.mxu0 0
      %1849 = vmatpush1.bf16.msra.mxu0 0
      %1850 = vmatprep.subr.bf16.mxu0 0
      %1851 = vmatpush1.bf16.msra.mxu0 0
      %1852 = vmatprep.mubr.bf16.mxu0 0
      %1853 = vmatmul.mubr.bf16.gmra.mrb[0].mxu0 %v1812
      %v1854 = vpop.f32.mrb[0].mxu0
      %v1855 = vadd.f32 0.0, %v1854
      %v1856 = vpop.f32.mrb[0].mxu0
      %v1857 = vpop.f32.mrb[0].mxu0
      %v1858 = vadd.f32 0.0, %v1857
      %v1859 = vpop.f32.mrb[0].mxu0
      %1860 = vmatprep.mubr.bf16.mxu0 0
      %1861 = vmatmul.mubr.bf16.gmra.mrb[0].mxu0 %v1815
      %v1862 = vpop.f32.mrb[0].mxu0
      %v1863 = vadd.f32 0.0, %v1862
      %v1864 = vpop.f32.mrb[0].mxu0
      %v1865 = vpop.f32.mrb[0].mxu0
      %v1866 = vpop.f32.mrb[0].mxu0
      %1867 = vdwg.mxu0
      %v1868 = vpack.c.bf16 %v1796, %v1793
      %v1869 = vpack.c.bf16 %v1855, %v1801
      %v1870 = vpack.c.bf16 %v1863, %v1858
      %v1872 = vsel %vm737, %v1868, 0
      %v1875 = vsel %vm737, %v1869, 0
      %v1878 = vsel %vm737, %v1870, 0
      %v1881 = vsel %vm946, %v721, 0
      %1883 = vmatprep.subr.bf16.mxu0 0
      %1884 = vmatpush1.bf16.msra.mxu0 %v1881
      %1885 = vmatprep.subr.bf16.mxu0 0
      %1886 = vmatpush1.bf16.msra.mxu0 0
      %1887 = vmatprep.subr.bf16.mxu0 0
      %1888 = vmatpush1.bf16.msra.mxu0 0
      %1889 = vmatprep.subr.bf16.mxu0 0
      %1890 = vmatpush1.bf16.msra.mxu0 0
      %1891 = vmatprep.subr.bf16.mxu0 0
      %1892 = vmatpush1.bf16.msra.mxu0 0
      %1893 = vmatprep.subr.bf16.mxu0 0
      %1894 = vmatpush1.bf16.msra.mxu0 0
      %1895 = vmatprep.subr.bf16.mxu0 0
      %1896 = vmatpush1.bf16.msra.mxu0 0
      %1897 = vmatprep.subr.bf16.mxu0 0
      %1898 = vmatpush1.bf16.msra.mxu0 0
      %1899 = vmatprep.subr.bf16.mxu0 0
      %1900 = vmatpush1.bf16.msra.mxu0 0
      %1901 = vmatprep.subr.bf16.mxu0 0
      %1902 = vmatpush1.bf16.msra.mxu0 0
      %1903 = vmatprep.subr.bf16.mxu0 0
      %1904 = vmatpush1.bf16.msra.mxu0 0
      %1905 = vmatprep.subr.bf16.mxu0 0
      %1906 = vmatpush1.bf16.msra.mxu0 0
      %1907 = vmatprep.subr.bf16.mxu0 0
      %1908 = vmatpush1.bf16.msra.mxu0 0
      %1909 = vmatprep.subr.bf16.mxu0 0
      %1910 = vmatpush1.bf16.msra.mxu0 0
      %1911 = vmatprep.subr.bf16.mxu0 0
      %1912 = vmatpush1.bf16.msra.mxu0 0
      %1913 = vmatprep.subr.bf16.mxu0 0
      %1914 = vmatpush1.bf16.msra.mxu0 0
      %1915 = vmatprep.mubr.bf16.mxu0 0
      %1916 = vmatmul.mubr.bf16.gmra.mrb[0].mxu0 %v1872
      %v1917 = vpop.f32.mrb[0].mxu0
      %v1918 = vadd.f32 0.0, %v1917
      %v1919 = vpop.f32.mrb[0].mxu0
      %v1920 = vpop.f32.mrb[0].mxu0
      %v1921 = vadd.f32 0.0, %v1920
      %v1922 = vpop.f32.mrb[0].mxu0
      %1923 = vmatprep.mubr.bf16.mxu0 0
      %1924 = vmatmul.mubr.bf16.gmra.mrb[0].mxu0 %v1875
      %v1925 = vpop.f32.mrb[0].mxu0
      %v1926 = vadd.f32 0.0, %v1925
      %v1927 = vpop.f32.mrb[0].mxu0
      %v1928 = vpop.f32.mrb[0].mxu0
      %v1929 = vadd.f32 0.0, %v1928
      %v1930 = vpop.f32.mrb[0].mxu0
      %1931 = vmatprep.mubr.bf16.mxu0 0
      %1932 = vmatmul.mubr.bf16.gmra.mrb[0].mxu0 %v1878
      %v1933 = vpop.f32.mrb[0].mxu0
      %v1934 = vadd.f32 0.0, %v1933
      %v1935 = vpop.f32.mrb[0].mxu0
      %v1936 = vpop.f32.mrb[0].mxu0
      %v1937 = vadd.f32 0.0, %v1936
      %v1938 = vpop.f32.mrb[0].mxu0
      %1939 = vdwg.mxu0
      %v1940 = vadd.f32 %v1516, %v1918
      %v1941 = vadd.f32 %v1519, %v1921
      %v1942 = vadd.f32 %v1524, %v1926
      %v1943 = vadd.f32 %v1527, %v1929
      %v1944 = vadd.f32 %v1532, %v1934
      %v1945 = vadd.f32 %v1535, %v1937
      %1946 = vrot.lane.b32.xlu0 %v723, 104
      %v1947 = vpop.permute.xlu0 %1946
      %1948 = vrot.lane.b32.xlu0 %v724, 104
      %v1949 = vpop.permute.xlu0 %1948
      %1950 = vrot.lane.b32.xlu0 %v727, 72
      %v1951 = vpop.permute.xlu0 %1950
      %1952 = vrot.lane.b32.xlu0 %v728, 72
      %v1953 = vpop.permute.xlu0 %1952
      %v1955 = vsel %vm737, %v1947, 0
      %v1958 = vsel %vm737, %v1949, 0
      %v1961 = vsel %vm737, %v1951, 0
      %v1964 = vsel %vm737, %v1953, 0
      %1966 = vmatprep.subr.bf16.mxu0 0
      %1967 = vmatpush1.bf16.xpose.msra.mxu0 %v1961
      %1968 = vmatprep.subr.bf16.mxu0 0
      %1969 = vmatpush1.bf16.xpose.msra.mxu0 %v1964
      %1970 = vmatprep.subr.bf16.mxu0 0
      %1971 = vmatpush1.bf16.xpose.msra.mxu0 0
      %1972 = vmatprep.subr.bf16.mxu0 0
      %1973 = vmatpush1.bf16.xpose.msra.mxu0 0
      %1974 = vmatprep.subr.bf16.mxu0 0
      %1975 = vmatpush1.bf16.xpose.msra.mxu0 0
      %1976 = vmatprep.subr.bf16.mxu0 0
      %1977 = vmatpush1.bf16.xpose.msra.mxu0 0
      %1978 = vmatprep.subr.bf16.mxu0 0
      %1979 = vmatpush1.bf16.xpose.msra.mxu0 0
      %1980 = vmatprep.subr.bf16.mxu0 0
      %1981 = vmatpush1.bf16.xpose.msra.mxu0 0
      %1982 = vmatprep.subr.bf16.mxu0 0
      %1983 = vmatpush1.bf16.xpose.msra.mxu0 0
      %1984 = vmatprep.subr.bf16.mxu0 0
      %1985 = vmatpush1.bf16.xpose.msra.mxu0 0
      %1986 = vmatprep.subr.bf16.mxu0 0
      %1987 = vmatpush1.bf16.xpose.msra.mxu0 0
      %1988 = vmatprep.subr.bf16.mxu0 0
      %1989 = vmatpush1.bf16.xpose.msra.mxu0 0
      %1990 = vmatprep.subr.bf16.mxu0 0
      %1991 = vmatpush1.bf16.xpose.msra.mxu0 0
      %1992 = vmatprep.subr.bf16.mxu0 0
      %1993 = vmatpush1.bf16.xpose.msra.mxu0 0
      %1994 = vmatprep.subr.bf16.mxu0 0
      %1995 = vmatpush1.bf16.xpose.msra.mxu0 0
      %1996 = vmatprep.subr.bf16.mxu0 0
      %1997 = vmatpush1.bf16.xpose.msra.mxu0 0
      %1998 = vmatprep.mubr.bf16.mxu0 0
      %1999 = vmatmul.mubr.bf16.gmra.mrb[0].mxu0 %v1955
      %v2000 = vpop.f32.mrb[0].mxu0
      %v2001 = vadd.f32 %v514, %v2000
      %v2002 = vpop.f32.mrb[0].mxu0
      %v2003 = vpop.f32.mrb[0].mxu0
      %v2004 = vadd.f32 %v514, %v2003
      %v2005 = vpop.f32.mrb[0].mxu0
      %2006 = vmatprep.mubr.bf16.mxu0 0
      %2007 = vmatmul.mubr.bf16.gmra.mrb[0].mxu0 %v1958
      %v2008 = vpop.f32.mrb[0].mxu0
      %v2009 = vadd.f32 %v514, %v2008
      %v2010 = vpop.f32.mrb[0].mxu0
      %v2011 = vpop.f32.mrb[0].mxu0
      %v2012 = vpop.f32.mrb[0].mxu0
      %2013 = vdwg.mxu0
      %2014 = vrot.lane.b32.xlu0 %v725, 104
      %v2015 = vpop.permute.xlu0 %2014
      %2016 = vrot.lane.b32.xlu0 %v726, 104
      %v2017 = vpop.permute.xlu0 %2016
      %2018 = vrot.lane.b32.xlu0 %v729, 72
      %v2019 = vpop.permute.xlu0 %2018
      %2020 = vrot.lane.b32.xlu0 %v730, 72
      %v2021 = vpop.permute.xlu0 %2020
      %v2023 = vsel %vm737, %v2015, 0
      %v2026 = vsel %vm737, %v2017, 0
      %v2029 = vsel %vm737, %v2019, 0
      %v2032 = vsel %vm737, %v2021, 0
      %2034 = vmatprep.subr.bf16.mxu0 0
      %2035 = vmatpush1.bf16.xpose.msra.mxu0 %v2029
      %2036 = vmatprep.subr.bf16.mxu0 0
      %2037 = vmatpush1.bf16.xpose.msra.mxu0 %v2032
      %2038 = vmatprep.subr.bf16.mxu0 0
      %2039 = vmatpush1.bf16.xpose.msra.mxu0 0
      %2040 = vmatprep.subr.bf16.mxu0 0
      %2041 = vmatpush1.bf16.xpose.msra.mxu0 0
      %2042 = vmatprep.subr.bf16.mxu0 0
      %2043 = vmatpush1.bf16.xpose.msra.mxu0 0
      %2044 = vmatprep.subr.bf16.mxu0 0
      %2045 = vmatpush1.bf16.xpose.msra.mxu0 0
      %2046 = vmatprep.subr.bf16.mxu0 0
      %2047 = vmatpush1.bf16.xpose.msra.mxu0 0
      %2048 = vmatprep.subr.bf16.mxu0 0
      %2049 = vmatpush1.bf16.xpose.msra.mxu0 0
      %2050 = vmatprep.subr.bf16.mxu0 0
      %2051 = vmatpush1.bf16.xpose.msra.mxu0 0
      %2052 = vmatprep.subr.bf16.mxu0 0
      %2053 = vmatpush1.bf16.xpose.msra.mxu0 0
      %2054 = vmatprep.subr.bf16.mxu0 0
      %2055 = vmatpush1.bf16.xpose.msra.mxu0 0
      %2056 = vmatprep.subr.bf16.mxu0 0
      %2057 = vmatpush1.bf16.xpose.msra.mxu0 0
      %2058 = vmatprep.subr.bf16.mxu0 0
      %2059 = vmatpush1.bf16.xpose.msra.mxu0 0
      %2060 = vmatprep.subr.bf16.mxu0 0
      %2061 = vmatpush1.bf16.xpose.msra.mxu0 0
      %2062 = vmatprep.subr.bf16.mxu0 0
      %2063 = vmatpush1.bf16.xpose.msra.mxu0 0
      %2064 = vmatprep.subr.bf16.mxu0 0
      %2065 = vmatpush1.bf16.xpose.msra.mxu0 0
      %2066 = vmatprep.mubr.bf16.mxu0 0
      %2067 = vmatmul.mubr.bf16.gmra.mrb[0].mxu0 %v2023
      %v2068 = vpop.f32.mrb[0].mxu0
      %v2069 = vadd.f32 %v514, %v2068
      %v2070 = vpop.f32.mrb[0].mxu0
      %v2071 = vpop.f32.mrb[0].mxu0
      %v2072 = vadd.f32 %v514, %v2071
      %v2073 = vpop.f32.mrb[0].mxu0
      %2074 = vmatprep.mubr.bf16.mxu0 0
      %2075 = vmatmul.mubr.bf16.gmra.mrb[0].mxu0 %v2026
      %v2076 = vpop.f32.mrb[0].mxu0
      %v2077 = vadd.f32 %v514, %v2076
      %v2078 = vpop.f32.mrb[0].mxu0
      %v2079 = vpop.f32.mrb[0].mxu0
      %v2080 = vpop.f32.mrb[0].mxu0
      %2081 = vdwg.mxu0
      %v2082 = vsel %vm864, %v2001, -inf
      %2083 = vmax.xlane.f32.xlu0 %v2082
      %v2084 = vpop.xlane.xlu0 %2083
      %v2085 = vsel %vm864, %v2004, -inf
      %2086 = vmax.xlane.f32.xlu0 %v2085
      %v2087 = vpop.xlane.xlu0 %2086
      %v2088 = vsel %vm864, %v2009, -inf
      %2089 = vmax.xlane.f32.xlu0 %v2088
      %v2090 = vpop.xlane.xlu0 %2089
      %v2091 = vsel %vm864, %v2069, -inf
      %2092 = vmax.xlane.f32.xlu0 %v2091
      %v2093 = vpop.xlane.xlu0 %2092
      %v2094 = vsel %vm864, %v2072, -inf
      %2095 = vmax.xlane.f32.xlu0 %v2094
      %v2096 = vpop.xlane.xlu0 %2095
      %v2097 = vsel %vm864, %v2077, -inf
      %2098 = vmax.xlane.f32.xlu0 %v2097
      %v2099 = vpop.xlane.xlu0 %2098
      %v2100 = vsub.f32 %v2001, %v2084
      %v2101 = vsub.f32 %v2004, %v2087
      %v2102 = vsub.f32 %v2009, %v2090
      %v2103 = vsub.f32 %v2069, %v2093
      %v2104 = vsub.f32 %v2072, %v2096
      %v2105 = vsub.f32 %v2077, %v2099
      %v2106 = vmul.f32 %v2100, 1.442695
      %v2107 = vpow.pop %v2106
      %v2108 = vmul.f32 %v2101, 1.442695
      %v2109 = vpow.pop %v2108
      %v2110 = vmul.f32 %v2102, 1.442695
      %v2111 = vpow.pop %v2110
      %v2112 = vmul.f32 %v2103, 1.442695
      %v2113 = vpow.pop %v2112
      %v2114 = vmul.f32 %v2104, 1.442695
      %v2115 = vpow.pop %v2114
      %v2116 = vmul.f32 %v2105, 1.442695
      %v2117 = vpow.pop %v2116
      %v2118 = vsel %vm864, %v2107, 0.0
      %2119 = vadd.xlane.f32.xlu0 %v2118
      %v2120 = vpop.xlane.xlu0 %2119
      %v2121 = vsel %vm864, %v2109, 0.0
      %2122 = vadd.xlane.f32.xlu0 %v2121
      %v2123 = vpop.xlane.xlu0 %2122
      %v2124 = vsel %vm864, %v2111, 0.0
      %2125 = vadd.xlane.f32.xlu0 %v2124
      %v2126 = vpop.xlane.xlu0 %2125
      %v2127 = vsel %vm864, %v2113, 0.0
      %2128 = vadd.xlane.f32.xlu0 %v2127
      %v2129 = vpop.xlane.xlu0 %2128
      %v2130 = vsel %vm864, %v2115, 0.0
      %2131 = vadd.xlane.f32.xlu0 %v2130
      %v2132 = vpop.xlane.xlu0 %2131
      %v2133 = vsel %vm864, %v2117, 0.0
      %2134 = vadd.xlane.f32.xlu0 %v2133
      %v2135 = vpop.xlane.xlu0 %2134
      %v2136 = vrcp.pop %v2120
      %v2137 = vrcp.pop %v2123
      %v2138 = vrcp.pop %v2126
      %v2139 = vrcp.pop %v2129
      %v2140 = vrcp.pop %v2132
      %v2141 = vrcp.pop %v2135
      %v2142 = vmul.f32 %v2107, %v2136
      %v2143 = vmul.f32 %v2109, %v2137
      %v2144 = vmul.f32 %v2111, %v2138
      %v2145 = vmul.f32 %v2113, %v2139
      %v2146 = vmul.f32 %v2115, %v2140
      %v2147 = vmul.f32 %v2117, %v2141
      %v2148 = vpack.c.bf16 %v2143, %v2142
      %v2149 = vpack.c.bf16 %v2144, %v2144
      %v2150 = vpack.c.bf16 %v2146, %v2145
      %v2151 = vpack.c.bf16 %v2147, %v2147
      %2152 = vrot.lane.b32.xlu0 %v727, 40
      %v2153 = vpop.permute.xlu0 %2152
      %2154 = vrot.lane.b32.xlu0 %v728, 40
      %v2155 = vpop.permute.xlu0 %2154
      %v2158 = vsel %vm864, %v2148, 0
      %v2161 = vsel %vm864, %v2149, 0
      %v2164 = vsel %vm946, %v2155, 0
      %2166 = vmatprep.subr.bf16.mxu0 0
      %2167 = vmatpush1.bf16.msra.mxu0 %v2153
      %2168 = vmatprep.subr.bf16.mxu0 0
      %2169 = vmatpush1.bf16.msra.mxu0 %v2164
      %2170 = vmatprep.subr.bf16.mxu0 0
      %2171 = vmatpush1.bf16.msra.mxu0 0
      %2172 = vmatprep.subr.bf16.mxu0 0
      %2173 = vmatpush1.bf16.msra.mxu0 0
      %2174 = vmatprep.subr.bf16.mxu0 0
      %2175 = vmatpush1.bf16.msra.mxu0 0
      %2176 = vmatprep.subr.bf16.mxu0 0
      %2177 = vmatpush1.bf16.msra.mxu0 0
      %2178 = vmatprep.subr.bf16.mxu0 0
      %2179 = vmatpush1.bf16.msra.mxu0 0
      %2180 = vmatprep.subr.bf16.mxu0 0
      %2181 = vmatpush1.bf16.msra.mxu0 0
      %2182 = vmatprep.subr.bf16.mxu0 0
      %2183 = vmatpush1.bf16.msra.mxu0 0
      %2184 = vmatprep.subr.bf16.mxu0 0
      %2185 = vmatpush1.bf16.msra.mxu0 0
      %2186 = vmatprep.subr.bf16.mxu0 0
      %2187 = vmatpush1.bf16.msra.mxu0 0
      %2188 = vmatprep.subr.bf16.mxu0 0
      %2189 = vmatpush1.bf16.msra.mxu0 0
      %2190 = vmatprep.subr.bf16.mxu0 0
      %2191 = vmatpush1.bf16.msra.mxu0 0
      %2192 = vmatprep.subr.bf16.mxu0 0
      %2193 = vmatpush1.bf16.msra.mxu0 0
      %2194 = vmatprep.subr.bf16.mxu0 0
      %2195 = vmatpush1.bf16.msra.mxu0 0
      %2196 = vmatprep.subr.bf16.mxu0 0
      %2197 = vmatpush1.bf16.msra.mxu0 0
      %2198 = vmatprep.mubr.bf16.mxu0 0
      %2199 = vmatmul.mubr.bf16.gmra.mrb[0].mxu0 %v2158
      %v2200 = vpop.f32.mrb[0].mxu0
      %v2201 = vadd.f32 0.0, %v2200
      %v2202 = vpop.f32.mrb[0].mxu0
      %v2203 = vpop.f32.mrb[0].mxu0
      %v2204 = vadd.f32 0.0, %v2203
      %v2205 = vpop.f32.mrb[0].mxu0
      %2206 = vmatprep.mubr.bf16.mxu0 0
      %2207 = vmatmul.mubr.bf16.gmra.mrb[0].mxu0 %v2161
      %v2208 = vpop.f32.mrb[0].mxu0
      %v2209 = vadd.f32 0.0, %v2208
      %v2210 = vpop.f32.mrb[0].mxu0
      %v2211 = vpop.f32.mrb[0].mxu0
      %v2212 = vpop.f32.mrb[0].mxu0
      %2213 = vdwg.mxu0
      %2214 = vrot.lane.b32.xlu0 %v729, 40
      %v2215 = vpop.permute.xlu0 %2214
      %2216 = vrot.lane.b32.xlu0 %v730, 40
      %v2217 = vpop.permute.xlu0 %2216
      %v2220 = vsel %vm864, %v2150, 0
      %v2223 = vsel %vm864, %v2151, 0
      %v2226 = vsel %vm946, %v2217, 0
      %2228 = vmatprep.subr.bf16.mxu0 0
      %2229 = vmatpush1.bf16.msra.mxu0 %v2215
      %2230 = vmatprep.subr.bf16.mxu0 0
      %2231 = vmatpush1.bf16.msra.mxu0 %v2226
      %2232 = vmatprep.subr.bf16.mxu0 0
      %2233 = vmatpush1.bf16.msra.mxu0 0
      %2234 = vmatprep.subr.bf16.mxu0 0
      %2235 = vmatpush1.bf16.msra.mxu0 0
      %2236 = vmatprep.subr.bf16.mxu0 0
      %2237 = vmatpush1.bf16.msra.mxu0 0
      %2238 = vmatprep.subr.bf16.mxu0 0
      %2239 = vmatpush1.bf16.msra.mxu0 0
      %2240 = vmatprep.subr.bf16.mxu0 0
      %2241 = vmatpush1.bf16.msra.mxu0 0
      %2242 = vmatprep.subr.bf16.mxu0 0
      %2243 = vmatpush1.bf16.msra.mxu0 0
      %2244 = vmatprep.subr.bf16.mxu0 0
      %2245 = vmatpush1.bf16.msra.mxu0 0
      %2246 = vmatprep.subr.bf16.mxu0 0
      %2247 = vmatpush1.bf16.msra.mxu0 0
      %2248 = vmatprep.subr.bf16.mxu0 0
      %2249 = vmatpush1.bf16.msra.mxu0 0
      %2250 = vmatprep.subr.bf16.mxu0 0
      %2251 = vmatpush1.bf16.msra.mxu0 0
      %2252 = vmatprep.subr.bf16.mxu0 0
      %2253 = vmatpush1.bf16.msra.mxu0 0
      %2254 = vmatprep.subr.bf16.mxu0 0
      %2255 = vmatpush1.bf16.msra.mxu0 0
      %2256 = vmatprep.subr.bf16.mxu0 0
      %2257 = vmatpush1.bf16.msra.mxu0 0
      %2258 = vmatprep.subr.bf16.mxu0 0
      %2259 = vmatpush1.bf16.msra.mxu0 0
      %2260 = vmatprep.mubr.bf16.mxu0 0
      %2261 = vmatmul.mubr.bf16.gmra.mrb[0].mxu0 %v2220
      %v2262 = vpop.f32.mrb[0].mxu0
      %v2263 = vadd.f32 0.0, %v2262
      %v2264 = vpop.f32.mrb[0].mxu0
      %v2265 = vpop.f32.mrb[0].mxu0
      %v2266 = vadd.f32 0.0, %v2265
      %v2267 = vpop.f32.mrb[0].mxu0
      %2268 = vmatprep.mubr.bf16.mxu0 0
      %2269 = vmatmul.mubr.bf16.gmra.mrb[0].mxu0 %v2223
      %v2270 = vpop.f32.mrb[0].mxu0
      %v2271 = vadd.f32 0.0, %v2270
      %v2272 = vpop.f32.mrb[0].mxu0
      %v2273 = vpop.f32.mrb[0].mxu0
      %v2274 = vpop.f32.mrb[0].mxu0
      %2275 = vdwg.mxu0
      %v2276 = vpack.c.bf16 %v2204, %v2201
      %v2277 = vpack.c.bf16 %v2263, %v2209
      %v2278 = vpack.c.bf16 %v2271, %v2266
      %v2280 = vsel %vm737, %v2276, 0
      %v2283 = vsel %vm737, %v2277, 0
      %v2286 = vsel %vm737, %v2278, 0
      %v2289 = vsel %vm946, %v722, 0
      %2291 = vmatprep.subr.bf16.mxu0 0
      %2292 = vmatpush1.bf16.msra.mxu0 %v2289
      %2293 = vmatprep.subr.bf16.mxu0 0
      %2294 = vmatpush1.bf16.msra.mxu0 0
      %2295 = vmatprep.subr.bf16.mxu0 0
      %2296 = vmatpush1.bf16.msra.mxu0 0
      %2297 = vmatprep.subr.bf16.mxu0 0
      %2298 = vmatpush1.bf16.msra.mxu0 0
      %2299 = vmatprep.subr.bf16.mxu0 0
      %2300 = vmatpush1.bf16.msra.mxu0 0
      %2301 = vmatprep.subr.bf16.mxu0 0
      %2302 = vmatpush1.bf16.msra.mxu0 0
      %2303 = vmatprep.subr.bf16.mxu0 0
      %2304 = vmatpush1.bf16.msra.mxu0 0
      %2305 = vmatprep.subr.bf16.mxu0 0
      %2306 = vmatpush1.bf16.msra.mxu0 0
      %2307 = vmatprep.subr.bf16.mxu0 0
      %2308 = vmatpush1.bf16.msra.mxu0 0
      %2309 = vmatprep.subr.bf16.mxu0 0
      %2310 = vmatpush1.bf16.msra.mxu0 0
      %2311 = vmatprep.subr.bf16.mxu0 0
      %2312 = vmatpush1.bf16.msra.mxu0 0
      %2313 = vmatprep.subr.bf16.mxu0 0
      %2314 = vmatpush1.bf16.msra.mxu0 0
      %2315 = vmatprep.subr.bf16.mxu0 0
      %2316 = vmatpush1.bf16.msra.mxu0 0
      %2317 = vmatprep.subr.bf16.mxu0 0
      %2318 = vmatpush1.bf16.msra.mxu0 0
      %2319 = vmatprep.subr.bf16.mxu0 0
      %2320 = vmatpush1.bf16.msra.mxu0 0
      %2321 = vmatprep.subr.bf16.mxu0 0
      %2322 = vmatpush1.bf16.msra.mxu0 0
      %2323 = vmatprep.mubr.bf16.mxu0 0
      %2324 = vmatmul.mubr.bf16.gmra.mrb[0].mxu0 %v2280
      %v2325 = vpop.f32.mrb[0].mxu0
      %v2326 = vadd.f32 0.0, %v2325
      %v2327 = vpop.f32.mrb[0].mxu0
      %v2328 = vpop.f32.mrb[0].mxu0
      %v2329 = vadd.f32 0.0, %v2328
      %v2330 = vpop.f32.mrb[0].mxu0
      %2331 = vmatprep.mubr.bf16.mxu0 0
      %2332 = vmatmul.mubr.bf16.gmra.mrb[0].mxu0 %v2283
      %v2333 = vpop.f32.mrb[0].mxu0
      %v2334 = vadd.f32 0.0, %v2333
      %v2335 = vpop.f32.mrb[0].mxu0
      %v2336 = vpop.f32.mrb[0].mxu0
      %v2337 = vadd.f32 0.0, %v2336
      %v2338 = vpop.f32.mrb[0].mxu0
      %2339 = vmatprep.mubr.bf16.mxu0 0
      %2340 = vmatmul.mubr.bf16.gmra.mrb[0].mxu0 %v2286
      %v2341 = vpop.f32.mrb[0].mxu0
      %v2342 = vadd.f32 0.0, %v2341
      %v2343 = vpop.f32.mrb[0].mxu0
      %v2344 = vpop.f32.mrb[0].mxu0
      %v2345 = vadd.f32 0.0, %v2344
      %v2346 = vpop.f32.mrb[0].mxu0
      %2347 = vdwg.mxu0
      %v2348 = vadd.f32 %v1940, %v2326
      %v2349 = vadd.f32 %v1941, %v2329
      %v2350 = vadd.f32 %v1942, %v2334
      %v2351 = vadd.f32 %v1943, %v2337
      %v2352 = vadd.f32 %v1944, %v2342
      %v2353 = vadd.f32 %v1945, %v2345
      %v2354 = vld [vmem:[%s7] sm:$0x1]
      %v2356 = vlaneseq
      %v2357 = vshrl.u32 %v2356, 7
      %v2358 = vsub.s32 0, %v2357
      %v2359 = vrot.slane %v2354, %v2358
      %v2361 = vadd.f32 %v2348, %v2359
      %v2362 = vadd.f32 %v2349, %v2359
      %v2363 = vadd.f32 %v2350, %v2359
      %v2364 = vadd.f32 %v2351, %v2359
      %v2365 = vadd.f32 %v2352, %v2359
      %v2366 = vadd.f32 %v2353, %v2359
      %v2367 = vadd.f32 %v504, %v2361
      %v2368 = vadd.f32 %v505, %v2362
      %v2369 = vadd.f32 %v506, %v2363
      %v2370 = vadd.f32 %v507, %v2364
      %v2371 = vadd.f32 %v508, %v2365
      %v2372 = vadd.f32 %v509, %v2366
      %v2373 = vsel %vm515, %v2367, 0.0
      %2374 = vadd.xlane.f32.xlu0 %v2373
      %v2375 = vpop.xlane.xlu0 %2374
      %v2376 = vsel %vm515, %v2368, 0.0
      %2377 = vadd.xlane.f32.xlu0 %v2376
      %v2378 = vpop.xlane.xlu0 %2377
      %v2379 = vsel %vm515, %v2369, 0.0
      %2380 = vadd.xlane.f32.xlu0 %v2379
      %v2381 = vpop.xlane.xlu0 %2380
      %v2382 = vsel %vm515, %v2370, 0.0
      %2383 = vadd.xlane.f32.xlu0 %v2382
      %v2384 = vpop.xlane.xlu0 %2383
      %v2385 = vsel %vm515, %v2371, 0.0
      %2386 = vadd.xlane.f32.xlu0 %v2385
      %v2387 = vpop.xlane.xlu0 %2386
      %v2388 = vsel %vm515, %v2372, 0.0
      %2389 = vadd.xlane.f32.xlu0 %v2388
      %v2390 = vpop.xlane.xlu0 %2389
      %v2391 = vmul.f32 %v2375, %v534
      %v2392 = vmul.f32 %v2378, %v534
      %v2393 = vmul.f32 %v2381, %v534
      %v2394 = vmul.f32 %v2384, %v534
      %v2395 = vmul.f32 %v2387, %v534
      %v2396 = vmul.f32 %v2390, %v534
      %v2397 = vsub.f32 %v2367, %v2391
      %v2398 = vsub.f32 %v2368, %v2392
      %v2399 = vsub.f32 %v2369, %v2393
      %v2400 = vsub.f32 %v2370, %v2394
      %v2401 = vsub.f32 %v2371, %v2395
      %v2402 = vsub.f32 %v2372, %v2396
      %v2403 = vmul.f32 %v2397, %v2397
      %v2404 = vmul.f32 %v2398, %v2398
      %v2405 = vmul.f32 %v2399, %v2399
      %v2406 = vmul.f32 %v2400, %v2400
      %v2407 = vmul.f32 %v2401, %v2401
      %v2408 = vmul.f32 %v2402, %v2402
      %v2409 = vsel %vm515, %v2403, 0.0
      %2410 = vadd.xlane.f32.xlu0 %v2409
      %v2411 = vpop.xlane.xlu0 %2410
      %v2412 = vsel %vm515, %v2404, 0.0
      %2413 = vadd.xlane.f32.xlu0 %v2412
      %v2414 = vpop.xlane.xlu0 %2413
      %v2415 = vsel %vm515, %v2405, 0.0
      %2416 = vadd.xlane.f32.xlu0 %v2415
      %v2417 = vpop.xlane.xlu0 %2416
      %v2418 = vsel %vm515, %v2406, 0.0
      %2419 = vadd.xlane.f32.xlu0 %v2418
      %v2420 = vpop.xlane.xlu0 %2419
      %v2421 = vsel %vm515, %v2407, 0.0
      %2422 = vadd.xlane.f32.xlu0 %v2421
      %v2423 = vpop.xlane.xlu0 %2422
      %v2424 = vsel %vm515, %v2408, 0.0
      %2425 = vadd.xlane.f32.xlu0 %v2424
      %v2426 = vpop.xlane.xlu0 %2425
      %v2427 = vmul.f32 %v2411, %v534
      %v2428 = vmul.f32 %v2414, %v534
      %v2429 = vmul.f32 %v2417, %v534
      %v2430 = vmul.f32 %v2420, %v534
      %v2431 = vmul.f32 %v2423, %v534
      %v2432 = vmul.f32 %v2426, %v534
      %v2433 = vadd.f32 %v2427, 1e-06
      %v2434 = vadd.f32 %v2428, 1e-06
      %v2435 = vadd.f32 %v2429, 1e-06
      %v2436 = vadd.f32 %v2430, 1e-06
      %v2437 = vadd.f32 %v2431, 1e-06
      %v2438 = vadd.f32 %v2432, 1e-06
      %v2439 = vrsqrt.pop %v2433
      %v2440 = vrsqrt.pop %v2434
      %v2441 = vrsqrt.pop %v2435
      %v2442 = vrsqrt.pop %v2436
      %v2443 = vrsqrt.pop %v2437
      %v2444 = vrsqrt.pop %v2438
      %v2445 = vmul.f32 %v2397, %v2439
      %v2446 = vmul.f32 %v2398, %v2440
      %v2447 = vmul.f32 %v2399, %v2441
      %v2448 = vmul.f32 %v2400, %v2442
      %v2449 = vmul.f32 %v2401, %v2443
      %v2450 = vmul.f32 %v2402, %v2444
      %v2451 = vld [vmem:[%s8] sm:$0x1]
      %v2453 = vlaneseq
      %v2454 = vshrl.u32 %v2453, 7
      %v2455 = vsub.s32 0, %v2454
      %v2456 = vrot.slane %v2451, %v2455
      %v2458 = vmul.f32 %v2445, %v2456
      %v2459 = vmul.f32 %v2446, %v2456
      %v2460 = vmul.f32 %v2447, %v2456
      %v2461 = vmul.f32 %v2448, %v2456
      %v2462 = vmul.f32 %v2449, %v2456
      %v2463 = vmul.f32 %v2450, %v2456
      %v2464 = vld [vmem:[%s9] sm:$0x1]
      %v2466 = vlaneseq
      %v2467 = vshrl.u32 %v2466, 7
      %v2468 = vsub.s32 0, %v2467
      %v2469 = vrot.slane %v2464, %v2468
      %v2471 = vadd.f32 %v2458, %v2469
      %v2472 = vadd.f32 %v2459, %v2469
      %v2473 = vadd.f32 %v2460, %v2469
      %v2474 = vadd.f32 %v2461, %v2469
      %v2475 = vadd.f32 %v2462, %v2469
      %v2476 = vadd.f32 %v2463, %v2469
      %v2477 = vpack.c.bf16 %v2472, %v2471
      %v2478 = vpack.c.bf16 %v2474, %v2473
      %v2479 = vpack.c.bf16 %v2476, %v2475
      %v2480 = vld [vmem:[%s10] sm:$0xf]
      %v2481 = vld [vmem:[%s10 + $0x4] sm:$0xf]
      %v2482 = vld [vmem:[%s10 + $0x8] sm:$0xf]
      %v2483 = vld [vmem:[%s10 + $0xc] sm:$0xf]
      %v2484 = vld [vmem:[%s11] sm:$0x1]
      %v2486 = vlaneseq
      %v2487 = vshrl.u32 %v2486, 7
      %v2488 = vsub.s32 0, %v2487
      %v2489 = vrot.slane %v2484, %v2488
      %v2495 = vunpack.c.l.b16 %v2480
      %v2496 = vunpack.c.l.b16 %v2481
      %v2497 = vunpack.c.l.b16 %v2482
      %v2498 = vunpack.c.l.b16 %v2483
      %v2499 = vpack.c.b16 %v2496, %v2495
      %v2500 = vpack.c.b16 %v2498, %v2497
      %v2504 = vsel %vm515, %v2477, 0
      %v2507 = vsel %vm515, %v2478, 0
      %v2510 = vsel %vm515, %v2479, 0
      %2512 = vmatprep.subr.bf16.mxu0 0
      %2513 = vmatpush1.bf16.msra.mxu0 %v2499
      %2514 = vmatprep.subr.bf16.mxu0 0
      %2515 = vmatpush1.bf16.msra.mxu0 %v2500
      %2516 = vmatprep.subr.bf16.mxu0 0
      %2517 = vmatpush1.bf16.msra.mxu0 0
      %2518 = vmatprep.subr.bf16.mxu0 0
      %2519 = vmatpush1.bf16.msra.mxu0 0
      %2520 = vmatprep.subr.bf16.mxu0 0
      %2521 = vmatpush1.bf16.msra.mxu0 0
      %2522 = vmatprep.subr.bf16.mxu0 0
      %2523 = vmatpush1.bf16.msra.mxu0 0
      %2524 = vmatprep.subr.bf16.mxu0 0
      %2525 = vmatpush1.bf16.msra.mxu0 0
      %2526 = vmatprep.subr.bf16.mxu0 0
      %2527 = vmatpush1.bf16.msra.mxu0 0
      %2528 = vmatprep.subr.bf16.mxu0 0
      %2529 = vmatpush1.bf16.msra.mxu0 0
      %2530 = vmatprep.subr.bf16.mxu0 0
      %2531 = vmatpush1.bf16.msra.mxu0 0
      %2532 = vmatprep.subr.bf16.mxu0 0
      %2533 = vmatpush1.bf16.msra.mxu0 0
      %2534 = vmatprep.subr.bf16.mxu0 0
      %2535 = vmatpush1.bf16.msra.mxu0 0
      %2536 = vmatprep.subr.bf16.mxu0 0
      %2537 = vmatpush1.bf16.msra.mxu0 0
      %2538 = vmatprep.subr.bf16.mxu0 0
      %2539 = vmatpush1.bf16.msra.mxu0 0
      %2540 = vmatprep.subr.bf16.mxu0 0
      %2541 = vmatpush1.bf16.msra.mxu0 0
      %2542 = vmatprep.subr.bf16.mxu0 0
      %2543 = vmatpush1.bf16.msra.mxu0 0
      %2544 = vmatprep.mubr.bf16.mxu0 0
      %2545 = vmatmul.mubr.bf16.gmra.mrb[0].mxu0 %v2504
      %v2546 = vpop.f32.mrb[0].mxu0
      %v2547 = vadd.f32 %v2489, %v2546
      %v2548 = vpop.f32.mrb[0].mxu0
      %v2549 = vpop.f32.mrb[0].mxu0
      %v2550 = vadd.f32 %v2489, %v2549
      %v2551 = vpop.f32.mrb[0].mxu0
      %2552 = vmatprep.mubr.bf16.mxu0 0
      %2553 = vmatmul.mubr.bf16.gmra.mrb[0].mxu0 %v2507
      %v2554 = vpop.f32.mrb[0].mxu0
      %v2555 = vadd.f32 %v2489, %v2554
      %v2556 = vpop.f32.mrb[0].mxu0
      %v2557 = vpop.f32.mrb[0].mxu0
      %v2558 = vadd.f32 %v2489, %v2557
      %v2559 = vpop.f32.mrb[0].mxu0
      %2560 = vmatprep.mubr.bf16.mxu0 0
      %2561 = vmatmul.mubr.bf16.gmra.mrb[0].mxu0 %v2510
      %v2562 = vpop.f32.mrb[0].mxu0
      %v2563 = vadd.f32 %v2489, %v2562
      %v2564 = vpop.f32.mrb[0].mxu0
      %v2565 = vpop.f32.mrb[0].mxu0
      %v2566 = vadd.f32 %v2489, %v2565
      %v2567 = vpop.f32.mrb[0].mxu0
      %2568 = vdwg.mxu0
      %v2569 = vmul.f32 %v2547, %v2547
      %v2570 = vmul.f32 %v2550, %v2550
      %v2571 = vmul.f32 %v2555, %v2555
      %v2572 = vmul.f32 %v2558, %v2558
      %v2573 = vmul.f32 %v2563, %v2563
      %v2574 = vmul.f32 %v2566, %v2566
      %v2575 = vmul.f32 %v2547, %v2569
      %v2576 = vmul.f32 %v2550, %v2570
      %v2577 = vmul.f32 %v2555, %v2571
      %v2578 = vmul.f32 %v2558, %v2572
      %v2579 = vmul.f32 %v2563, %v2573
      %v2580 = vmul.f32 %v2566, %v2574
      %v2581 = vmul.f32 %v2575, 0.044715
      %v2582 = vmul.f32 %v2576, 0.044715
      %v2583 = vmul.f32 %v2577, 0.044715
      %v2584 = vmul.f32 %v2578, 0.044715
      %v2585 = vmul.f32 %v2579, 0.044715
      %v2586 = vmul.f32 %v2580, 0.044715
      %v2587 = vadd.f32 %v2547, %v2581
      %v2588 = vadd.f32 %v2550, %v2582
      %v2589 = vadd.f32 %v2555, %v2583
      %v2590 = vadd.f32 %v2558, %v2584
      %v2591 = vadd.f32 %v2563, %v2585
      %v2592 = vadd.f32 %v2566, %v2586
      %v2593 = vmul.f32 %v2587, 0.7978846
      %v2594 = vmul.f32 %v2588, 0.7978846
      %v2595 = vmul.f32 %v2589, 0.7978846
      %v2596 = vmul.f32 %v2590, 0.7978846
      %v2597 = vmul.f32 %v2591, 0.7978846
      %v2598 = vmul.f32 %v2592, 0.7978846
      %v2599 = vtanh.pop %v2593
      %v2600 = vtanh.pop %v2594
      %v2601 = vtanh.pop %v2595
      %v2602 = vtanh.pop %v2596
      %v2603 = vtanh.pop %v2597
      %v2604 = vtanh.pop %v2598
      %v2605 = vadd.f32 %v2599, 1.0
      %v2606 = vadd.f32 %v2600, 1.0
      %v2607 = vadd.f32 %v2601, 1.0
      %v2608 = vadd.f32 %v2602, 1.0
      %v2609 = vadd.f32 %v2603, 1.0
      %v2610 = vadd.f32 %v2604, 1.0
      %v2611 = vmul.f32 %v2605, 0.5
      %v2612 = vmul.f32 %v2606, 0.5
      %v2613 = vmul.f32 %v2607, 0.5
      %v2614 = vmul.f32 %v2608, 0.5
      %v2615 = vmul.f32 %v2609, 0.5
      %v2616 = vmul.f32 %v2610, 0.5
      %v2617 = vmul.f32 %v2547, %v2611
      %v2618 = vmul.f32 %v2550, %v2612
      %v2619 = vmul.f32 %v2555, %v2613
      %v2620 = vmul.f32 %v2558, %v2614
      %v2621 = vmul.f32 %v2563, %v2615
      %v2622 = vmul.f32 %v2566, %v2616
      %v2623 = vpack.c.bf16 %v2618, %v2617
      %v2624 = vpack.c.bf16 %v2620, %v2619
      %v2625 = vpack.c.bf16 %v2622, %v2621
      %v2626 = vld [vmem:[%s12] sm:$0xf]
      %v2627 = vld [vmem:[%s12 + $0x4] sm:$0xf]
      %v2628 = vld [vmem:[%s12 + $0x8] sm:$0xf]
      %v2629 = vld [vmem:[%s12 + $0xc] sm:$0xf]
      %v2630 = vld [vmem:[%s12 + $0x10] sm:$0xf]
      %v2631 = vld [vmem:[%s12 + $0x14] sm:$0xf]
      %v2632 = vld [vmem:[%s12 + $0x18] sm:$0xf]
      %v2633 = vld [vmem:[%s12 + $0x1c] sm:$0xf]
      %v2634 = vld [vmem:[%s12 + $0x20] sm:$0xf]
      %v2635 = vld [vmem:[%s12 + $0x24] sm:$0xf]
      %v2636 = vld [vmem:[%s12 + $0x28] sm:$0xf]
      %v2637 = vld [vmem:[%s12 + $0x2c] sm:$0xf]
      %v2638 = vld [vmem:[%s12 + $0x30] sm:$0xf]
      %v2639 = vld [vmem:[%s12 + $0x34] sm:$0xf]
      %v2640 = vld [vmem:[%s12 + $0x38] sm:$0xf]
      %v2641 = vld [vmem:[%s12 + $0x3c] sm:$0xf]
      %v2642 = vld [vmem:[%s13] sm:$0x1]
      %v2644 = vlaneseq
      %v2645 = vshrl.u32 %v2644, 7
      %v2646 = vsub.s32 0, %v2645
      %v2647 = vrot.slane %v2642, %v2646
      %v2665 = vunpack.c.l.b16 %v2626
      %v2666 = vunpack.c.l.b16 %v2627
      %v2667 = vunpack.c.l.b16 %v2628
      %v2668 = vunpack.c.l.b16 %v2629
      %v2669 = vunpack.c.l.b16 %v2630
      %v2670 = vunpack.c.l.b16 %v2631
      %v2671 = vunpack.c.l.b16 %v2632
      %v2672 = vunpack.c.l.b16 %v2633
      %v2673 = vunpack.c.l.b16 %v2634
      %v2674 = vunpack.c.l.b16 %v2635
      %v2675 = vunpack.c.l.b16 %v2636
      %v2676 = vunpack.c.l.b16 %v2637
      %v2677 = vunpack.c.l.b16 %v2638
      %v2678 = vunpack.c.l.b16 %v2639
      %v2679 = vunpack.c.l.b16 %v2640
      %v2680 = vunpack.c.l.b16 %v2641
      %v2681 = vpack.c.b16 %v2666, %v2665
      %v2682 = vpack.c.b16 %v2668, %v2667
      %v2683 = vpack.c.b16 %v2670, %v2669
      %v2684 = vpack.c.b16 %v2672, %v2671
      %v2685 = vpack.c.b16 %v2674, %v2673
      %v2686 = vpack.c.b16 %v2676, %v2675
      %v2687 = vpack.c.b16 %v2678, %v2677
      %v2688 = vpack.c.b16 %v2680, %v2679
      %2697 = vmatprep.subr.bf16.mxu0 0
      %2698 = vmatpush1.bf16.msra.mxu0 %v2681
      %2699 = vmatprep.subr.bf16.mxu0 0
      %2700 = vmatpush1.bf16.msra.mxu0 %v2682
      %2701 = vmatprep.subr.bf16.mxu0 0
      %2702 = vmatpush1.bf16.msra.mxu0 %v2683
      %2703 = vmatprep.subr.bf16.mxu0 0
      %2704 = vmatpush1.bf16.msra.mxu0 %v2684
      %2705 = vmatprep.subr.bf16.mxu0 0
      %2706 = vmatpush1.bf16.msra.mxu0 %v2685
      %2707 = vmatprep.subr.bf16.mxu0 0
      %2708 = vmatpush1.bf16.msra.mxu0 %v2686
      %2709 = vmatprep.subr.bf16.mxu0 0
      %2710 = vmatpush1.bf16.msra.mxu0 %v2687
      %2711 = vmatprep.subr.bf16.mxu0 0
      %2712 = vmatpush1.bf16.msra.mxu0 %v2688
      %2713 = vmatprep.subr.bf16.mxu0 0
      %2714 = vmatpush1.bf16.msra.mxu0 0
      %2715 = vmatprep.subr.bf16.mxu0 0
      %2716 = vmatpush1.bf16.msra.mxu0 0
      %2717 = vmatprep.subr.bf16.mxu0 0
      %2718 = vmatpush1.bf16.msra.mxu0 0
      %2719 = vmatprep.subr.bf16.mxu0 0
      %2720 = vmatpush1.bf16.msra.mxu0 0
      %2721 = vmatprep.subr.bf16.mxu0 0
      %2722 = vmatpush1.bf16.msra.mxu0 0
      %2723 = vmatprep.subr.bf16.mxu0 0
      %2724 = vmatpush1.bf16.msra.mxu0 0
      %2725 = vmatprep.subr.bf16.mxu0 0
      %2726 = vmatpush1.bf16.msra.mxu0 0
      %2727 = vmatprep.subr.bf16.mxu0 0
      %2728 = vmatpush1.bf16.msra.mxu0 0
      %2729 = vmatprep.mubr.bf16.mxu0 0
      %2730 = vmatmul.mubr.bf16.gmra.mrb[0].mxu0 %v2623
      %v2731 = vpop.f32.mrb[0].mxu0
      %v2732 = vadd.f32 %v2647, %v2731
      %v2733 = vpop.f32.mrb[0].mxu0
      %v2734 = vpop.f32.mrb[0].mxu0
      %v2735 = vadd.f32 %v2647, %v2734
      %v2736 = vpop.f32.mrb[0].mxu0
      %2737 = vmatprep.mubr.bf16.mxu0 0
      %2738 = vmatmul.mubr.bf16.gmra.mrb[0].mxu0 %v2624
      %v2739 = vpop.f32.mrb[0].mxu0
      %v2740 = vadd.f32 %v2647, %v2739
      %v2741 = vpop.f32.mrb[0].mxu0
      %v2742 = vpop.f32.mrb[0].mxu0
      %v2743 = vadd.f32 %v2647, %v2742
      %v2744 = vpop.f32.mrb[0].mxu0
      %2745 = vmatprep.mubr.bf16.mxu0 0
      %2746 = vmatmul.mubr.bf16.gmra.mrb[0].mxu0 %v2625
      %v2747 = vpop.f32.mrb[0].mxu0
      %v2748 = vadd.f32 %v2647, %v2747
      %v2749 = vpop.f32.mrb[0].mxu0
      %v2750 = vpop.f32.mrb[0].mxu0
      %v2751 = vadd.f32 %v2647, %v2750
      %v2752 = vpop.f32.mrb[0].mxu0
      %2753 = vdwg.mxu0
      %v2754 = vadd.f32 %v2367, %v2732
      %v2755 = vadd.f32 %v2368, %v2735
      %v2756 = vadd.f32 %v2369, %v2740
      %v2757 = vadd.f32 %v2370, %v2743
      %v2758 = vadd.f32 %v2371, %v2748
      %v2759 = vadd.f32 %v2372, %v2751
      %v2760 = vsel %vm515, %v2754, 0.0
      %2761 = vadd.xlane.f32.xlu0 %v2760
      %v2762 = vpop.xlane.xlu0 %2761
      %v2763 = vsel %vm515, %v2755, 0.0
      %2764 = vadd.xlane.f32.xlu0 %v2763
      %v2765 = vpop.xlane.xlu0 %2764
      %v2766 = vsel %vm515, %v2756, 0.0
      %2767 = vadd.xlane.f32.xlu0 %v2766
      %v2768 = vpop.xlane.xlu0 %2767
      %v2769 = vsel %vm515, %v2757, 0.0
      %2770 = vadd.xlane.f32.xlu0 %v2769
      %v2771 = vpop.xlane.xlu0 %2770
      %v2772 = vsel %vm515, %v2758, 0.0
      %2773 = vadd.xlane.f32.xlu0 %v2772
      %v2774 = vpop.xlane.xlu0 %2773
      %v2775 = vsel %vm515, %v2759, 0.0
      %2776 = vadd.xlane.f32.xlu0 %v2775
      %v2777 = vpop.xlane.xlu0 %2776
      %v2778 = vmul.f32 %v2762, %v534
      %v2779 = vmul.f32 %v2765, %v534
      %v2780 = vmul.f32 %v2768, %v534
      %v2781 = vmul.f32 %v2771, %v534
      %v2782 = vmul.f32 %v2774, %v534
      %v2783 = vmul.f32 %v2777, %v534
      %v2784 = vsub.f32 %v2754, %v2778
      %v2785 = vsub.f32 %v2755, %v2779
      %v2786 = vsub.f32 %v2756, %v2780
      %v2787 = vsub.f32 %v2757, %v2781
      %v2788 = vsub.f32 %v2758, %v2782
      %v2789 = vsub.f32 %v2759, %v2783
      %v2790 = vmul.f32 %v2784, %v2784
      %v2791 = vmul.f32 %v2785, %v2785
      %v2792 = vmul.f32 %v2786, %v2786
      %v2793 = vmul.f32 %v2787, %v2787
      %v2794 = vmul.f32 %v2788, %v2788
      %v2795 = vmul.f32 %v2789, %v2789
      %v2796 = vsel %vm515, %v2790, 0.0
      %2797 = vadd.xlane.f32.xlu0 %v2796
      %v2798 = vpop.xlane.xlu0 %2797
      %v2799 = vsel %vm515, %v2791, 0.0
      %2800 = vadd.xlane.f32.xlu0 %v2799
      %v2801 = vpop.xlane.xlu0 %2800
      %v2802 = vsel %vm515, %v2792, 0.0
      %2803 = vadd.xlane.f32.xlu0 %v2802
      %v2804 = vpop.xlane.xlu0 %2803
      %v2805 = vsel %vm515, %v2793, 0.0
      %2806 = vadd.xlane.f32.xlu0 %v2805
      %v2807 = vpop.xlane.xlu0 %2806
      %v2808 = vsel %vm515, %v2794, 0.0
      %2809 = vadd.xlane.f32.xlu0 %v2808
      %v2810 = vpop.xlane.xlu0 %2809
      %v2811 = vsel %vm515, %v2795, 0.0
      %2812 = vadd.xlane.f32.xlu0 %v2811
      %v2813 = vpop.xlane.xlu0 %2812
      %v2814 = vmul.f32 %v2798, %v534
      %v2815 = vmul.f32 %v2801, %v534
      %v2816 = vmul.f32 %v2804, %v534
      %v2817 = vmul.f32 %v2807, %v534
      %v2818 = vmul.f32 %v2810, %v534
      %v2819 = vmul.f32 %v2813, %v534
      %v2820 = vadd.f32 %v2814, 1e-06
      %v2821 = vadd.f32 %v2815, 1e-06
      %v2822 = vadd.f32 %v2816, 1e-06
      %v2823 = vadd.f32 %v2817, 1e-06
      %v2824 = vadd.f32 %v2818, 1e-06
      %v2825 = vadd.f32 %v2819, 1e-06
      %v2826 = vrsqrt.pop %v2820
      %v2827 = vrsqrt.pop %v2821
      %v2828 = vrsqrt.pop %v2822
      %v2829 = vrsqrt.pop %v2823
      %v2830 = vrsqrt.pop %v2824
      %v2831 = vrsqrt.pop %v2825
      %v2832 = vmul.f32 %v2784, %v2826
      %v2833 = vmul.f32 %v2785, %v2827
      %v2834 = vmul.f32 %v2786, %v2828
      %v2835 = vmul.f32 %v2787, %v2829
      %v2836 = vmul.f32 %v2788, %v2830
      %v2837 = vmul.f32 %v2789, %v2831
      %v2838 = vld [vmem:[%s14] sm:$0x1]
      %v2840 = vlaneseq
      %v2841 = vshrl.u32 %v2840, 7
      %v2842 = vsub.s32 0, %v2841
      %v2843 = vrot.slane %v2838, %v2842
      %v2845 = vmul.f32 %v2832, %v2843
      %v2846 = vmul.f32 %v2833, %v2843
      %v2847 = vmul.f32 %v2834, %v2843
      %v2848 = vmul.f32 %v2835, %v2843
      %v2849 = vmul.f32 %v2836, %v2843
      %v2850 = vmul.f32 %v2837, %v2843
      %v2851 = vld [vmem:[%s15] sm:$0x1]
      %v2853 = vlaneseq
      %v2854 = vshrl.u32 %v2853, 7
      %v2855 = vsub.s32 0, %v2854
      %v2856 = vrot.slane %v2851, %v2855
      %v2858 = vadd.f32 %v2845, %v2856
      %v2859 = vadd.f32 %v2846, %v2856
      %v2860 = vadd.f32 %v2847, %v2856
      %v2861 = vadd.f32 %v2848, %v2856
      %v2862 = vadd.f32 %v2849, %v2856
      %v2863 = vadd.f32 %v2850, %v2856
      %2864 = vst.msk [vmem:[%s501] sm:$0xff] %vm515, %v2858
      %2865 = vst.msk [vmem:[%s501 + $0x8] sm:$0xff] %vm515, %v2859
      %2866 = vst.msk [vmem:[%s501 + $0x10] sm:$0xff] %vm515, %v2860
      %2867 = vst.msk [vmem:[%s501 + $0x18] sm:$0xff] %vm515, %v2861
      %2868 = vst.msk [vmem:[%s501 + $0x20] sm:$0xff] %vm515, %v2862
      %2869 = vst.msk [vmem:[%s501 + $0x28] sm:$0xff] %vm515, %v2863
      %p2870 = scmp.lt.s32.totalorder %s33, 4
      %s2871 = scalar_select %p2870, %s33, 4
      %s2872 = smul.addr %s2871, 6
      %s2873 = smul.addr %s2872, 8
      %s2874 = scalar_lea.vmem %s16, %s2873
      // Predicated region
      $region81: #{transreid_forward.3} parent=79 // pred_check
        %p2875 = pneg %p371
      $region82: #{transreid_forward.3} parent=79 // pred_check_branch
        %2877 = sbr.rel (%p2875) target = $region84
      $region83: #{transreid_forward.3} parent=79 // pred_region
        _
      $region84: #{transreid_forward.3} parent=79 // pred_fallthru
        _
    $region80: #{transreid_forward.3} parent=5 // pred_fallthru
      _
    %p2878 = scmp.le.s32.totalorder 2, %s28
    // Predicated region
    $region85: #{transreid_forward.3} parent=5 // pred_check
      %p2879 = pneg %p2878
    $region86: #{transreid_forward.3} parent=5 // pred_check_branch
      %2881 = sbr.rel (%p2879) target = $region88
    $region87: #{transreid_forward.3} parent=5 // pred_region
      %s2882 = ssub.s32 %s28, 2
      // Predicated region
      $region89: #{transreid_forward.3} parent=87 // pred_check
        %p2883 = pneg %p377
      $region90: #{transreid_forward.3} parent=87 // pred_check_branch
        %2885 = sbr.rel (%p2883) target = $region92
      $region91: #{transreid_forward.3} parent=87 // pred_region
        %p2886 = scmp.lt.s32.totalorder %s34, 4
        %s2887 = scalar_select %p2886, %s34, 4
        %s2888 = smul.addr %s2887, 6
        %s2889 = smul.addr %s2888, 8
        %s2890 = scalar_lea.vmem %s16, %s2889
      $region92: #{transreid_forward.3} parent=87 // pred_fallthru
        _
    $region88: #{transreid_forward.3} parent=5 // pred_fallthru
      _
  $region6: #{transreid_forward.3} parent=0 // loop_footer
    %s32 = sadd.s32 1, %s28
  $region7: #{transreid_forward.3} parent=0 // loop_footer_branch
    %27 = sbr.rel target = $region3
  $region8: #{transreid_forward.3} parent=0 // loop_exit
    _

</llo_original>
